<compile_context>
chip_gen: v7x
topology: tpu7x:2x2x1
jax: 0.10.0
libtpu: 0.0.40
codegen_flags: <defaults>
</compile_context>

<pallas_src>
import functools
import math

import jax
import jax.numpy as jnp
from jax import lax
from jax.experimental import pallas as pl
from jax.experimental.pallas import tpu as pltpu


def _self_attention2_kernel(x_ref, wq_ref, wk_ref, wv_ref, wu_ref, bias_ref,
                            o_ref, *, heads, emb, seq, bb):
    t, e, h = seq, emb, heads

    # (bb, t, e) -> (bb*t, e): fold the batch into the matmul M dimension.
    x = x_ref[...].reshape(bb * t, e)

    # Lane-dense fused projections for all heads at once (scale already folded
    # into the fused query weights at parameter-setup time).
    q = jnp.dot(x, wq_ref[...], preferred_element_type=jnp.float32)   # (bb*t, h*e)
    k = jnp.dot(x, wk_ref[...], preferred_element_type=jnp.float32)   # (bb*t, h*e)
    v = jnp.dot(x, wv_ref[...], preferred_element_type=jnp.float32)   # (bb*t, h*e)

    # Rearrange to head-major (bb*h, t, e). Each (batch, head) piece is a static
    # lane-block move of a quarter vreg; stacking along the new leading axis is
    # just tile bookkeeping (no lane/sublane shuffles).
    def to_heads(a):
        parts = [a[bi * t:(bi + 1) * t, hh * e:(hh + 1) * e]
                 for bi in range(bb) for hh in range(h)]
        return jnp.stack(parts, axis=0)                                # (bb*h, t, e)

    q3, k3, v3 = to_heads(q), to_heads(k), to_heads(v)

    # ONE batched QK^T over all (batch, head) pairs (contract last dims).
    s = lax.dot_general(q3, k3, (((2,), (2,)), ((0,), (0,))),
                        preferred_element_type=jnp.float32)            # (bb*h, t, t)

    # ONE vectorized, numerically-stable softmax over the whole slab; the
    # normalization uses the EUP reciprocal instead of a VALU divide.
    s = s - jnp.max(s, axis=-1, keepdims=True)
    p = jnp.exp(s)
    p = p * pl.reciprocal(jnp.sum(p, axis=-1, keepdims=True), approx=False)

    # ONE batched P @ V.
    attn3 = lax.dot_general(p, v3, (((2,), (1,)), ((0,), (0,))),
                            preferred_element_type=jnp.float32)        # (bb*h, t, e)

    # Back to the (bb*t, h*e) slab expected by the fused unifyheads weights.
    rows = [jnp.concatenate([attn3[bi * h + hh] for hh in range(h)], axis=-1)
            for bi in range(bb)]                                       # bb x (t, h*e)
    attn = rows[0] if bb == 1 else jnp.concatenate(rows, axis=0)       # (bb*t, h*e)

    # Single unifyheads matmul + bias, written straight to the resident block.
    out = jnp.dot(attn, wu_ref[...], preferred_element_type=jnp.float32)
    out = out + bias_ref[...]                                          # (bb*t, e)
    o_ref[...] = out.reshape(bb, t, e).astype(o_ref.dtype)


def fuse_selfattention2_params(wq, wk, wv, wu):
    """One-time parameter setup (hoisted out of the per-call path).

    wq/wk/wv/wu: (heads, e, e) per-head matrices applied as x @ w[h].
    Returns lane-dense fused matrices; the 1/sqrt(e) attention scale is folded
    into the fused query weights.
    """
    heads, e, _ = wq.shape
    scale = 1.0 / math.sqrt(e)
    # fused[:, h*e + f] = w[h, :, f]  so  (x @ fused)[:, h*e:(h+1)*e] = x @ w[h]
    wq_f = jnp.transpose(wq, (1, 0, 2)).reshape(e, heads * e) * scale
    wk_f = jnp.transpose(wk, (1, 0, 2)).reshape(e, heads * e)
    wv_f = jnp.transpose(wv, (1, 0, 2)).reshape(e, heads * e)
    # wu_f[h*e + f, :] = wu[h, f, :]  so  concat_h(attn_h) @ wu_f = sum_h attn_h @ wu[h]
    wu_f = wu.reshape(heads * e, e)
    return wq_f, wk_f, wv_f, wu_f


def _use_batch_parallel_grid():
    """True on parts with >1 schedulable TensorCore per chip (v7x) or a megacore
    (v4/v5p), where a batch-parallel grid keeps both cores busy. False on the
    single-TC inference parts (v5e/v6e), where extra grid steps are pure
    prologue/epilogue overhead at these shapes."""
    try:
        kind = jax.devices()[0].device_kind.lower().replace(" ", "")
    except Exception:
        return False
    return any(tag in kind for tag in ("7x", "v7", "v4", "v5p"))


def self_attention2(x, wq_f, wk_f, wv_f, wu_f, bias, *, heads):
    """x: (b, t, e); fused weights from fuse_selfattention2_params; bias: (1, e)."""
    b, t, e = x.shape
    assert wq_f.shape == (e, heads * e)

    # Collapse the batch grid on single-TC parts; keep a batch-parallel grid on
    # v7x / megacore parts. Both paths are numerically identical.
    bb = 1 if (_use_batch_parallel_grid() and b > 1) else b
    kernel = functools.partial(_self_attention2_kernel,
                               heads=heads, emb=e, seq=t, bb=bb)

    return pl.pallas_call(
        kernel,
        out_shape=jax.ShapeDtypeStruct((b, t, e), x.dtype),
        grid_spec=pltpu.PrefetchScalarGridSpec(
            num_scalar_prefetch=0,
            grid=(b // bb,),
            in_specs=[
                pl.BlockSpec((bb, t, e), lambda i: (i, 0, 0)),          # x
                pl.BlockSpec((e, heads * e), lambda i: (0, 0)),         # wq fused (pre-scaled)
                pl.BlockSpec((e, heads * e), lambda i: (0, 0)),         # wk fused
                pl.BlockSpec((e, heads * e), lambda i: (0, 0)),         # wv fused
                pl.BlockSpec((heads * e, e), lambda i: (0, 0)),         # wu fused
                pl.BlockSpec((1, e), lambda i: (0, 0)),                 # unify bias
            ],
            out_specs=pl.BlockSpec((bb, t, e), lambda i: (i, 0, 0)),
        ),
        compiler_params=pltpu.CompilerParams(
            dimension_semantics=("parallel",),
        ),
    )(x, wq_f, wk_f, wv_f, wu_f, bias)


def self_attention2_ref(x, wq, wk, wv, wu, bias):
    """Pure-JAX reference mirroring the PyTorch forward exactly (mask=False)."""
    b, t, e = x.shape
    scale = 1.0 / math.sqrt(e)
    q = jnp.einsum("bte,hef->bhtf", x, wq)          # (b, h, t, e)
    k = jnp.einsum("bte,hef->bhtf", x, wk)
    v = jnp.einsum("bte,hef->bhtf", x, wv)
    dot = jnp.einsum("bhtf,bhsf->bhts", q, k) * scale
    dot = jax.nn.softmax(dot, axis=-1)
    attn = jnp.einsum("bhts,bhsf->bhtf", dot, v)    # (b, h, t, e)
    out = jnp.einsum("bhtf,hfe->bte", attn, wu) + bias[0]
    return out


if __name__ == "__main__":
    # Small shapes consistent with the module: emb=32, heads=8, batch=2, seq=8.
    b, t, e, heads = 2, 8, 32, 8

    key = jax.random.PRNGKey(0)
    kx, kq, kk, kv, ku, kbias = jax.random.split(key, 6)

    x = jax.random.normal(kx, (b, t, e), dtype=jnp.float32)

    # Deterministic parameter init (per-head Linear weights stored as (e_in, e_out)).
    init_scale = 1.0 / math.sqrt(e)
    wq = jax.random.uniform(kq, (heads, e, e), jnp.float32, -init_scale, init_scale)
    wk = jax.random.uniform(kk, (heads, e, e), jnp.float32, -init_scale, init_scale)
    wv = jax.random.uniform(kv, (heads, e, e), jnp.float32, -init_scale, init_scale)
    init_scale_u = 1.0 / math.sqrt(heads * e)
    wu = jax.random.uniform(ku, (heads, e, e), jnp.float32, -init_scale_u, init_scale_u)
    bias = jax.random.uniform(kbias, (1, e), jnp.float32, -init_scale_u, init_scale_u)

    # One-time parameter setup (weight fusion + scale fold), hoisted out of the
    # per-call path.
    wq_f, wk_f, wv_f, wu_f = jax.block_until_ready(
        fuse_selfattention2_params(wq, wk, wv, wu))

    out = self_attention2(x, wq_f, wk_f, wv_f, wu_f, bias, heads=heads)
    out = jax.block_until_ready(out)

    ref = self_attention2_ref(x, wq, wk, wv, wu, bias)
    assert out.shape == (b, t, e)
    assert jnp.allclose(out, ref, atol=1e-4, rtol=1e-4), "mismatch vs reference"

    print("KERNEL_OK")
</pallas_src>

<mosaic_0001>
module attributes {stable_mosaic.version = 11 : i64} {
  func.func @_self_attention2_kernel(%arg0: i32, %arg1: memref<2x8x32xf32, #tpu.memory_space<vmem>>, %arg2: memref<32x256xf32, #tpu.memory_space<vmem>>, %arg3: memref<32x256xf32, #tpu.memory_space<vmem>>, %arg4: memref<32x256xf32, #tpu.memory_space<vmem>>, %arg5: memref<256x32xf32, #tpu.memory_space<vmem>>, %arg6: memref<1x32xf32, #tpu.memory_space<vmem>>, %arg7: memref<2x8x32xf32, #tpu.memory_space<vmem>>) attributes {dimension_semantics = [#tpu.dimension_semantics<parallel>], iteration_bounds = array<i64: 1>, scalar_prefetch = 0 : i64, scratch_operands = 0 : i64, tpu.core_type = #tpu.core_type<tc>, window_params = [{transform_indices = @transform_0, window_bounds = array<i64: 2, 8, 32>}, {pipeline_mode = #tpu.pipeline_mode<synchronous>, transform_indices = @transform_1, window_bounds = array<i64: 32, 256>}, {pipeline_mode = #tpu.pipeline_mode<synchronous>, transform_indices = @transform_2, window_bounds = array<i64: 32, 256>}, {pipeline_mode = #tpu.pipeline_mode<synchronous>, transform_indices = @transform_3, window_bounds = array<i64: 32, 256>}, {pipeline_mode = #tpu.pipeline_mode<synchronous>, transform_indices = @transform_4, window_bounds = array<i64: 256, 32>}, {pipeline_mode = #tpu.pipeline_mode<synchronous>, transform_indices = @transform_5, window_bounds = array<i64: 1, 32>}, {transform_indices = @transform_6, window_bounds = array<i64: 2, 8, 32>}]} {
    %c0 = arith.constant 0 : index
    %c0_0 = arith.constant 0 : index
    %c0_1 = arith.constant 0 : index
    %0 = vector.load %arg1[%c0, %c0_0, %c0_1] : memref<2x8x32xf32, #tpu.memory_space<vmem>>, vector<2x8x32xf32>
    %1 = vector.shape_cast %0 : vector<2x8x32xf32> to vector<16x32xf32>
    %c0_2 = arith.constant 0 : index
    %c0_3 = arith.constant 0 : index
    %2 = vector.load %arg2[%c0_2, %c0_3] : memref<32x256xf32, #tpu.memory_space<vmem>>, vector<32x256xf32>
    %cst = arith.constant dense<0.000000e+00> : vector<16x256xf32>
    %3 = tpu.matmul %1, %2, %cst {dimension_numbers = #tpu.dot_dimension_numbers<[1], [0], [0], [1], [0, 0, 1, 1], [], []>} : vector<16x32xf32>, vector<32x256xf32>, vector<16x256xf32> -> vector<16x256xf32>
    %c0_4 = arith.constant 0 : index
    %c0_5 = arith.constant 0 : index
    %4 = vector.load %arg3[%c0_4, %c0_5] : memref<32x256xf32, #tpu.memory_space<vmem>>, vector<32x256xf32>
    %cst_6 = arith.constant dense<0.000000e+00> : vector<16x256xf32>
    %5 = tpu.matmul %1, %4, %cst_6 {dimension_numbers = #tpu.dot_dimension_numbers<[1], [0], [0], [1], [0, 0, 1, 1], [], []>} : vector<16x32xf32>, vector<32x256xf32>, vector<16x256xf32> -> vector<16x256xf32>
    %c0_7 = arith.constant 0 : index
    %c0_8 = arith.constant 0 : index
    %6 = vector.load %arg4[%c0_7, %c0_8] : memref<32x256xf32, #tpu.memory_space<vmem>>, vector<32x256xf32>
    %cst_9 = arith.constant dense<0.000000e+00> : vector<16x256xf32>
    %7 = tpu.matmul %1, %6, %cst_9 {dimension_numbers = #tpu.dot_dimension_numbers<[1], [0], [0], [1], [0, 0, 1, 1], [], []>} : vector<16x32xf32>, vector<32x256xf32>, vector<16x256xf32> -> vector<16x256xf32>
    %8 = vector.extract_strided_slice %3 {offsets = [0, 0], sizes = [8, 32], strides = [1, 1]} : vector<16x256xf32> to vector<8x32xf32>
    %9 = vector.extract_strided_slice %3 {offsets = [0, 32], sizes = [8, 32], strides = [1, 1]} : vector<16x256xf32> to vector<8x32xf32>
    %10 = vector.extract_strided_slice %3 {offsets = [0, 64], sizes = [8, 32], strides = [1, 1]} : vector<16x256xf32> to vector<8x32xf32>
    %11 = vector.extract_strided_slice %3 {offsets = [0, 96], sizes = [8, 32], strides = [1, 1]} : vector<16x256xf32> to vector<8x32xf32>
    %12 = vector.extract_strided_slice %3 {offsets = [0, 128], sizes = [8, 32], strides = [1, 1]} : vector<16x256xf32> to vector<8x32xf32>
    %13 = vector.extract_strided_slice %3 {offsets = [0, 160], sizes = [8, 32], strides = [1, 1]} : vector<16x256xf32> to vector<8x32xf32>
    %14 = vector.extract_strided_slice %3 {offsets = [0, 192], sizes = [8, 32], strides = [1, 1]} : vector<16x256xf32> to vector<8x32xf32>
    %15 = vector.extract_strided_slice %3 {offsets = [0, 224], sizes = [8, 32], strides = [1, 1]} : vector<16x256xf32> to vector<8x32xf32>
    %16 = vector.extract_strided_slice %3 {offsets = [8, 0], sizes = [8, 32], strides = [1, 1]} : vector<16x256xf32> to vector<8x32xf32>
    %17 = vector.extract_strided_slice %3 {offsets = [8, 32], sizes = [8, 32], strides = [1, 1]} : vector<16x256xf32> to vector<8x32xf32>
    %18 = vector.extract_strided_slice %3 {offsets = [8, 64], sizes = [8, 32], strides = [1, 1]} : vector<16x256xf32> to vector<8x32xf32>
    %19 = vector.extract_strided_slice %3 {offsets = [8, 96], sizes = [8, 32], strides = [1, 1]} : vector<16x256xf32> to vector<8x32xf32>
    %20 = vector.extract_strided_slice %3 {offsets = [8, 128], sizes = [8, 32], strides = [1, 1]} : vector<16x256xf32> to vector<8x32xf32>
    %21 = vector.extract_strided_slice %3 {offsets = [8, 160], sizes = [8, 32], strides = [1, 1]} : vector<16x256xf32> to vector<8x32xf32>
    %22 = vector.extract_strided_slice %3 {offsets = [8, 192], sizes = [8, 32], strides = [1, 1]} : vector<16x256xf32> to vector<8x32xf32>
    %23 = vector.extract_strided_slice %3 {offsets = [8, 224], sizes = [8, 32], strides = [1, 1]} : vector<16x256xf32> to vector<8x32xf32>
    %24 = vector.shape_cast %8 : vector<8x32xf32> to vector<1x8x32xf32>
    %25 = vector.shape_cast %9 : vector<8x32xf32> to vector<1x8x32xf32>
    %26 = vector.shape_cast %10 : vector<8x32xf32> to vector<1x8x32xf32>
    %27 = vector.shape_cast %11 : vector<8x32xf32> to vector<1x8x32xf32>
    %28 = vector.shape_cast %12 : vector<8x32xf32> to vector<1x8x32xf32>
    %29 = vector.shape_cast %13 : vector<8x32xf32> to vector<1x8x32xf32>
    %30 = vector.shape_cast %14 : vector<8x32xf32> to vector<1x8x32xf32>
    %31 = vector.shape_cast %15 : vector<8x32xf32> to vector<1x8x32xf32>
    %32 = vector.shape_cast %16 : vector<8x32xf32> to vector<1x8x32xf32>
    %33 = vector.shape_cast %17 : vector<8x32xf32> to vector<1x8x32xf32>
    %34 = vector.shape_cast %18 : vector<8x32xf32> to vector<1x8x32xf32>
    %35 = vector.shape_cast %19 : vector<8x32xf32> to vector<1x8x32xf32>
    %36 = vector.shape_cast %20 : vector<8x32xf32> to vector<1x8x32xf32>
    %37 = vector.shape_cast %21 : vector<8x32xf32> to vector<1x8x32xf32>
    %38 = vector.shape_cast %22 : vector<8x32xf32> to vector<1x8x32xf32>
    %39 = vector.shape_cast %23 : vector<8x32xf32> to vector<1x8x32xf32>
    %40 = tpu.concatenate %24, %25, %26, %27, %28, %29, %30, %31, %32, %33, %34, %35, %36, %37, %38, %39 in 0 : vector<1x8x32xf32>, vector<1x8x32xf32>, vector<1x8x32xf32>, vector<1x8x32xf32>, vector<1x8x32xf32>, vector<1x8x32xf32>, vector<1x8x32xf32>, vector<1x8x32xf32>, vector<1x8x32xf32>, vector<1x8x32xf32>, vector<1x8x32xf32>, vector<1x8x32xf32>, vector<1x8x32xf32>, vector<1x8x32xf32>, vector<1x8x32xf32>, vector<1x8x32xf32> -> vector<16x8x32xf32>
    %41 = vector.extract_strided_slice %5 {offsets = [0, 0], sizes = [8, 32], strides = [1, 1]} : vector<16x256xf32> to vector<8x32xf32>
    %42 = vector.extract_strided_slice %5 {offsets = [0, 32], sizes = [8, 32], strides = [1, 1]} : vector<16x256xf32> to vector<8x32xf32>
    %43 = vector.extract_strided_slice %5 {offsets = [0, 64], sizes = [8, 32], strides = [1, 1]} : vector<16x256xf32> to vector<8x32xf32>
    %44 = vector.extract_strided_slice %5 {offsets = [0, 96], sizes = [8, 32], strides = [1, 1]} : vector<16x256xf32> to vector<8x32xf32>
    %45 = vector.extract_strided_slice %5 {offsets = [0, 128], sizes = [8, 32], strides = [1, 1]} : vector<16x256xf32> to vector<8x32xf32>
    %46 = vector.extract_strided_slice %5 {offsets = [0, 160], sizes = [8, 32], strides = [1, 1]} : vector<16x256xf32> to vector<8x32xf32>
    %47 = vector.extract_strided_slice %5 {offsets = [0, 192], sizes = [8, 32], strides = [1, 1]} : vector<16x256xf32> to vector<8x32xf32>
    %48 = vector.extract_strided_slice %5 {offsets = [0, 224], sizes = [8, 32], strides = [1, 1]} : vector<16x256xf32> to vector<8x32xf32>
    %49 = vector.extract_strided_slice %5 {offsets = [8, 0], sizes = [8, 32], strides = [1, 1]} : vector<16x256xf32> to vector<8x32xf32>
    %50 = vector.extract_strided_slice %5 {offsets = [8, 32], sizes = [8, 32], strides = [1, 1]} : vector<16x256xf32> to vector<8x32xf32>
    %51 = vector.extract_strided_slice %5 {offsets = [8, 64], sizes = [8, 32], strides = [1, 1]} : vector<16x256xf32> to vector<8x32xf32>
    %52 = vector.extract_strided_slice %5 {offsets = [8, 96], sizes = [8, 32], strides = [1, 1]} : vector<16x256xf32> to vector<8x32xf32>
    %53 = vector.extract_strided_slice %5 {offsets = [8, 128], sizes = [8, 32], strides = [1, 1]} : vector<16x256xf32> to vector<8x32xf32>
    %54 = vector.extract_strided_slice %5 {offsets = [8, 160], sizes = [8, 32], strides = [1, 1]} : vector<16x256xf32> to vector<8x32xf32>
    %55 = vector.extract_strided_slice %5 {offsets = [8, 192], sizes = [8, 32], strides = [1, 1]} : vector<16x256xf32> to vector<8x32xf32>
    %56 = vector.extract_strided_slice %5 {offsets = [8, 224], sizes = [8, 32], strides = [1, 1]} : vector<16x256xf32> to vector<8x32xf32>
    %57 = vector.shape_cast %41 : vector<8x32xf32> to vector<1x8x32xf32>
    %58 = vector.shape_cast %42 : vector<8x32xf32> to vector<1x8x32xf32>
    %59 = vector.shape_cast %43 : vector<8x32xf32> to vector<1x8x32xf32>
    %60 = vector.shape_cast %44 : vector<8x32xf32> to vector<1x8x32xf32>
    %61 = vector.shape_cast %45 : vector<8x32xf32> to vector<1x8x32xf32>
    %62 = vector.shape_cast %46 : vector<8x32xf32> to vector<1x8x32xf32>
    %63 = vector.shape_cast %47 : vector<8x32xf32> to vector<1x8x32xf32>
    %64 = vector.shape_cast %48 : vector<8x32xf32> to vector<1x8x32xf32>
    %65 = vector.shape_cast %49 : vector<8x32xf32> to vector<1x8x32xf32>
    %66 = vector.shape_cast %50 : vector<8x32xf32> to vector<1x8x32xf32>
    %67 = vector.shape_cast %51 : vector<8x32xf32> to vector<1x8x32xf32>
    %68 = vector.shape_cast %52 : vector<8x32xf32> to vector<1x8x32xf32>
    %69 = vector.shape_cast %53 : vector<8x32xf32> to vector<1x8x32xf32>
    %70 = vector.shape_cast %54 : vector<8x32xf32> to vector<1x8x32xf32>
    %71 = vector.shape_cast %55 : vector<8x32xf32> to vector<1x8x32xf32>
    %72 = vector.shape_cast %56 : vector<8x32xf32> to vector<1x8x32xf32>
    %73 = tpu.concatenate %57, %58, %59, %60, %61, %62, %63, %64, %65, %66, %67, %68, %69, %70, %71, %72 in 0 : vector<1x8x32xf32>, vector<1x8x32xf32>, vector<1x8x32xf32>, vector<1x8x32xf32>, vector<1x8x32xf32>, vector<1x8x32xf32>, vector<1x8x32xf32>, vector<1x8x32xf32>, vector<1x8x32xf32>, vector<1x8x32xf32>, vector<1x8x32xf32>, vector<1x8x32xf32>, vector<1x8x32xf32>, vector<1x8x32xf32>, vector<1x8x32xf32>, vector<1x8x32xf32> -> vector<16x8x32xf32>
    %74 = vector.extract_strided_slice %7 {offsets = [0, 0], sizes = [8, 32], strides = [1, 1]} : vector<16x256xf32> to vector<8x32xf32>
    %75 = vector.extract_strided_slice %7 {offsets = [0, 32], sizes = [8, 32], strides = [1, 1]} : vector<16x256xf32> to vector<8x32xf32>
    %76 = vector.extract_strided_slice %7 {offsets = [0, 64], sizes = [8, 32], strides = [1, 1]} : vector<16x256xf32> to vector<8x32xf32>
    %77 = vector.extract_strided_slice %7 {offsets = [0, 96], sizes = [8, 32], strides = [1, 1]} : vector<16x256xf32> to vector<8x32xf32>
    %78 = vector.extract_strided_slice %7 {offsets = [0, 128], sizes = [8, 32], strides = [1, 1]} : vector<16x256xf32> to vector<8x32xf32>
    %79 = vector.extract_strided_slice %7 {offsets = [0, 160], sizes = [8, 32], strides = [1, 1]} : vector<16x256xf32> to vector<8x32xf32>
    %80 = vector.extract_strided_slice %7 {offsets = [0, 192], sizes = [8, 32], strides = [1, 1]} : vector<16x256xf32> to vector<8x32xf32>
    %81 = vector.extract_strided_slice %7 {offsets = [0, 224], sizes = [8, 32], strides = [1, 1]} : vector<16x256xf32> to vector<8x32xf32>
    %82 = vector.extract_strided_slice %7 {offsets = [8, 0], sizes = [8, 32], strides = [1, 1]} : vector<16x256xf32> to vector<8x32xf32>
    %83 = vector.extract_strided_slice %7 {offsets = [8, 32], sizes = [8, 32], strides = [1, 1]} : vector<16x256xf32> to vector<8x32xf32>
    %84 = vector.extract_strided_slice %7 {offsets = [8, 64], sizes = [8, 32], strides = [1, 1]} : vector<16x256xf32> to vector<8x32xf32>
    %85 = vector.extract_strided_slice %7 {offsets = [8, 96], sizes = [8, 32], strides = [1, 1]} : vector<16x256xf32> to vector<8x32xf32>
    %86 = vector.extract_strided_slice %7 {offsets = [8, 128], sizes = [8, 32], strides = [1, 1]} : vector<16x256xf32> to vector<8x32xf32>
    %87 = vector.extract_strided_slice %7 {offsets = [8, 160], sizes = [8, 32], strides = [1, 1]} : vector<16x256xf32> to vector<8x32xf32>
    %88 = vector.extract_strided_slice %7 {offsets = [8, 192], sizes = [8, 32], strides = [1, 1]} : vector<16x256xf32> to vector<8x32xf32>
    %89 = vector.extract_strided_slice %7 {offsets = [8, 224], sizes = [8, 32], strides = [1, 1]} : vector<16x256xf32> to vector<8x32xf32>
    %90 = vector.shape_cast %74 : vector<8x32xf32> to vector<1x8x32xf32>
    %91 = vector.shape_cast %75 : vector<8x32xf32> to vector<1x8x32xf32>
    %92 = vector.shape_cast %76 : vector<8x32xf32> to vector<1x8x32xf32>
    %93 = vector.shape_cast %77 : vector<8x32xf32> to vector<1x8x32xf32>
    %94 = vector.shape_cast %78 : vector<8x32xf32> to vector<1x8x32xf32>
    %95 = vector.shape_cast %79 : vector<8x32xf32> to vector<1x8x32xf32>
    %96 = vector.shape_cast %80 : vector<8x32xf32> to vector<1x8x32xf32>
    %97 = vector.shape_cast %81 : vector<8x32xf32> to vector<1x8x32xf32>
    %98 = vector.shape_cast %82 : vector<8x32xf32> to vector<1x8x32xf32>
    %99 = vector.shape_cast %83 : vector<8x32xf32> to vector<1x8x32xf32>
    %100 = vector.shape_cast %84 : vector<8x32xf32> to vector<1x8x32xf32>
    %101 = vector.shape_cast %85 : vector<8x32xf32> to vector<1x8x32xf32>
    %102 = vector.shape_cast %86 : vector<8x32xf32> to vector<1x8x32xf32>
    %103 = vector.shape_cast %87 : vector<8x32xf32> to vector<1x8x32xf32>
    %104 = vector.shape_cast %88 : vector<8x32xf32> to vector<1x8x32xf32>
    %105 = vector.shape_cast %89 : vector<8x32xf32> to vector<1x8x32xf32>
    %106 = tpu.concatenate %90, %91, %92, %93, %94, %95, %96, %97, %98, %99, %100, %101, %102, %103, %104, %105 in 0 : vector<1x8x32xf32>, vector<1x8x32xf32>, vector<1x8x32xf32>, vector<1x8x32xf32>, vector<1x8x32xf32>, vector<1x8x32xf32>, vector<1x8x32xf32>, vector<1x8x32xf32>, vector<1x8x32xf32>, vector<1x8x32xf32>, vector<1x8x32xf32>, vector<1x8x32xf32>, vector<1x8x32xf32>, vector<1x8x32xf32>, vector<1x8x32xf32>, vector<1x8x32xf32> -> vector<16x8x32xf32>
    %cst_10 = arith.constant dense<0.000000e+00> : vector<16x8x8xf32>
    %107 = tpu.matmul %40, %73, %cst_10 {dimension_numbers = #tpu.dot_dimension_numbers<[2], [2], [1], [1], [0, 0, 0, 1, 1, 1], [0], [0]>} : vector<16x8x32xf32>, vector<16x8x32xf32>, vector<16x8x8xf32> -> vector<16x8x8xf32>
    %cst_11 = arith.constant dense<0xFF800000> : vector<16x8xf32>
    %108 = vector.multi_reduction <maximumf>, %107, %cst_11 [2] : vector<16x8x8xf32> to vector<16x8xf32>
    %109 = vector.shape_cast %108 : vector<16x8xf32> to vector<16x8x1xf32>
    %110 = vector.broadcast %109 : vector<16x8x1xf32> to vector<16x8x8xf32>
    %111 = arith.subf %107, %110 : vector<16x8x8xf32>
    %112 = math.exp %111 : vector<16x8x8xf32>
    %cst_12 = arith.constant dense<0.000000e+00> : vector<16x8xf32>
    %113 = vector.multi_reduction <add>, %112, %cst_12 [2] : vector<16x8x8xf32> to vector<16x8xf32>
    %114 = vector.shape_cast %113 : vector<16x8xf32> to vector<16x8x1xf32>
    %115 = tpu.reciprocal %114 : vector<16x8x1xf32> -> vector<16x8x1xf32>
    %116 = vector.broadcast %115 : vector<16x8x1xf32> to vector<16x8x8xf32>
    %117 = arith.mulf %112, %116 : vector<16x8x8xf32>
    %cst_13 = arith.constant dense<0.000000e+00> : vector<16x8x32xf32>
    %118 = tpu.matmul %117, %106, %cst_13 {dimension_numbers = #tpu.dot_dimension_numbers<[2], [1], [1], [2], [0, 0, 0, 1, 1, 2], [0], [0]>} : vector<16x8x8xf32>, vector<16x8x32xf32>, vector<16x8x32xf32> -> vector<16x8x32xf32>
    %119 = vector.extract_strided_slice %118 {offsets = [0, 0, 0], sizes = [1, 8, 32], strides = [1, 1, 1]} : vector<16x8x32xf32> to vector<1x8x32xf32>
    %120 = vector.shape_cast %119 : vector<1x8x32xf32> to vector<8x32xf32>
    %121 = vector.extract_strided_slice %118 {offsets = [1, 0, 0], sizes = [1, 8, 32], strides = [1, 1, 1]} : vector<16x8x32xf32> to vector<1x8x32xf32>
    %122 = vector.shape_cast %121 : vector<1x8x32xf32> to vector<8x32xf32>
    %123 = vector.extract_strided_slice %118 {offsets = [2, 0, 0], sizes = [1, 8, 32], strides = [1, 1, 1]} : vector<16x8x32xf32> to vector<1x8x32xf32>
    %124 = vector.shape_cast %123 : vector<1x8x32xf32> to vector<8x32xf32>
    %125 = vector.extract_strided_slice %118 {offsets = [3, 0, 0], sizes = [1, 8, 32], strides = [1, 1, 1]} : vector<16x8x32xf32> to vector<1x8x32xf32>
    %126 = vector.shape_cast %125 : vector<1x8x32xf32> to vector<8x32xf32>
    %127 = vector.extract_strided_slice %118 {offsets = [4, 0, 0], sizes = [1, 8, 32], strides = [1, 1, 1]} : vector<16x8x32xf32> to vector<1x8x32xf32>
    %128 = vector.shape_cast %127 : vector<1x8x32xf32> to vector<8x32xf32>
    %129 = vector.extract_strided_slice %118 {offsets = [5, 0, 0], sizes = [1, 8, 32], strides = [1, 1, 1]} : vector<16x8x32xf32> to vector<1x8x32xf32>
    %130 = vector.shape_cast %129 : vector<1x8x32xf32> to vector<8x32xf32>
    %131 = vector.extract_strided_slice %118 {offsets = [6, 0, 0], sizes = [1, 8, 32], strides = [1, 1, 1]} : vector<16x8x32xf32> to vector<1x8x32xf32>
    %132 = vector.shape_cast %131 : vector<1x8x32xf32> to vector<8x32xf32>
    %133 = vector.extract_strided_slice %118 {offsets = [7, 0, 0], sizes = [1, 8, 32], strides = [1, 1, 1]} : vector<16x8x32xf32> to vector<1x8x32xf32>
    %134 = vector.shape_cast %133 : vector<1x8x32xf32> to vector<8x32xf32>
    %135 = tpu.concatenate %120, %122, %124, %126, %128, %130, %132, %134 in 1 : vector<8x32xf32>, vector<8x32xf32>, vector<8x32xf32>, vector<8x32xf32>, vector<8x32xf32>, vector<8x32xf32>, vector<8x32xf32>, vector<8x32xf32> -> vector<8x256xf32>
    %136 = vector.extract_strided_slice %118 {offsets = [8, 0, 0], sizes = [1, 8, 32], strides = [1, 1, 1]} : vector<16x8x32xf32> to vector<1x8x32xf32>
    %137 = vector.shape_cast %136 : vector<1x8x32xf32> to vector<8x32xf32>
    %138 = vector.extract_strided_slice %118 {offsets = [9, 0, 0], sizes = [1, 8, 32], strides = [1, 1, 1]} : vector<16x8x32xf32> to vector<1x8x32xf32>
    %139 = vector.shape_cast %138 : vector<1x8x32xf32> to vector<8x32xf32>
    %140 = vector.extract_strided_slice %118 {offsets = [10, 0, 0], sizes = [1, 8, 32], strides = [1, 1, 1]} : vector<16x8x32xf32> to vector<1x8x32xf32>
    %141 = vector.shape_cast %140 : vector<1x8x32xf32> to vector<8x32xf32>
    %142 = vector.extract_strided_slice %118 {offsets = [11, 0, 0], sizes = [1, 8, 32], strides = [1, 1, 1]} : vector<16x8x32xf32> to vector<1x8x32xf32>
    %143 = vector.shape_cast %142 : vector<1x8x32xf32> to vector<8x32xf32>
    %144 = vector.extract_strided_slice %118 {offsets = [12, 0, 0], sizes = [1, 8, 32], strides = [1, 1, 1]} : vector<16x8x32xf32> to vector<1x8x32xf32>
    %145 = vector.shape_cast %144 : vector<1x8x32xf32> to vector<8x32xf32>
    %146 = vector.extract_strided_slice %118 {offsets = [13, 0, 0], sizes = [1, 8, 32], strides = [1, 1, 1]} : vector<16x8x32xf32> to vector<1x8x32xf32>
    %147 = vector.shape_cast %146 : vector<1x8x32xf32> to vector<8x32xf32>
    %148 = vector.extract_strided_slice %118 {offsets = [14, 0, 0], sizes = [1, 8, 32], strides = [1, 1, 1]} : vector<16x8x32xf32> to vector<1x8x32xf32>
    %149 = vector.shape_cast %148 : vector<1x8x32xf32> to vector<8x32xf32>
    %150 = vector.extract_strided_slice %118 {offsets = [15, 0, 0], sizes = [1, 8, 32], strides = [1, 1, 1]} : vector<16x8x32xf32> to vector<1x8x32xf32>
    %151 = vector.shape_cast %150 : vector<1x8x32xf32> to vector<8x32xf32>
    %152 = tpu.concatenate %137, %139, %141, %143, %145, %147, %149, %151 in 1 : vector<8x32xf32>, vector<8x32xf32>, vector<8x32xf32>, vector<8x32xf32>, vector<8x32xf32>, vector<8x32xf32>, vector<8x32xf32>, vector<8x32xf32> -> vector<8x256xf32>
    %153 = tpu.concatenate %135, %152 in 0 : vector<8x256xf32>, vector<8x256xf32> -> vector<16x256xf32>
    %c0_14 = arith.constant 0 : index
    %c0_15 = arith.constant 0 : index
    %154 = vector.load %arg5[%c0_14, %c0_15] : memref<256x32xf32, #tpu.memory_space<vmem>>, vector<256x32xf32>
    %cst_16 = arith.constant dense<0.000000e+00> : vector<16x32xf32>
    %155 = tpu.matmul %153, %154, %cst_16 {dimension_numbers = #tpu.dot_dimension_numbers<[1], [0], [0], [1], [0, 0, 1, 1], [], []>} : vector<16x256xf32>, vector<256x32xf32>, vector<16x32xf32> -> vector<16x32xf32>
    %c0_17 = arith.constant 0 : index
    %c0_18 = arith.constant 0 : index
    %156 = vector.load %arg6[%c0_17, %c0_18] : memref<1x32xf32, #tpu.memory_space<vmem>>, vector<1x32xf32>
    %157 = vector.broadcast %156 : vector<1x32xf32> to vector<16x32xf32>
    %158 = arith.addf %155, %157 : vector<16x32xf32>
    %159 = vector.shape_cast %158 : vector<16x32xf32> to vector<2x8x32xf32>
    %c0_19 = arith.constant 0 : index
    %c0_20 = arith.constant 0 : index
    %c0_21 = arith.constant 0 : index
    %160 = vector.load %arg7[%c0_19, %c0_20, %c0_21] : memref<2x8x32xf32, #tpu.memory_space<vmem>>, vector<2x8x32xf32>
    tpu.vector_store %arg7[%c0_19, %c0_20, %c0_21], %159 {strides = array<i32>} : memref<2x8x32xf32, #tpu.memory_space<vmem>>, vector<2x8x32xf32>,
    return
  }
  func.func @transform_0(%arg0: i32) -> (i32, i32, i32) {
    %c0_i32 = arith.constant 0 : i32
    %c0_i32_0 = arith.constant 0 : i32
    %c0_i32_1 = arith.constant 0 : i32
    return %arg0, %c0_i32, %c0_i32_0 : i32, i32, i32
  }
  func.func @transform_1(%arg0: i32) -> (i32, i32) {
    %c0_i32 = arith.constant 0 : i32
    %c0_i32_0 = arith.constant 0 : i32
    %c0_i32_1 = arith.constant 0 : i32
    return %c0_i32, %c0_i32_0 : i32, i32
  }
  func.func @transform_2(%arg0: i32) -> (i32, i32) {
    %c0_i32 = arith.constant 0 : i32
    %c0_i32_0 = arith.constant 0 : i32
    %c0_i32_1 = arith.constant 0 : i32
    return %c0_i32, %c0_i32_0 : i32, i32
  }
  func.func @transform_3(%arg0: i32) -> (i32, i32) {
    %c0_i32 = arith.constant 0 : i32
    %c0_i32_0 = arith.constant 0 : i32
    %c0_i32_1 = arith.constant 0 : i32
    return %c0_i32, %c0_i32_0 : i32, i32
  }
  func.func @transform_4(%arg0: i32) -> (i32, i32) {
    %c0_i32 = arith.constant 0 : i32
    %c0_i32_0 = arith.constant 0 : i32
    %c0_i32_1 = arith.constant 0 : i32
    return %c0_i32, %c0_i32_0 : i32, i32
  }
  func.func @transform_5(%arg0: i32) -> (i32, i32) {
    %c0_i32 = arith.constant 0 : i32
    %c0_i32_0 = arith.constant 0 : i32
    %c0_i32_1 = arith.constant 0 : i32
    return %c0_i32, %c0_i32_0 : i32, i32
  }
  func.func @transform_6(%arg0: i32) -> (i32, i32, i32) {
    %c0_i32 = arith.constant 0 : i32
    %c0_i32_0 = arith.constant 0 : i32
    %c0_i32_1 = arith.constant 0 : i32
    return %arg0, %c0_i32, %c0_i32_0 : i32, i32, i32
  }
}

</mosaic_0001>

<llo_original>
// kernel: tpu_custom_call.1
$region0: #{tpu_custom_call.1}
  #allocation0 [shape = 'u32[]', space=smem, size = 0x4, offset = 0x4, fixed_abs, tag = 'smem constant byte address 0x4 - core index']
  #allocation1 [shape = 'u32[144,128]{1,0:T(1,128)}', space=vmem, size = 0x12000, scoped, tag = 'internal scratch']
  %s0 = inlined_call_operand.vmem [shape: f32[2,8,32], index: 0, kind: input, shape index: {}]
  %s1 = inlined_call_operand.vmem [shape: f32[32,256], index: 1, kind: input, shape index: {}]
  %s2 = inlined_call_operand.vmem [shape: f32[32,256], index: 2, kind: input, shape index: {}]
  %s3 = inlined_call_operand.vmem [shape: f32[32,256], index: 3, kind: input, shape index: {}]
  %s4 = inlined_call_operand.vmem [shape: f32[256,32], index: 4, kind: input, shape index: {}]
  %s5 = inlined_call_operand.vmem [shape: f32[1,32], index: 5, kind: input, shape index: {}]
  %s6 = inlined_call_operand.hbm [shape: f32[2,8,32], index: 6, kind: output, shape index: {}]
  %s7 = sld [smem:[#allocation0]]
  $region34: #{tpu_custom_call.1} parent=0
    _
  %s9 = ssub.s32 1, %s7
  %s10 = scalar_select 0, %s9, %s7
  $region1: #{tpu_custom_call.1} parent=0
    #allocation2 [shape = 'u8[8192]{0}', space=vmem, size = 0x2000, scoped, tag = 'output window, operand 0, single buffered']
    #allocation3 [shape = 's32[1]{0}', space=sflag, size = 0x4, scoped, tag = 'scoped memory for tpu_custom_call.1']
    %11 = vsyncpa [#allocation3], 0
    // Predicated region
    $region2: #{tpu_custom_call.1} parent=1 // pred_check
      _
    $region3: #{tpu_custom_call.1} parent=1 // pred_check_branch
      %13 = sbr.rel (0) target = $region5
    $region4: #{tpu_custom_call.1} parent=1 // pred_region
      _
    $region5: #{tpu_custom_call.1} parent=1 // pred_fallthru
      _
    // Predicated region
    $region6: #{tpu_custom_call.1} parent=1 // pred_check
      _
    $region7: #{tpu_custom_call.1} parent=1 // pred_check_branch
      %15 = sbr.rel (0) target = $region9
    $region8: #{tpu_custom_call.1} parent=1 // pred_region
      _
    $region9: #{tpu_custom_call.1} parent=1 // pred_fallthru
      _
    // Predicated region
    $region10: #{tpu_custom_call.1} parent=1 // pred_check
      _
    $region11: #{tpu_custom_call.1} parent=1 // pred_check_branch
      %17 = sbr.rel (0) target = $region13
    $region12: #{tpu_custom_call.1} parent=1 // pred_region
      _
    $region13: #{tpu_custom_call.1} parent=1 // pred_fallthru
      _
    // Predicated region
    $region14: #{tpu_custom_call.1} parent=1 // pred_check
      _
    $region15: #{tpu_custom_call.1} parent=1 // pred_check_branch
      %19 = sbr.rel (0) target = $region17
    $region16: #{tpu_custom_call.1} parent=1 // pred_region
      _
    $region17: #{tpu_custom_call.1} parent=1 // pred_fallthru
      _
    // Predicated region
    $region18: #{tpu_custom_call.1} parent=1 // pred_check
      _
    $region19: #{tpu_custom_call.1} parent=1 // pred_check_branch
      %21 = sbr.rel (0) target = $region21
    $region20: #{tpu_custom_call.1} parent=1 // pred_region
      _
    $region21: #{tpu_custom_call.1} parent=1 // pred_fallthru
      _
    // Predicated region
    $region22: #{tpu_custom_call.1} parent=1 // pred_check
      _
    $region23: #{tpu_custom_call.1} parent=1 // pred_check_branch
      %23 = sbr.rel (0) target = $region25
    $region24: #{tpu_custom_call.1} parent=1 // pred_region
      _
    $region25: #{tpu_custom_call.1} parent=1 // pred_fallthru
      _
    %v24 = vld [vmem:[%s0] sm:$0xff]
    %v25 = vld [vmem:[%s0 + $0x8] sm:$0xff]
    %v26 = vld [vmem:[%s1] sm:$0xff]
    %v27 = vld [vmem:[%s1 + $0x8] sm:$0xff]
    %v28 = vld [vmem:[%s1 + $0x10] sm:$0xff]
    %v29 = vld [vmem:[%s1 + $0x18] sm:$0xff]
    %v30 = vld [vmem:[%s1 + $0x20] sm:$0xff]
    %v31 = vld [vmem:[%s1 + $0x28] sm:$0xff]
    %v32 = vld [vmem:[%s1 + $0x30] sm:$0xff]
    %v33 = vld [vmem:[%s1 + $0x38] sm:$0xff]
    %vm34 = vcmask 261120
    %v36 = vsel %vm34, %v24, 0
    %v39 = vsel %vm34, %v25, 0
    %41 = vmatprep.subr.mxu0 %v27
    %42 = vmatpush1.msra.mxu0 %v26
    %43 = vmatprep.subr.mxu0 %v29
    %44 = vmatpush1.msra.mxu0 %v28
    %45 = vmatprep.subr.mxu0 %v31
    %46 = vmatpush1.msra.mxu0 %v30
    %47 = vmatprep.subr.mxu0 %v33
    %48 = vmatpush1.msra.mxu0 %v32
    %49 = vmatprep.subr.mxu0 0.0
    %50 = vmatpush1.msra.mxu0 0.0
    %51 = vmatprep.subr.mxu0 0.0
    %52 = vmatpush1.msra.mxu0 0.0
    %53 = vmatprep.subr.mxu0 0.0
    %54 = vmatpush1.msra.mxu0 0.0
    %55 = vmatprep.subr.mxu0 0.0
    %56 = vmatpush1.msra.mxu0 0.0
    %57 = vmatprep.subr.mxu0 0.0
    %58 = vmatpush1.msra.mxu0 0.0
    %59 = vmatprep.subr.mxu0 0.0
    %60 = vmatpush1.msra.mxu0 0.0
    %61 = vmatprep.subr.mxu0 0.0
    %62 = vmatpush1.msra.mxu0 0.0
    %63 = vmatprep.subr.mxu0 0.0
    %64 = vmatpush1.msra.mxu0 0.0
    %65 = vmatprep.subr.mxu0 0.0
    %66 = vmatpush1.msra.mxu0 0.0
    %67 = vmatprep.subr.mxu0 0.0
    %68 = vmatpush1.msra.mxu0 0.0
    %69 = vmatprep.subr.mxu0 0.0
    %70 = vmatpush1.msra.mxu0 0.0
    %71 = vmatprep.subr.mxu0 0.0
    %72 = vmatpush1.msra.mxu0 0.0
    %73 = vmatprep.subr.mxu0 0.0
    %74 = vmatpush1.msra.mxu0 0.0
    %75 = vmatprep.subr.mxu0 0.0
    %76 = vmatpush1.msra.mxu0 0.0
    %77 = vmatprep.subr.mxu0 0.0
    %78 = vmatpush1.msra.mxu0 0.0
    %79 = vmatprep.subr.mxu0 0.0
    %80 = vmatpush1.msra.mxu0 0.0
    %81 = vmatprep.subr.mxu0 0.0
    %82 = vmatpush1.msra.mxu0 0.0
    %83 = vmatprep.subr.mxu0 0.0
    %84 = vmatpush1.msra.mxu0 0.0
    %85 = vmatprep.subr.mxu0 0.0
    %86 = vmatpush1.msra.mxu0 0.0
    %87 = vmatprep.subr.mxu0 0.0
    %88 = vmatpush1.msra.mxu0 0.0
    %89 = vmatprep.subr.mxu0 0.0
    %90 = vmatpush1.msra.mxu0 0.0
    %91 = vmatprep.subr.mxu0 0.0
    %92 = vmatpush1.msra.mxu0 0.0
    %93 = vmatprep.subr.mxu0 0.0
    %94 = vmatpush1.msra.mxu0 0.0
    %95 = vmatprep.subr.mxu0 0.0
    %96 = vmatpush1.msra.mxu0 0.0
    %97 = vmatprep.subr.mxu0 0.0
    %98 = vmatpush1.msra.mxu0 0.0
    %99 = vmatprep.subr.mxu0 0.0
    %100 = vmatpush1.msra.mxu0 0.0
    %101 = vmatprep.subr.mxu0 0.0
    %102 = vmatpush1.msra.mxu0 0.0
    %103 = vmatprep.subr.mxu0 0.0
    %104 = vmatpush1.msra.mxu0 0.0
    %105 = vmatprep.mubr.f32.mxu0 0.0
    %106 = vmatmul.mubr.f32.gmra.mrb[0].mxu0 %v36
    %v107 = vpop.f32.mrb[0].mxu0
    %v108 = vadd.f32 0.0, %v107
    %v109 = vpop.f32.mrb[0].mxu0
    %v110 = vadd.f32 0.0, %v109
    %111 = vmatprep.mubr.f32.mxu0 0.0
    %112 = vmatmul.mubr.f32.gmra.mrb[0].mxu0 %v39
    %v113 = vpop.f32.mrb[0].mxu0
    %v114 = vadd.f32 0.0, %v113
    %v115 = vpop.f32.mrb[0].mxu0
    %v116 = vadd.f32 0.0, %v115
    %117 = vdwg.mxu0
    %v118 = vld [vmem:[%s2] sm:$0xff]
    %v119 = vld [vmem:[%s2 + $0x8] sm:$0xff]
    %v120 = vld [vmem:[%s2 + $0x10] sm:$0xff]
    %v121 = vld [vmem:[%s2 + $0x18] sm:$0xff]
    %v122 = vld [vmem:[%s2 + $0x20] sm:$0xff]
    %v123 = vld [vmem:[%s2 + $0x28] sm:$0xff]
    %v124 = vld [vmem:[%s2 + $0x30] sm:$0xff]
    %v125 = vld [vmem:[%s2 + $0x38] sm:$0xff]
    %126 = vmatprep.subr.mxu0 %v119
    %127 = vmatpush1.msra.mxu0 %v118
    %128 = vmatprep.subr.mxu0 %v121
    %129 = vmatpush1.msra.mxu0 %v120
    %130 = vmatprep.subr.mxu0 %v123
    %131 = vmatpush1.msra.mxu0 %v122
    %132 = vmatprep.subr.mxu0 %v125
    %133 = vmatpush1.msra.mxu0 %v124
    %134 = vmatprep.subr.mxu0 0.0
    %135 = vmatpush1.msra.mxu0 0.0
    %136 = vmatprep.subr.mxu0 0.0
    %137 = vmatpush1.msra.mxu0 0.0
    %138 = vmatprep.subr.mxu0 0.0
    %139 = vmatpush1.msra.mxu0 0.0
    %140 = vmatprep.subr.mxu0 0.0
    %141 = vmatpush1.msra.mxu0 0.0
    %142 = vmatprep.subr.mxu0 0.0
    %143 = vmatpush1.msra.mxu0 0.0
    %144 = vmatprep.subr.mxu0 0.0
    %145 = vmatpush1.msra.mxu0 0.0
    %146 = vmatprep.subr.mxu0 0.0
    %147 = vmatpush1.msra.mxu0 0.0
    %148 = vmatprep.subr.mxu0 0.0
    %149 = vmatpush1.msra.mxu0 0.0
    %150 = vmatprep.subr.mxu0 0.0
    %151 = vmatpush1.msra.mxu0 0.0
    %152 = vmatprep.subr.mxu0 0.0
    %153 = vmatpush1.msra.mxu0 0.0
    %154 = vmatprep.subr.mxu0 0.0
    %155 = vmatpush1.msra.mxu0 0.0
    %156 = vmatprep.subr.mxu0 0.0
    %157 = vmatpush1.msra.mxu0 0.0
    %158 = vmatprep.subr.mxu0 0.0
    %159 = vmatpush1.msra.mxu0 0.0
    %160 = vmatprep.subr.mxu0 0.0
    %161 = vmatpush1.msra.mxu0 0.0
    %162 = vmatprep.subr.mxu0 0.0
    %163 = vmatpush1.msra.mxu0 0.0
    %164 = vmatprep.subr.mxu0 0.0
    %165 = vmatpush1.msra.mxu0 0.0
    %166 = vmatprep.subr.mxu0 0.0
    %167 = vmatpush1.msra.mxu0 0.0
    %168 = vmatprep.subr.mxu0 0.0
    %169 = vmatpush1.msra.mxu0 0.0
    %170 = vmatprep.subr.mxu0 0.0
    %171 = vmatpush1.msra.mxu0 0.0
    %172 = vmatprep.subr.mxu0 0.0
    %173 = vmatpush1.msra.mxu0 0.0
    %174 = vmatprep.subr.mxu0 0.0
    %175 = vmatpush1.msra.mxu0 0.0
    %176 = vmatprep.subr.mxu0 0.0
    %177 = vmatpush1.msra.mxu0 0.0
    %178 = vmatprep.subr.mxu0 0.0
    %179 = vmatpush1.msra.mxu0 0.0
    %180 = vmatprep.subr.mxu0 0.0
    %181 = vmatpush1.msra.mxu0 0.0
    %182 = vmatprep.subr.mxu0 0.0
    %183 = vmatpush1.msra.mxu0 0.0
    %184 = vmatprep.subr.mxu0 0.0
    %185 = vmatpush1.msra.mxu0 0.0
    %186 = vmatprep.subr.mxu0 0.0
    %187 = vmatpush1.msra.mxu0 0.0
    %188 = vmatprep.subr.mxu0 0.0
    %189 = vmatpush1.msra.mxu0 0.0
    %190 = vmatprep.mubr.f32.mxu0 0.0
    %191 = vmatmul.mubr.f32.gmra.mrb[0].mxu0 %v36
    %v192 = vpop.f32.mrb[0].mxu0
    %v193 = vadd.f32 0.0, %v192
    %v194 = vpop.f32.mrb[0].mxu0
    %v195 = vadd.f32 0.0, %v194
    %196 = vmatprep.mubr.f32.mxu0 0.0
    %197 = vmatmul.mubr.f32.gmra.mrb[0].mxu0 %v39
    %v198 = vpop.f32.mrb[0].mxu0
    %v199 = vadd.f32 0.0, %v198
    %v200 = vpop.f32.mrb[0].mxu0
    %v201 = vadd.f32 0.0, %v200
    %202 = vdwg.mxu0
    %v203 = vld [vmem:[%s3] sm:$0xff]
    %v204 = vld [vmem:[%s3 + $0x8] sm:$0xff]
    %v205 = vld [vmem:[%s3 + $0x10] sm:$0xff]
    %v206 = vld [vmem:[%s3 + $0x18] sm:$0xff]
    %v207 = vld [vmem:[%s3 + $0x20] sm:$0xff]
    %v208 = vld [vmem:[%s3 + $0x28] sm:$0xff]
    %v209 = vld [vmem:[%s3 + $0x30] sm:$0xff]
    %v210 = vld [vmem:[%s3 + $0x38] sm:$0xff]
    %211 = vmatprep.subr.mxu0 %v204
    %212 = vmatpush1.msra.mxu0 %v203
    %213 = vmatprep.subr.mxu0 %v206
    %214 = vmatpush1.msra.mxu0 %v205
    %215 = vmatprep.subr.mxu0 %v208
    %216 = vmatpush1.msra.mxu0 %v207
    %217 = vmatprep.subr.mxu0 %v210
    %218 = vmatpush1.msra.mxu0 %v209
    %219 = vmatprep.subr.mxu0 0.0
    %220 = vmatpush1.msra.mxu0 0.0
    %221 = vmatprep.subr.mxu0 0.0
    %222 = vmatpush1.msra.mxu0 0.0
    %223 = vmatprep.subr.mxu0 0.0
    %224 = vmatpush1.msra.mxu0 0.0
    %225 = vmatprep.subr.mxu0 0.0
    %226 = vmatpush1.msra.mxu0 0.0
    %227 = vmatprep.subr.mxu0 0.0
    %228 = vmatpush1.msra.mxu0 0.0
    %229 = vmatprep.subr.mxu0 0.0
    %230 = vmatpush1.msra.mxu0 0.0
    %231 = vmatprep.subr.mxu0 0.0
    %232 = vmatpush1.msra.mxu0 0.0
    %233 = vmatprep.subr.mxu0 0.0
    %234 = vmatpush1.msra.mxu0 0.0
    %235 = vmatprep.subr.mxu0 0.0
    %236 = vmatpush1.msra.mxu0 0.0
    %237 = vmatprep.subr.mxu0 0.0
    %238 = vmatpush1.msra.mxu0 0.0
    %239 = vmatprep.subr.mxu0 0.0
    %240 = vmatpush1.msra.mxu0 0.0
    %241 = vmatprep.subr.mxu0 0.0
    %242 = vmatpush1.msra.mxu0 0.0
    %243 = vmatprep.subr.mxu0 0.0
    %244 = vmatpush1.msra.mxu0 0.0
    %245 = vmatprep.subr.mxu0 0.0
    %246 = vmatpush1.msra.mxu0 0.0
    %247 = vmatprep.subr.mxu0 0.0
    %248 = vmatpush1.msra.mxu0 0.0
    %249 = vmatprep.subr.mxu0 0.0
    %250 = vmatpush1.msra.mxu0 0.0
    %251 = vmatprep.subr.mxu0 0.0
    %252 = vmatpush1.msra.mxu0 0.0
    %253 = vmatprep.subr.mxu0 0.0
    %254 = vmatpush1.msra.mxu0 0.0
    %255 = vmatprep.subr.mxu0 0.0
    %256 = vmatpush1.msra.mxu0 0.0
    %257 = vmatprep.subr.mxu0 0.0
    %258 = vmatpush1.msra.mxu0 0.0
    %259 = vmatprep.subr.mxu0 0.0
    %260 = vmatpush1.msra.mxu0 0.0
    %261 = vmatprep.subr.mxu0 0.0
    %262 = vmatpush1.msra.mxu0 0.0
    %263 = vmatprep.subr.mxu0 0.0
    %264 = vmatpush1.msra.mxu0 0.0
    %265 = vmatprep.subr.mxu0 0.0
    %266 = vmatpush1.msra.mxu0 0.0
    %267 = vmatprep.subr.mxu0 0.0
    %268 = vmatpush1.msra.mxu0 0.0
    %269 = vmatprep.subr.mxu0 0.0
    %270 = vmatpush1.msra.mxu0 0.0
    %271 = vmatprep.subr.mxu0 0.0
    %272 = vmatpush1.msra.mxu0 0.0
    %273 = vmatprep.subr.mxu0 0.0
    %274 = vmatpush1.msra.mxu0 0.0
    %275 = vmatprep.mubr.f32.mxu0 0.0
    %276 = vmatmul.mubr.f32.gmra.mrb[0].mxu0 %v36
    %v277 = vpop.f32.mrb[0].mxu0
    %v278 = vadd.f32 0.0, %v277
    %v279 = vpop.f32.mrb[0].mxu0
    %v280 = vadd.f32 0.0, %v279
    %281 = vmatprep.mubr.f32.mxu0 0.0
    %282 = vmatmul.mubr.f32.gmra.mrb[0].mxu0 %v39
    %v283 = vpop.f32.mrb[0].mxu0
    %v284 = vadd.f32 0.0, %v283
    %v285 = vpop.f32.mrb[0].mxu0
    %v286 = vadd.f32 0.0, %v285
    %287 = vdwg.mxu0
    %289 = vrot.lane.b32.xlu0 %v108, 96
    %v290 = vpop.permute.xlu0 %289
    %291 = vrot.lane.b32.xlu0 %v108, 64
    %v292 = vpop.permute.xlu0 %291
    %293 = vrot.lane.b32.xlu0 %v108, 32
    %v294 = vpop.permute.xlu0 %293
    %296 = vrot.lane.b32.xlu0 %v110, 96
    %v297 = vpop.permute.xlu0 %296
    %298 = vrot.lane.b32.xlu0 %v110, 64
    %v299 = vpop.permute.xlu0 %298
    %300 = vrot.lane.b32.xlu0 %v110, 32
    %v301 = vpop.permute.xlu0 %300
    %303 = vrot.lane.b32.xlu0 %v114, 96
    %v304 = vpop.permute.xlu0 %303
    %305 = vrot.lane.b32.xlu0 %v114, 64
    %v306 = vpop.permute.xlu0 %305
    %307 = vrot.lane.b32.xlu0 %v114, 32
    %v308 = vpop.permute.xlu0 %307
    %310 = vrot.lane.b32.xlu0 %v116, 96
    %v311 = vpop.permute.xlu0 %310
    %312 = vrot.lane.b32.xlu0 %v116, 64
    %v313 = vpop.permute.xlu0 %312
    %314 = vrot.lane.b32.xlu0 %v116, 32
    %v315 = vpop.permute.xlu0 %314
    %317 = vrot.lane.b32.xlu0 %v193, 96
    %v318 = vpop.permute.xlu0 %317
    %319 = vrot.lane.b32.xlu0 %v193, 64
    %v320 = vpop.permute.xlu0 %319
    %321 = vrot.lane.b32.xlu0 %v193, 32
    %v322 = vpop.permute.xlu0 %321
    %324 = vrot.lane.b32.xlu0 %v195, 96
    %v325 = vpop.permute.xlu0 %324
    %326 = vrot.lane.b32.xlu0 %v195, 64
    %v327 = vpop.permute.xlu0 %326
    %328 = vrot.lane.b32.xlu0 %v195, 32
    %v329 = vpop.permute.xlu0 %328
    %331 = vrot.lane.b32.xlu0 %v199, 96
    %v332 = vpop.permute.xlu0 %331
    %333 = vrot.lane.b32.xlu0 %v199, 64
    %v334 = vpop.permute.xlu0 %333
    %335 = vrot.lane.b32.xlu0 %v199, 32
    %v336 = vpop.permute.xlu0 %335
    %338 = vrot.lane.b32.xlu0 %v201, 96
    %v339 = vpop.permute.xlu0 %338
    %340 = vrot.lane.b32.xlu0 %v201, 64
    %v341 = vpop.permute.xlu0 %340
    %342 = vrot.lane.b32.xlu0 %v201, 32
    %v343 = vpop.permute.xlu0 %342
    %345 = vrot.lane.b32.xlu0 %v278, 96
    %v346 = vpop.permute.xlu0 %345
    %348 = vrot.lane.b32.xlu0 %v278, 64
    %v349 = vpop.permute.xlu0 %348
    %351 = vrot.lane.b32.xlu0 %v278, 32
    %v352 = vpop.permute.xlu0 %351
    %355 = vrot.lane.b32.xlu0 %v280, 96
    %v356 = vpop.permute.xlu0 %355
    %358 = vrot.lane.b32.xlu0 %v280, 64
    %v359 = vpop.permute.xlu0 %358
    %361 = vrot.lane.b32.xlu0 %v280, 32
    %v362 = vpop.permute.xlu0 %361
    %365 = vrot.lane.b32.xlu0 %v284, 96
    %v366 = vpop.permute.xlu0 %365
    %368 = vrot.lane.b32.xlu0 %v284, 64
    %v369 = vpop.permute.xlu0 %368
    %371 = vrot.lane.b32.xlu0 %v284, 32
    %v372 = vpop.permute.xlu0 %371
    %375 = vrot.lane.b32.xlu0 %v286, 96
    %v376 = vpop.permute.xlu0 %375
    %378 = vrot.lane.b32.xlu0 %v286, 64
    %v379 = vpop.permute.xlu0 %378
    %381 = vrot.lane.b32.xlu0 %v286, 32
    %v382 = vpop.permute.xlu0 %381
    %v384 = vsel %vm34, %v108, 0
    %v386 = vsel %vm34, %v193, 0
    %388 = vmatprep.subr.mxu0 0.0
    %389 = vmatpush1.xpose.msra.mxu0 %v386
    %390 = vmatprep.subr.mxu0 0.0
    %391 = vmatpush1.xpose.msra.mxu0 0.0
    %392 = vmatprep.subr.mxu0 0.0
    %393 = vmatpush1.xpose.msra.mxu0 0.0
    %394 = vmatprep.subr.mxu0 0.0
    %395 = vmatpush1.xpose.msra.mxu0 0.0
    %396 = vmatprep.subr.mxu0 0.0
    %397 = vmatpush1.xpose.msra.mxu0 0.0
    %398 = vmatprep.subr.mxu0 0.0
    %399 = vmatpush1.xpose.msra.mxu0 0.0
    %400 = vmatprep.subr.mxu0 0.0
    %401 = vmatpush1.xpose.msra.mxu0 0.0
    %402 = vmatprep.subr.mxu0 0.0
    %403 = vmatpush1.xpose.msra.mxu0 0.0
    %404 = vmatprep.subr.mxu0 0.0
    %405 = vmatpush1.xpose.msra.mxu0 0.0
    %406 = vmatprep.subr.mxu0 0.0
    %407 = vmatpush1.xpose.msra.mxu0 0.0
    %408 = vmatprep.subr.mxu0 0.0
    %409 = vmatpush1.xpose.msra.mxu0 0.0
    %410 = vmatprep.subr.mxu0 0.0
    %411 = vmatpush1.xpose.msra.mxu0 0.0
    %412 = vmatprep.subr.mxu0 0.0
    %413 = vmatpush1.xpose.msra.mxu0 0.0
    %414 = vmatprep.subr.mxu0 0.0
    %415 = vmatpush1.xpose.msra.mxu0 0.0
    %416 = vmatprep.subr.mxu0 0.0
    %417 = vmatpush1.xpose.msra.mxu0 0.0
    %418 = vmatprep.subr.mxu0 0.0
    %419 = vmatpush1.xpose.msra.mxu0 0.0
    %420 = vmatprep.subr.mxu0 0.0
    %421 = vmatpush1.xpose.msra.mxu0 0.0
    %422 = vmatprep.subr.mxu0 0.0
    %423 = vmatpush1.xpose.msra.mxu0 0.0
    %424 = vmatprep.subr.mxu0 0.0
    %425 = vmatpush1.xpose.msra.mxu0 0.0
    %426 = vmatprep.subr.mxu0 0.0
    %427 = vmatpush1.xpose.msra.mxu0 0.0
    %428 = vmatprep.subr.mxu0 0.0
    %429 = vmatpush1.xpose.msra.mxu0 0.0
    %430 = vmatprep.subr.mxu0 0.0
    %431 = vmatpush1.xpose.msra.mxu0 0.0
    %432 = vmatprep.subr.mxu0 0.0
    %433 = vmatpush1.xpose.msra.mxu0 0.0
    %434 = vmatprep.subr.mxu0 0.0
    %435 = vmatpush1.xpose.msra.mxu0 0.0
    %436 = vmatprep.subr.mxu0 0.0
    %437 = vmatpush1.xpose.msra.mxu0 0.0
    %438 = vmatprep.subr.mxu0 0.0
    %439 = vmatpush1.xpose.msra.mxu0 0.0
    %440 = vmatprep.subr.mxu0 0.0
    %441 = vmatpush1.xpose.msra.mxu0 0.0
    %442 = vmatprep.subr.mxu0 0.0
    %443 = vmatpush1.xpose.msra.mxu0 0.0
    %444 = vmatprep.subr.mxu0 0.0
    %445 = vmatpush1.xpose.msra.mxu0 0.0
    %446 = vmatprep.subr.mxu0 0.0
    %447 = vmatpush1.xpose.msra.mxu0 0.0
    %448 = vmatprep.subr.mxu0 0.0
    %449 = vmatpush1.xpose.msra.mxu0 0.0
    %450 = vmatprep.subr.mxu0 0.0
    %451 = vmatpush1.xpose.msra.mxu0 0.0
    %452 = vmatprep.mubr.f32.mxu0 0.0
    %453 = vmatmul.mubr.f32.gmra.mrb[0].mxu0 %v384
    %v454 = vpop.f32.mrb[0].mxu0
    %v455 = vadd.f32 0.0, %v454
    %v456 = vpop.f32.mrb[0].mxu0
    %457 = vdwg.mxu0
    %v458 = vsel %vm34, %v290, 0
    %v460 = vsel %vm34, %v318, 0
    %462 = vmatprep.subr.mxu0 0.0
    %463 = vmatpush1.xpose.msra.mxu0 %v460
    %464 = vmatprep.subr.mxu0 0.0
    %465 = vmatpush1.xpose.msra.mxu0 0.0
    %466 = vmatprep.subr.mxu0 0.0
    %467 = vmatpush1.xpose.msra.mxu0 0.0
    %468 = vmatprep.subr.mxu0 0.0
    %469 = vmatpush1.xpose.msra.mxu0 0.0
    %470 = vmatprep.subr.mxu0 0.0
    %471 = vmatpush1.xpose.msra.mxu0 0.0
    %472 = vmatprep.subr.mxu0 0.0
    %473 = vmatpush1.xpose.msra.mxu0 0.0
    %474 = vmatprep.subr.mxu0 0.0
    %475 = vmatpush1.xpose.msra.mxu0 0.0
    %476 = vmatprep.subr.mxu0 0.0
    %477 = vmatpush1.xpose.msra.mxu0 0.0
    %478 = vmatprep.subr.mxu0 0.0
    %479 = vmatpush1.xpose.msra.mxu0 0.0
    %480 = vmatprep.subr.mxu0 0.0
    %481 = vmatpush1.xpose.msra.mxu0 0.0
    %482 = vmatprep.subr.mxu0 0.0
    %483 = vmatpush1.xpose.msra.mxu0 0.0
    %484 = vmatprep.subr.mxu0 0.0
    %485 = vmatpush1.xpose.msra.mxu0 0.0
    %486 = vmatprep.subr.mxu0 0.0
    %487 = vmatpush1.xpose.msra.mxu0 0.0
    %488 = vmatprep.subr.mxu0 0.0
    %489 = vmatpush1.xpose.msra.mxu0 0.0
    %490 = vmatprep.subr.mxu0 0.0
    %491 = vmatpush1.xpose.msra.mxu0 0.0
    %492 = vmatprep.subr.mxu0 0.0
    %493 = vmatpush1.xpose.msra.mxu0 0.0
    %494 = vmatprep.subr.mxu0 0.0
    %495 = vmatpush1.xpose.msra.mxu0 0.0
    %496 = vmatprep.subr.mxu0 0.0
    %497 = vmatpush1.xpose.msra.mxu0 0.0
    %498 = vmatprep.subr.mxu0 0.0
    %499 = vmatpush1.xpose.msra.mxu0 0.0
    %500 = vmatprep.subr.mxu0 0.0
    %501 = vmatpush1.xpose.msra.mxu0 0.0
    %502 = vmatprep.subr.mxu0 0.0
    %503 = vmatpush1.xpose.msra.mxu0 0.0
    %504 = vmatprep.subr.mxu0 0.0
    %505 = vmatpush1.xpose.msra.mxu0 0.0
    %506 = vmatprep.subr.mxu0 0.0
    %507 = vmatpush1.xpose.msra.mxu0 0.0
    %508 = vmatprep.subr.mxu0 0.0
    %509 = vmatpush1.xpose.msra.mxu0 0.0
    %510 = vmatprep.subr.mxu0 0.0
    %511 = vmatpush1.xpose.msra.mxu0 0.0
    %512 = vmatprep.subr.mxu0 0.0
    %513 = vmatpush1.xpose.msra.mxu0 0.0
    %514 = vmatprep.subr.mxu0 0.0
    %515 = vmatpush1.xpose.msra.mxu0 0.0
    %516 = vmatprep.subr.mxu0 0.0
    %517 = vmatpush1.xpose.msra.mxu0 0.0
    %518 = vmatprep.subr.mxu0 0.0
    %519 = vmatpush1.xpose.msra.mxu0 0.0
    %520 = vmatprep.subr.mxu0 0.0
    %521 = vmatpush1.xpose.msra.mxu0 0.0
    %522 = vmatprep.subr.mxu0 0.0
    %523 = vmatpush1.xpose.msra.mxu0 0.0
    %524 = vmatprep.subr.mxu0 0.0
    %525 = vmatpush1.xpose.msra.mxu0 0.0
    %526 = vmatprep.mubr.f32.mxu0 0.0
    %527 = vmatmul.mubr.f32.gmra.mrb[0].mxu0 %v458
    %v528 = vpop.f32.mrb[0].mxu0
    %v529 = vadd.f32 0.0, %v528
    %v530 = vpop.f32.mrb[0].mxu0
    %531 = vdwg.mxu0
    %v532 = vsel %vm34, %v292, 0
    %v534 = vsel %vm34, %v320, 0
    %536 = vmatprep.subr.mxu0 0.0
    %537 = vmatpush1.xpose.msra.mxu0 %v534
    %538 = vmatprep.subr.mxu0 0.0
    %539 = vmatpush1.xpose.msra.mxu0 0.0
    %540 = vmatprep.subr.mxu0 0.0
    %541 = vmatpush1.xpose.msra.mxu0 0.0
    %542 = vmatprep.subr.mxu0 0.0
    %543 = vmatpush1.xpose.msra.mxu0 0.0
    %544 = vmatprep.subr.mxu0 0.0
    %545 = vmatpush1.xpose.msra.mxu0 0.0
    %546 = vmatprep.subr.mxu0 0.0
    %547 = vmatpush1.xpose.msra.mxu0 0.0
    %548 = vmatprep.subr.mxu0 0.0
    %549 = vmatpush1.xpose.msra.mxu0 0.0
    %550 = vmatprep.subr.mxu0 0.0
    %551 = vmatpush1.xpose.msra.mxu0 0.0
    %552 = vmatprep.subr.mxu0 0.0
    %553 = vmatpush1.xpose.msra.mxu0 0.0
    %554 = vmatprep.subr.mxu0 0.0
    %555 = vmatpush1.xpose.msra.mxu0 0.0
    %556 = vmatprep.subr.mxu0 0.0
    %557 = vmatpush1.xpose.msra.mxu0 0.0
    %558 = vmatprep.subr.mxu0 0.0
    %559 = vmatpush1.xpose.msra.mxu0 0.0
    %560 = vmatprep.subr.mxu0 0.0
    %561 = vmatpush1.xpose.msra.mxu0 0.0
    %562 = vmatprep.subr.mxu0 0.0
    %563 = vmatpush1.xpose.msra.mxu0 0.0
    %564 = vmatprep.subr.mxu0 0.0
    %565 = vmatpush1.xpose.msra.mxu0 0.0
    %566 = vmatprep.subr.mxu0 0.0
    %567 = vmatpush1.xpose.msra.mxu0 0.0
    %568 = vmatprep.subr.mxu0 0.0
    %569 = vmatpush1.xpose.msra.mxu0 0.0
    %570 = vmatprep.subr.mxu0 0.0
    %571 = vmatpush1.xpose.msra.mxu0 0.0
    %572 = vmatprep.subr.mxu0 0.0
    %573 = vmatpush1.xpose.msra.mxu0 0.0
    %574 = vmatprep.subr.mxu0 0.0
    %575 = vmatpush1.xpose.msra.mxu0 0.0
    %576 = vmatprep.subr.mxu0 0.0
    %577 = vmatpush1.xpose.msra.mxu0 0.0
    %578 = vmatprep.subr.mxu0 0.0
    %579 = vmatpush1.xpose.msra.mxu0 0.0
    %580 = vmatprep.subr.mxu0 0.0
    %581 = vmatpush1.xpose.msra.mxu0 0.0
    %582 = vmatprep.subr.mxu0 0.0
    %583 = vmatpush1.xpose.msra.mxu0 0.0
    %584 = vmatprep.subr.mxu0 0.0
    %585 = vmatpush1.xpose.msra.mxu0 0.0
    %586 = vmatprep.subr.mxu0 0.0
    %587 = vmatpush1.xpose.msra.mxu0 0.0
    %588 = vmatprep.subr.mxu0 0.0
    %589 = vmatpush1.xpose.msra.mxu0 0.0
    %590 = vmatprep.subr.mxu0 0.0
    %591 = vmatpush1.xpose.msra.mxu0 0.0
    %592 = vmatprep.subr.mxu0 0.0
    %593 = vmatpush1.xpose.msra.mxu0 0.0
    %594 = vmatprep.subr.mxu0 0.0
    %595 = vmatpush1.xpose.msra.mxu0 0.0
    %596 = vmatprep.subr.mxu0 0.0
    %597 = vmatpush1.xpose.msra.mxu0 0.0
    %598 = vmatprep.subr.mxu0 0.0
    %599 = vmatpush1.xpose.msra.mxu0 0.0
    %600 = vmatprep.mubr.f32.mxu0 0.0
    %601 = vmatmul.mubr.f32.gmra.mrb[0].mxu0 %v532
    %v602 = vpop.f32.mrb[0].mxu0
    %v603 = vadd.f32 0.0, %v602
    %v604 = vpop.f32.mrb[0].mxu0
    %605 = vdwg.mxu0
    %v606 = vsel %vm34, %v294, 0
    %v608 = vsel %vm34, %v322, 0
    %610 = vmatprep.subr.mxu0 0.0
    %611 = vmatpush1.xpose.msra.mxu0 %v608
    %612 = vmatprep.subr.mxu0 0.0
    %613 = vmatpush1.xpose.msra.mxu0 0.0
    %614 = vmatprep.subr.mxu0 0.0
    %615 = vmatpush1.xpose.msra.mxu0 0.0
    %616 = vmatprep.subr.mxu0 0.0
    %617 = vmatpush1.xpose.msra.mxu0 0.0
    %618 = vmatprep.subr.mxu0 0.0
    %619 = vmatpush1.xpose.msra.mxu0 0.0
    %620 = vmatprep.subr.mxu0 0.0
    %621 = vmatpush1.xpose.msra.mxu0 0.0
    %622 = vmatprep.subr.mxu0 0.0
    %623 = vmatpush1.xpose.msra.mxu0 0.0
    %624 = vmatprep.subr.mxu0 0.0
    %625 = vmatpush1.xpose.msra.mxu0 0.0
    %626 = vmatprep.subr.mxu0 0.0
    %627 = vmatpush1.xpose.msra.mxu0 0.0
    %628 = vmatprep.subr.mxu0 0.0
    %629 = vmatpush1.xpose.msra.mxu0 0.0
    %630 = vmatprep.subr.mxu0 0.0
    %631 = vmatpush1.xpose.msra.mxu0 0.0
    %632 = vmatprep.subr.mxu0 0.0
    %633 = vmatpush1.xpose.msra.mxu0 0.0
    %634 = vmatprep.subr.mxu0 0.0
    %635 = vmatpush1.xpose.msra.mxu0 0.0
    %636 = vmatprep.subr.mxu0 0.0
    %637 = vmatpush1.xpose.msra.mxu0 0.0
    %638 = vmatprep.subr.mxu0 0.0
    %639 = vmatpush1.xpose.msra.mxu0 0.0
    %640 = vmatprep.subr.mxu0 0.0
    %641 = vmatpush1.xpose.msra.mxu0 0.0
    %642 = vmatprep.subr.mxu0 0.0
    %643 = vmatpush1.xpose.msra.mxu0 0.0
    %644 = vmatprep.subr.mxu0 0.0
    %645 = vmatpush1.xpose.msra.mxu0 0.0
    %646 = vmatprep.subr.mxu0 0.0
    %647 = vmatpush1.xpose.msra.mxu0 0.0
    %648 = vmatprep.subr.mxu0 0.0
    %649 = vmatpush1.xpose.msra.mxu0 0.0
    %650 = vmatprep.subr.mxu0 0.0
    %651 = vmatpush1.xpose.msra.mxu0 0.0
    %652 = vmatprep.subr.mxu0 0.0
    %653 = vmatpush1.xpose.msra.mxu0 0.0
    %654 = vmatprep.subr.mxu0 0.0
    %655 = vmatpush1.xpose.msra.mxu0 0.0
    %656 = vmatprep.subr.mxu0 0.0
    %657 = vmatpush1.xpose.msra.mxu0 0.0
    %658 = vmatprep.subr.mxu0 0.0
    %659 = vmatpush1.xpose.msra.mxu0 0.0
    %660 = vmatprep.subr.mxu0 0.0
    %661 = vmatpush1.xpose.msra.mxu0 0.0
    %662 = vmatprep.subr.mxu0 0.0
    %663 = vmatpush1.xpose.msra.mxu0 0.0
    %664 = vmatprep.subr.mxu0 0.0
    %665 = vmatpush1.xpose.msra.mxu0 0.0
    %666 = vmatprep.subr.mxu0 0.0
    %667 = vmatpush1.xpose.msra.mxu0 0.0
    %668 = vmatprep.subr.mxu0 0.0
    %669 = vmatpush1.xpose.msra.mxu0 0.0
    %670 = vmatprep.subr.mxu0 0.0
    %671 = vmatpush1.xpose.msra.mxu0 0.0
    %672 = vmatprep.subr.mxu0 0.0
    %673 = vmatpush1.xpose.msra.mxu0 0.0
    %674 = vmatprep.mubr.f32.mxu0 0.0
    %675 = vmatmul.mubr.f32.gmra.mrb[0].mxu0 %v606
    %v676 = vpop.f32.mrb[0].mxu0
    %v677 = vadd.f32 0.0, %v676
    %v678 = vpop.f32.mrb[0].mxu0
    %679 = vdwg.mxu0
    %v680 = vsel %vm34, %v110, 0
    %v682 = vsel %vm34, %v195, 0
    %684 = vmatprep.subr.mxu0 0.0
    %685 = vmatpush1.xpose.msra.mxu0 %v682
    %686 = vmatprep.subr.mxu0 0.0
    %687 = vmatpush1.xpose.msra.mxu0 0.0
    %688 = vmatprep.subr.mxu0 0.0
    %689 = vmatpush1.xpose.msra.mxu0 0.0
    %690 = vmatprep.subr.mxu0 0.0
    %691 = vmatpush1.xpose.msra.mxu0 0.0
    %692 = vmatprep.subr.mxu0 0.0
    %693 = vmatpush1.xpose.msra.mxu0 0.0
    %694 = vmatprep.subr.mxu0 0.0
    %695 = vmatpush1.xpose.msra.mxu0 0.0
    %696 = vmatprep.subr.mxu0 0.0
    %697 = vmatpush1.xpose.msra.mxu0 0.0
    %698 = vmatprep.subr.mxu0 0.0
    %699 = vmatpush1.xpose.msra.mxu0 0.0
    %700 = vmatprep.subr.mxu0 0.0
    %701 = vmatpush1.xpose.msra.mxu0 0.0
    %702 = vmatprep.subr.mxu0 0.0
    %703 = vmatpush1.xpose.msra.mxu0 0.0
    %704 = vmatprep.subr.mxu0 0.0
    %705 = vmatpush1.xpose.msra.mxu0 0.0
    %706 = vmatprep.subr.mxu0 0.0
    %707 = vmatpush1.xpose.msra.mxu0 0.0
    %708 = vmatprep.subr.mxu0 0.0
    %709 = vmatpush1.xpose.msra.mxu0 0.0
    %710 = vmatprep.subr.mxu0 0.0
    %711 = vmatpush1.xpose.msra.mxu0 0.0
    %712 = vmatprep.subr.mxu0 0.0
    %713 = vmatpush1.xpose.msra.mxu0 0.0
    %714 = vmatprep.subr.mxu0 0.0
    %715 = vmatpush1.xpose.msra.mxu0 0.0
    %716 = vmatprep.subr.mxu0 0.0
    %717 = vmatpush1.xpose.msra.mxu0 0.0
    %718 = vmatprep.subr.mxu0 0.0
    %719 = vmatpush1.xpose.msra.mxu0 0.0
    %720 = vmatprep.subr.mxu0 0.0
    %721 = vmatpush1.xpose.msra.mxu0 0.0
    %722 = vmatprep.subr.mxu0 0.0
    %723 = vmatpush1.xpose.msra.mxu0 0.0
    %724 = vmatprep.subr.mxu0 0.0
    %725 = vmatpush1.xpose.msra.mxu0 0.0
    %726 = vmatprep.subr.mxu0 0.0
    %727 = vmatpush1.xpose.msra.mxu0 0.0
    %728 = vmatprep.subr.mxu0 0.0
    %729 = vmatpush1.xpose.msra.mxu0 0.0
    %730 = vmatprep.subr.mxu0 0.0
    %731 = vmatpush1.xpose.msra.mxu0 0.0
    %732 = vmatprep.subr.mxu0 0.0
    %733 = vmatpush1.xpose.msra.mxu0 0.0
    %734 = vmatprep.subr.mxu0 0.0
    %735 = vmatpush1.xpose.msra.mxu0 0.0
    %736 = vmatprep.subr.mxu0 0.0
    %737 = vmatpush1.xpose.msra.mxu0 0.0
    %738 = vmatprep.subr.mxu0 0.0
    %739 = vmatpush1.xpose.msra.mxu0 0.0
    %740 = vmatprep.subr.mxu0 0.0
    %741 = vmatpush1.xpose.msra.mxu0 0.0
    %742 = vmatprep.subr.mxu0 0.0
    %743 = vmatpush1.xpose.msra.mxu0 0.0
    %744 = vmatprep.subr.mxu0 0.0
    %745 = vmatpush1.xpose.msra.mxu0 0.0
    %746 = vmatprep.subr.mxu0 0.0
    %747 = vmatpush1.xpose.msra.mxu0 0.0
    %748 = vmatprep.mubr.f32.mxu0 0.0
    %749 = vmatmul.mubr.f32.gmra.mrb[0].mxu0 %v680
    %v750 = vpop.f32.mrb[0].mxu0
    %v751 = vadd.f32 0.0, %v750
    %v752 = vpop.f32.mrb[0].mxu0
    %753 = vdwg.mxu0
    %v754 = vsel %vm34, %v297, 0
    %v756 = vsel %vm34, %v325, 0
    %758 = vmatprep.subr.mxu0 0.0
    %759 = vmatpush1.xpose.msra.mxu0 %v756
    %760 = vmatprep.subr.mxu0 0.0
    %761 = vmatpush1.xpose.msra.mxu0 0.0
    %762 = vmatprep.subr.mxu0 0.0
    %763 = vmatpush1.xpose.msra.mxu0 0.0
    %764 = vmatprep.subr.mxu0 0.0
    %765 = vmatpush1.xpose.msra.mxu0 0.0
    %766 = vmatprep.subr.mxu0 0.0
    %767 = vmatpush1.xpose.msra.mxu0 0.0
    %768 = vmatprep.subr.mxu0 0.0
    %769 = vmatpush1.xpose.msra.mxu0 0.0
    %770 = vmatprep.subr.mxu0 0.0
    %771 = vmatpush1.xpose.msra.mxu0 0.0
    %772 = vmatprep.subr.mxu0 0.0
    %773 = vmatpush1.xpose.msra.mxu0 0.0
    %774 = vmatprep.subr.mxu0 0.0
    %775 = vmatpush1.xpose.msra.mxu0 0.0
    %776 = vmatprep.subr.mxu0 0.0
    %777 = vmatpush1.xpose.msra.mxu0 0.0
    %778 = vmatprep.subr.mxu0 0.0
    %779 = vmatpush1.xpose.msra.mxu0 0.0
    %780 = vmatprep.subr.mxu0 0.0
    %781 = vmatpush1.xpose.msra.mxu0 0.0
    %782 = vmatprep.subr.mxu0 0.0
    %783 = vmatpush1.xpose.msra.mxu0 0.0
    %784 = vmatprep.subr.mxu0 0.0
    %785 = vmatpush1.xpose.msra.mxu0 0.0
    %786 = vmatprep.subr.mxu0 0.0
    %787 = vmatpush1.xpose.msra.mxu0 0.0
    %788 = vmatprep.subr.mxu0 0.0
    %789 = vmatpush1.xpose.msra.mxu0 0.0
    %790 = vmatprep.subr.mxu0 0.0
    %791 = vmatpush1.xpose.msra.mxu0 0.0
    %792 = vmatprep.subr.mxu0 0.0
    %793 = vmatpush1.xpose.msra.mxu0 0.0
    %794 = vmatprep.subr.mxu0 0.0
    %795 = vmatpush1.xpose.msra.mxu0 0.0
    %796 = vmatprep.subr.mxu0 0.0
    %797 = vmatpush1.xpose.msra.mxu0 0.0
    %798 = vmatprep.subr.mxu0 0.0
    %799 = vmatpush1.xpose.msra.mxu0 0.0
    %800 = vmatprep.subr.mxu0 0.0
    %801 = vmatpush1.xpose.msra.mxu0 0.0
    %802 = vmatprep.subr.mxu0 0.0
    %803 = vmatpush1.xpose.msra.mxu0 0.0
    %804 = vmatprep.subr.mxu0 0.0
    %805 = vmatpush1.xpose.msra.mxu0 0.0
    %806 = vmatprep.subr.mxu0 0.0
    %807 = vmatpush1.xpose.msra.mxu0 0.0
    %808 = vmatprep.subr.mxu0 0.0
    %809 = vmatpush1.xpose.msra.mxu0 0.0
    %810 = vmatprep.subr.mxu0 0.0
    %811 = vmatpush1.xpose.msra.mxu0 0.0
    %812 = vmatprep.subr.mxu0 0.0
    %813 = vmatpush1.xpose.msra.mxu0 0.0
    %814 = vmatprep.subr.mxu0 0.0
    %815 = vmatpush1.xpose.msra.mxu0 0.0
    %816 = vmatprep.subr.mxu0 0.0
    %817 = vmatpush1.xpose.msra.mxu0 0.0
    %818 = vmatprep.subr.mxu0 0.0
    %819 = vmatpush1.xpose.msra.mxu0 0.0
    %820 = vmatprep.subr.mxu0 0.0
    %821 = vmatpush1.xpose.msra.mxu0 0.0
    %822 = vmatprep.mubr.f32.mxu0 0.0
    %823 = vmatmul.mubr.f32.gmra.mrb[0].mxu0 %v754
    %v824 = vpop.f32.mrb[0].mxu0
    %v825 = vadd.f32 0.0, %v824
    %v826 = vpop.f32.mrb[0].mxu0
    %827 = vdwg.mxu0
    %v828 = vsel %vm34, %v299, 0
    %v830 = vsel %vm34, %v327, 0
    %832 = vmatprep.subr.mxu0 0.0
    %833 = vmatpush1.xpose.msra.mxu0 %v830
    %834 = vmatprep.subr.mxu0 0.0
    %835 = vmatpush1.xpose.msra.mxu0 0.0
    %836 = vmatprep.subr.mxu0 0.0
    %837 = vmatpush1.xpose.msra.mxu0 0.0
    %838 = vmatprep.subr.mxu0 0.0
    %839 = vmatpush1.xpose.msra.mxu0 0.0
    %840 = vmatprep.subr.mxu0 0.0
    %841 = vmatpush1.xpose.msra.mxu0 0.0
    %842 = vmatprep.subr.mxu0 0.0
    %843 = vmatpush1.xpose.msra.mxu0 0.0
    %844 = vmatprep.subr.mxu0 0.0
    %845 = vmatpush1.xpose.msra.mxu0 0.0
    %846 = vmatprep.subr.mxu0 0.0
    %847 = vmatpush1.xpose.msra.mxu0 0.0
    %848 = vmatprep.subr.mxu0 0.0
    %849 = vmatpush1.xpose.msra.mxu0 0.0
    %850 = vmatprep.subr.mxu0 0.0
    %851 = vmatpush1.xpose.msra.mxu0 0.0
    %852 = vmatprep.subr.mxu0 0.0
    %853 = vmatpush1.xpose.msra.mxu0 0.0
    %854 = vmatprep.subr.mxu0 0.0
    %855 = vmatpush1.xpose.msra.mxu0 0.0
    %856 = vmatprep.subr.mxu0 0.0
    %857 = vmatpush1.xpose.msra.mxu0 0.0
    %858 = vmatprep.subr.mxu0 0.0
    %859 = vmatpush1.xpose.msra.mxu0 0.0
    %860 = vmatprep.subr.mxu0 0.0
    %861 = vmatpush1.xpose.msra.mxu0 0.0
    %862 = vmatprep.subr.mxu0 0.0
    %863 = vmatpush1.xpose.msra.mxu0 0.0
    %864 = vmatprep.subr.mxu0 0.0
    %865 = vmatpush1.xpose.msra.mxu0 0.0
    %866 = vmatprep.subr.mxu0 0.0
    %867 = vmatpush1.xpose.msra.mxu0 0.0
    %868 = vmatprep.subr.mxu0 0.0
    %869 = vmatpush1.xpose.msra.mxu0 0.0
    %870 = vmatprep.subr.mxu0 0.0
    %871 = vmatpush1.xpose.msra.mxu0 0.0
    %872 = vmatprep.subr.mxu0 0.0
    %873 = vmatpush1.xpose.msra.mxu0 0.0
    %874 = vmatprep.subr.mxu0 0.0
    %875 = vmatpush1.xpose.msra.mxu0 0.0
    %876 = vmatprep.subr.mxu0 0.0
    %877 = vmatpush1.xpose.msra.mxu0 0.0
    %878 = vmatprep.subr.mxu0 0.0
    %879 = vmatpush1.xpose.msra.mxu0 0.0
    %880 = vmatprep.subr.mxu0 0.0
    %881 = vmatpush1.xpose.msra.mxu0 0.0
    %882 = vmatprep.subr.mxu0 0.0
    %883 = vmatpush1.xpose.msra.mxu0 0.0
    %884 = vmatprep.subr.mxu0 0.0
    %885 = vmatpush1.xpose.msra.mxu0 0.0
    %886 = vmatprep.subr.mxu0 0.0
    %887 = vmatpush1.xpose.msra.mxu0 0.0
    %888 = vmatprep.subr.mxu0 0.0
    %889 = vmatpush1.xpose.msra.mxu0 0.0
    %890 = vmatprep.subr.mxu0 0.0
    %891 = vmatpush1.xpose.msra.mxu0 0.0
    %892 = vmatprep.subr.mxu0 0.0
    %893 = vmatpush1.xpose.msra.mxu0 0.0
    %894 = vmatprep.subr.mxu0 0.0
    %895 = vmatpush1.xpose.msra.mxu0 0.0
    %896 = vmatprep.mubr.f32.mxu0 0.0
    %897 = vmatmul.mubr.f32.gmra.mrb[0].mxu0 %v828
    %v898 = vpop.f32.mrb[0].mxu0
    %v899 = vadd.f32 0.0, %v898
    %v900 = vpop.f32.mrb[0].mxu0
    %901 = vdwg.mxu0
    %v902 = vsel %vm34, %v301, 0
    %v904 = vsel %vm34, %v329, 0
    %906 = vmatprep.subr.mxu0 0.0
    %907 = vmatpush1.xpose.msra.mxu0 %v904
    %908 = vmatprep.subr.mxu0 0.0
    %909 = vmatpush1.xpose.msra.mxu0 0.0
    %910 = vmatprep.subr.mxu0 0.0
    %911 = vmatpush1.xpose.msra.mxu0 0.0
    %912 = vmatprep.subr.mxu0 0.0
    %913 = vmatpush1.xpose.msra.mxu0 0.0
    %914 = vmatprep.subr.mxu0 0.0
    %915 = vmatpush1.xpose.msra.mxu0 0.0
    %916 = vmatprep.subr.mxu0 0.0
    %917 = vmatpush1.xpose.msra.mxu0 0.0
    %918 = vmatprep.subr.mxu0 0.0
    %919 = vmatpush1.xpose.msra.mxu0 0.0
    %920 = vmatprep.subr.mxu0 0.0
    %921 = vmatpush1.xpose.msra.mxu0 0.0
    %922 = vmatprep.subr.mxu0 0.0
    %923 = vmatpush1.xpose.msra.mxu0 0.0
    %924 = vmatprep.subr.mxu0 0.0
    %925 = vmatpush1.xpose.msra.mxu0 0.0
    %926 = vmatprep.subr.mxu0 0.0
    %927 = vmatpush1.xpose.msra.mxu0 0.0
    %928 = vmatprep.subr.mxu0 0.0
    %929 = vmatpush1.xpose.msra.mxu0 0.0
    %930 = vmatprep.subr.mxu0 0.0
    %931 = vmatpush1.xpose.msra.mxu0 0.0
    %932 = vmatprep.subr.mxu0 0.0
    %933 = vmatpush1.xpose.msra.mxu0 0.0
    %934 = vmatprep.subr.mxu0 0.0
    %935 = vmatpush1.xpose.msra.mxu0 0.0
    %936 = vmatprep.subr.mxu0 0.0
    %937 = vmatpush1.xpose.msra.mxu0 0.0
    %938 = vmatprep.subr.mxu0 0.0
    %939 = vmatpush1.xpose.msra.mxu0 0.0
    %940 = vmatprep.subr.mxu0 0.0
    %941 = vmatpush1.xpose.msra.mxu0 0.0
    %942 = vmatprep.subr.mxu0 0.0
    %943 = vmatpush1.xpose.msra.mxu0 0.0
    %944 = vmatprep.subr.mxu0 0.0
    %945 = vmatpush1.xpose.msra.mxu0 0.0
    %946 = vmatprep.subr.mxu0 0.0
    %947 = vmatpush1.xpose.msra.mxu0 0.0
    %948 = vmatprep.subr.mxu0 0.0
    %949 = vmatpush1.xpose.msra.mxu0 0.0
    %950 = vmatprep.subr.mxu0 0.0
    %951 = vmatpush1.xpose.msra.mxu0 0.0
    %952 = vmatprep.subr.mxu0 0.0
    %953 = vmatpush1.xpose.msra.mxu0 0.0
    %954 = vmatprep.subr.mxu0 0.0
    %955 = vmatpush1.xpose.msra.mxu0 0.0
    %956 = vmatprep.subr.mxu0 0.0
    %957 = vmatpush1.xpose.msra.mxu0 0.0
    %958 = vmatprep.subr.mxu0 0.0
    %959 = vmatpush1.xpose.msra.mxu0 0.0
    %960 = vmatprep.subr.mxu0 0.0
    %961 = vmatpush1.xpose.msra.mxu0 0.0
    %962 = vmatprep.subr.mxu0 0.0
    %963 = vmatpush1.xpose.msra.mxu0 0.0
    %964 = vmatprep.subr.mxu0 0.0
    %965 = vmatpush1.xpose.msra.mxu0 0.0
    %966 = vmatprep.subr.mxu0 0.0
    %967 = vmatpush1.xpose.msra.mxu0 0.0
    %968 = vmatprep.subr.mxu0 0.0
    %969 = vmatpush1.xpose.msra.mxu0 0.0
    %970 = vmatprep.mubr.f32.mxu0 0.0
    %971 = vmatmul.mubr.f32.gmra.mrb[0].mxu0 %v902
    %v972 = vpop.f32.mrb[0].mxu0
    %v973 = vadd.f32 0.0, %v972
    %v974 = vpop.f32.mrb[0].mxu0
    %975 = vdwg.mxu0
    %v976 = vsel %vm34, %v114, 0
    %v978 = vsel %vm34, %v199, 0
    %980 = vmatprep.subr.mxu0 0.0
    %981 = vmatpush1.xpose.msra.mxu0 %v978
    %982 = vmatprep.subr.mxu0 0.0
    %983 = vmatpush1.xpose.msra.mxu0 0.0
    %984 = vmatprep.subr.mxu0 0.0
    %985 = vmatpush1.xpose.msra.mxu0 0.0
    %986 = vmatprep.subr.mxu0 0.0
    %987 = vmatpush1.xpose.msra.mxu0 0.0
    %988 = vmatprep.subr.mxu0 0.0
    %989 = vmatpush1.xpose.msra.mxu0 0.0
    %990 = vmatprep.subr.mxu0 0.0
    %991 = vmatpush1.xpose.msra.mxu0 0.0
    %992 = vmatprep.subr.mxu0 0.0
    %993 = vmatpush1.xpose.msra.mxu0 0.0
    %994 = vmatprep.subr.mxu0 0.0
    %995 = vmatpush1.xpose.msra.mxu0 0.0
    %996 = vmatprep.subr.mxu0 0.0
    %997 = vmatpush1.xpose.msra.mxu0 0.0
    %998 = vmatprep.subr.mxu0 0.0
    %999 = vmatpush1.xpose.msra.mxu0 0.0
    %1000 = vmatprep.subr.mxu0 0.0
    %1001 = vmatpush1.xpose.msra.mxu0 0.0
    %1002 = vmatprep.subr.mxu0 0.0
    %1003 = vmatpush1.xpose.msra.mxu0 0.0
    %1004 = vmatprep.subr.mxu0 0.0
    %1005 = vmatpush1.xpose.msra.mxu0 0.0
    %1006 = vmatprep.subr.mxu0 0.0
    %1007 = vmatpush1.xpose.msra.mxu0 0.0
    %1008 = vmatprep.subr.mxu0 0.0
    %1009 = vmatpush1.xpose.msra.mxu0 0.0
    %1010 = vmatprep.subr.mxu0 0.0
    %1011 = vmatpush1.xpose.msra.mxu0 0.0
    %1012 = vmatprep.subr.mxu0 0.0
    %1013 = vmatpush1.xpose.msra.mxu0 0.0
    %1014 = vmatprep.subr.mxu0 0.0
    %1015 = vmatpush1.xpose.msra.mxu0 0.0
    %1016 = vmatprep.subr.mxu0 0.0
    %1017 = vmatpush1.xpose.msra.mxu0 0.0
    %1018 = vmatprep.subr.mxu0 0.0
    %1019 = vmatpush1.xpose.msra.mxu0 0.0
    %1020 = vmatprep.subr.mxu0 0.0
    %1021 = vmatpush1.xpose.msra.mxu0 0.0
    %1022 = vmatprep.subr.mxu0 0.0
    %1023 = vmatpush1.xpose.msra.mxu0 0.0
    %1024 = vmatprep.subr.mxu0 0.0
    %1025 = vmatpush1.xpose.msra.mxu0 0.0
    %1026 = vmatprep.subr.mxu0 0.0
    %1027 = vmatpush1.xpose.msra.mxu0 0.0
    %1028 = vmatprep.subr.mxu0 0.0
    %1029 = vmatpush1.xpose.msra.mxu0 0.0
    %1030 = vmatprep.subr.mxu0 0.0
    %1031 = vmatpush1.xpose.msra.mxu0 0.0
    %1032 = vmatprep.subr.mxu0 0.0
    %1033 = vmatpush1.xpose.msra.mxu0 0.0
    %1034 = vmatprep.subr.mxu0 0.0
    %1035 = vmatpush1.xpose.msra.mxu0 0.0
    %1036 = vmatprep.subr.mxu0 0.0
    %1037 = vmatpush1.xpose.msra.mxu0 0.0
    %1038 = vmatprep.subr.mxu0 0.0
    %1039 = vmatpush1.xpose.msra.mxu0 0.0
    %1040 = vmatprep.subr.mxu0 0.0
    %1041 = vmatpush1.xpose.msra.mxu0 0.0
    %1042 = vmatprep.subr.mxu0 0.0
    %1043 = vmatpush1.xpose.msra.mxu0 0.0
    %1044 = vmatprep.mubr.f32.mxu0 0.0
    %1045 = vmatmul.mubr.f32.gmra.mrb[0].mxu0 %v976
    %v1046 = vpop.f32.mrb[0].mxu0
    %v1047 = vadd.f32 0.0, %v1046
    %v1048 = vpop.f32.mrb[0].mxu0
    %1049 = vdwg.mxu0
    %v1050 = vsel %vm34, %v304, 0
    %v1052 = vsel %vm34, %v332, 0
    %1054 = vmatprep.subr.mxu0 0.0
    %1055 = vmatpush1.xpose.msra.mxu0 %v1052
    %1056 = vmatprep.subr.mxu0 0.0
    %1057 = vmatpush1.xpose.msra.mxu0 0.0
    %1058 = vmatprep.subr.mxu0 0.0
    %1059 = vmatpush1.xpose.msra.mxu0 0.0
    %1060 = vmatprep.subr.mxu0 0.0
    %1061 = vmatpush1.xpose.msra.mxu0 0.0
    %1062 = vmatprep.subr.mxu0 0.0
    %1063 = vmatpush1.xpose.msra.mxu0 0.0
    %1064 = vmatprep.subr.mxu0 0.0
    %1065 = vmatpush1.xpose.msra.mxu0 0.0
    %1066 = vmatprep.subr.mxu0 0.0
    %1067 = vmatpush1.xpose.msra.mxu0 0.0
    %1068 = vmatprep.subr.mxu0 0.0
    %1069 = vmatpush1.xpose.msra.mxu0 0.0
    %1070 = vmatprep.subr.mxu0 0.0
    %1071 = vmatpush1.xpose.msra.mxu0 0.0
    %1072 = vmatprep.subr.mxu0 0.0
    %1073 = vmatpush1.xpose.msra.mxu0 0.0
    %1074 = vmatprep.subr.mxu0 0.0
    %1075 = vmatpush1.xpose.msra.mxu0 0.0
    %1076 = vmatprep.subr.mxu0 0.0
    %1077 = vmatpush1.xpose.msra.mxu0 0.0
    %1078 = vmatprep.subr.mxu0 0.0
    %1079 = vmatpush1.xpose.msra.mxu0 0.0
    %1080 = vmatprep.subr.mxu0 0.0
    %1081 = vmatpush1.xpose.msra.mxu0 0.0
    %1082 = vmatprep.subr.mxu0 0.0
    %1083 = vmatpush1.xpose.msra.mxu0 0.0
    %1084 = vmatprep.subr.mxu0 0.0
    %1085 = vmatpush1.xpose.msra.mxu0 0.0
    %1086 = vmatprep.subr.mxu0 0.0
    %1087 = vmatpush1.xpose.msra.mxu0 0.0
    %1088 = vmatprep.subr.mxu0 0.0
    %1089 = vmatpush1.xpose.msra.mxu0 0.0
    %1090 = vmatprep.subr.mxu0 0.0
    %1091 = vmatpush1.xpose.msra.mxu0 0.0
    %1092 = vmatprep.subr.mxu0 0.0
    %1093 = vmatpush1.xpose.msra.mxu0 0.0
    %1094 = vmatprep.subr.mxu0 0.0
    %1095 = vmatpush1.xpose.msra.mxu0 0.0
    %1096 = vmatprep.subr.mxu0 0.0
    %1097 = vmatpush1.xpose.msra.mxu0 0.0
    %1098 = vmatprep.subr.mxu0 0.0
    %1099 = vmatpush1.xpose.msra.mxu0 0.0
    %1100 = vmatprep.subr.mxu0 0.0
    %1101 = vmatpush1.xpose.msra.mxu0 0.0
    %1102 = vmatprep.subr.mxu0 0.0
    %1103 = vmatpush1.xpose.msra.mxu0 0.0
    %1104 = vmatprep.subr.mxu0 0.0
    %1105 = vmatpush1.xpose.msra.mxu0 0.0
    %1106 = vmatprep.subr.mxu0 0.0
    %1107 = vmatpush1.xpose.msra.mxu0 0.0
    %1108 = vmatprep.subr.mxu0 0.0
    %1109 = vmatpush1.xpose.msra.mxu0 0.0
    %1110 = vmatprep.subr.mxu0 0.0
    %1111 = vmatpush1.xpose.msra.mxu0 0.0
    %1112 = vmatprep.subr.mxu0 0.0
    %1113 = vmatpush1.xpose.msra.mxu0 0.0
    %1114 = vmatprep.subr.mxu0 0.0
    %1115 = vmatpush1.xpose.msra.mxu0 0.0
    %1116 = vmatprep.subr.mxu0 0.0
    %1117 = vmatpush1.xpose.msra.mxu0 0.0
    %1118 = vmatprep.mubr.f32.mxu0 0.0
    %1119 = vmatmul.mubr.f32.gmra.mrb[0].mxu0 %v1050
    %v1120 = vpop.f32.mrb[0].mxu0
    %v1121 = vadd.f32 0.0, %v1120
    %v1122 = vpop.f32.mrb[0].mxu0
    %1123 = vdwg.mxu0
    %v1124 = vsel %vm34, %v306, 0
    %v1126 = vsel %vm34, %v334, 0
    %1128 = vmatprep.subr.mxu0 0.0
    %1129 = vmatpush1.xpose.msra.mxu0 %v1126
    %1130 = vmatprep.subr.mxu0 0.0
    %1131 = vmatpush1.xpose.msra.mxu0 0.0
    %1132 = vmatprep.subr.mxu0 0.0
    %1133 = vmatpush1.xpose.msra.mxu0 0.0
    %1134 = vmatprep.subr.mxu0 0.0
    %1135 = vmatpush1.xpose.msra.mxu0 0.0
    %1136 = vmatprep.subr.mxu0 0.0
    %1137 = vmatpush1.xpose.msra.mxu0 0.0
    %1138 = vmatprep.subr.mxu0 0.0
    %1139 = vmatpush1.xpose.msra.mxu0 0.0
    %1140 = vmatprep.subr.mxu0 0.0
    %1141 = vmatpush1.xpose.msra.mxu0 0.0
    %1142 = vmatprep.subr.mxu0 0.0
    %1143 = vmatpush1.xpose.msra.mxu0 0.0
    %1144 = vmatprep.subr.mxu0 0.0
    %1145 = vmatpush1.xpose.msra.mxu0 0.0
    %1146 = vmatprep.subr.mxu0 0.0
    %1147 = vmatpush1.xpose.msra.mxu0 0.0
    %1148 = vmatprep.subr.mxu0 0.0
    %1149 = vmatpush1.xpose.msra.mxu0 0.0
    %1150 = vmatprep.subr.mxu0 0.0
    %1151 = vmatpush1.xpose.msra.mxu0 0.0
    %1152 = vmatprep.subr.mxu0 0.0
    %1153 = vmatpush1.xpose.msra.mxu0 0.0
    %1154 = vmatprep.subr.mxu0 0.0
    %1155 = vmatpush1.xpose.msra.mxu0 0.0
    %1156 = vmatprep.subr.mxu0 0.0
    %1157 = vmatpush1.xpose.msra.mxu0 0.0
    %1158 = vmatprep.subr.mxu0 0.0
    %1159 = vmatpush1.xpose.msra.mxu0 0.0
    %1160 = vmatprep.subr.mxu0 0.0
    %1161 = vmatpush1.xpose.msra.mxu0 0.0
    %1162 = vmatprep.subr.mxu0 0.0
    %1163 = vmatpush1.xpose.msra.mxu0 0.0
    %1164 = vmatprep.subr.mxu0 0.0
    %1165 = vmatpush1.xpose.msra.mxu0 0.0
    %1166 = vmatprep.subr.mxu0 0.0
    %1167 = vmatpush1.xpose.msra.mxu0 0.0
    %1168 = vmatprep.subr.mxu0 0.0
    %1169 = vmatpush1.xpose.msra.mxu0 0.0
    %1170 = vmatprep.subr.mxu0 0.0
    %1171 = vmatpush1.xpose.msra.mxu0 0.0
    %1172 = vmatprep.subr.mxu0 0.0
    %1173 = vmatpush1.xpose.msra.mxu0 0.0
    %1174 = vmatprep.subr.mxu0 0.0
    %1175 = vmatpush1.xpose.msra.mxu0 0.0
    %1176 = vmatprep.subr.mxu0 0.0
    %1177 = vmatpush1.xpose.msra.mxu0 0.0
    %1178 = vmatprep.subr.mxu0 0.0
    %1179 = vmatpush1.xpose.msra.mxu0 0.0
    %1180 = vmatprep.subr.mxu0 0.0
    %1181 = vmatpush1.xpose.msra.mxu0 0.0
    %1182 = vmatprep.subr.mxu0 0.0
    %1183 = vmatpush1.xpose.msra.mxu0 0.0
    %1184 = vmatprep.subr.mxu0 0.0
    %1185 = vmatpush1.xpose.msra.mxu0 0.0
    %1186 = vmatprep.subr.mxu0 0.0
    %1187 = vmatpush1.xpose.msra.mxu0 0.0
    %1188 = vmatprep.subr.mxu0 0.0
    %1189 = vmatpush1.xpose.msra.mxu0 0.0
    %1190 = vmatprep.subr.mxu0 0.0
    %1191 = vmatpush1.xpose.msra.mxu0 0.0
    %1192 = vmatprep.mubr.f32.mxu0 0.0
    %1193 = vmatmul.mubr.f32.gmra.mrb[0].mxu0 %v1124
    %v1194 = vpop.f32.mrb[0].mxu0
    %v1195 = vadd.f32 0.0, %v1194
    %v1196 = vpop.f32.mrb[0].mxu0
    %1197 = vdwg.mxu0
    %v1198 = vsel %vm34, %v308, 0
    %v1200 = vsel %vm34, %v336, 0
    %1202 = vmatprep.subr.mxu0 0.0
    %1203 = vmatpush1.xpose.msra.mxu0 %v1200
    %1204 = vmatprep.subr.mxu0 0.0
    %1205 = vmatpush1.xpose.msra.mxu0 0.0
    %1206 = vmatprep.subr.mxu0 0.0
    %1207 = vmatpush1.xpose.msra.mxu0 0.0
    %1208 = vmatprep.subr.mxu0 0.0
    %1209 = vmatpush1.xpose.msra.mxu0 0.0
    %1210 = vmatprep.subr.mxu0 0.0
    %1211 = vmatpush1.xpose.msra.mxu0 0.0
    %1212 = vmatprep.subr.mxu0 0.0
    %1213 = vmatpush1.xpose.msra.mxu0 0.0
    %1214 = vmatprep.subr.mxu0 0.0
    %1215 = vmatpush1.xpose.msra.mxu0 0.0
    %1216 = vmatprep.subr.mxu0 0.0
    %1217 = vmatpush1.xpose.msra.mxu0 0.0
    %1218 = vmatprep.subr.mxu0 0.0
    %1219 = vmatpush1.xpose.msra.mxu0 0.0
    %1220 = vmatprep.subr.mxu0 0.0
    %1221 = vmatpush1.xpose.msra.mxu0 0.0
    %1222 = vmatprep.subr.mxu0 0.0
    %1223 = vmatpush1.xpose.msra.mxu0 0.0
    %1224 = vmatprep.subr.mxu0 0.0
    %1225 = vmatpush1.xpose.msra.mxu0 0.0
    %1226 = vmatprep.subr.mxu0 0.0
    %1227 = vmatpush1.xpose.msra.mxu0 0.0
    %1228 = vmatprep.subr.mxu0 0.0
    %1229 = vmatpush1.xpose.msra.mxu0 0.0
    %1230 = vmatprep.subr.mxu0 0.0
    %1231 = vmatpush1.xpose.msra.mxu0 0.0
    %1232 = vmatprep.subr.mxu0 0.0
    %1233 = vmatpush1.xpose.msra.mxu0 0.0
    %1234 = vmatprep.subr.mxu0 0.0
    %1235 = vmatpush1.xpose.msra.mxu0 0.0
    %1236 = vmatprep.subr.mxu0 0.0
    %1237 = vmatpush1.xpose.msra.mxu0 0.0
    %1238 = vmatprep.subr.mxu0 0.0
    %1239 = vmatpush1.xpose.msra.mxu0 0.0
    %1240 = vmatprep.subr.mxu0 0.0
    %1241 = vmatpush1.xpose.msra.mxu0 0.0
    %1242 = vmatprep.subr.mxu0 0.0
    %1243 = vmatpush1.xpose.msra.mxu0 0.0
    %1244 = vmatprep.subr.mxu0 0.0
    %1245 = vmatpush1.xpose.msra.mxu0 0.0
    %1246 = vmatprep.subr.mxu0 0.0
    %1247 = vmatpush1.xpose.msra.mxu0 0.0
    %1248 = vmatprep.subr.mxu0 0.0
    %1249 = vmatpush1.xpose.msra.mxu0 0.0
    %1250 = vmatprep.subr.mxu0 0.0
    %1251 = vmatpush1.xpose.msra.mxu0 0.0
    %1252 = vmatprep.subr.mxu0 0.0
    %1253 = vmatpush1.xpose.msra.mxu0 0.0
    %1254 = vmatprep.subr.mxu0 0.0
    %1255 = vmatpush1.xpose.msra.mxu0 0.0
    %1256 = vmatprep.subr.mxu0 0.0
    %1257 = vmatpush1.xpose.msra.mxu0 0.0
    %1258 = vmatprep.subr.mxu0 0.0
    %1259 = vmatpush1.xpose.msra.mxu0 0.0
    %1260 = vmatprep.subr.mxu0 0.0
    %1261 = vmatpush1.xpose.msra.mxu0 0.0
    %1262 = vmatprep.subr.mxu0 0.0
    %1263 = vmatpush1.xpose.msra.mxu0 0.0
    %1264 = vmatprep.subr.mxu0 0.0
    %1265 = vmatpush1.xpose.msra.mxu0 0.0
    %1266 = vmatprep.mubr.f32.mxu0 0.0
    %1267 = vmatmul.mubr.f32.gmra.mrb[0].mxu0 %v1198
    %v1268 = vpop.f32.mrb[0].mxu0
    %v1269 = vadd.f32 0.0, %v1268
    %v1270 = vpop.f32.mrb[0].mxu0
    %1271 = vdwg.mxu0
    %v1272 = vsel %vm34, %v116, 0
    %v1274 = vsel %vm34, %v201, 0
    %1276 = vmatprep.subr.mxu0 0.0
    %1277 = vmatpush1.xpose.msra.mxu0 %v1274
    %1278 = vmatprep.subr.mxu0 0.0
    %1279 = vmatpush1.xpose.msra.mxu0 0.0
    %1280 = vmatprep.subr.mxu0 0.0
    %1281 = vmatpush1.xpose.msra.mxu0 0.0
    %1282 = vmatprep.subr.mxu0 0.0
    %1283 = vmatpush1.xpose.msra.mxu0 0.0
    %1284 = vmatprep.subr.mxu0 0.0
    %1285 = vmatpush1.xpose.msra.mxu0 0.0
    %1286 = vmatprep.subr.mxu0 0.0
    %1287 = vmatpush1.xpose.msra.mxu0 0.0
    %1288 = vmatprep.subr.mxu0 0.0
    %1289 = vmatpush1.xpose.msra.mxu0 0.0
    %1290 = vmatprep.subr.mxu0 0.0
    %1291 = vmatpush1.xpose.msra.mxu0 0.0
    %1292 = vmatprep.subr.mxu0 0.0
    %1293 = vmatpush1.xpose.msra.mxu0 0.0
    %1294 = vmatprep.subr.mxu0 0.0
    %1295 = vmatpush1.xpose.msra.mxu0 0.0
    %1296 = vmatprep.subr.mxu0 0.0
    %1297 = vmatpush1.xpose.msra.mxu0 0.0
    %1298 = vmatprep.subr.mxu0 0.0
    %1299 = vmatpush1.xpose.msra.mxu0 0.0
    %1300 = vmatprep.subr.mxu0 0.0
    %1301 = vmatpush1.xpose.msra.mxu0 0.0
    %1302 = vmatprep.subr.mxu0 0.0
    %1303 = vmatpush1.xpose.msra.mxu0 0.0
    %1304 = vmatprep.subr.mxu0 0.0
    %1305 = vmatpush1.xpose.msra.mxu0 0.0
    %1306 = vmatprep.subr.mxu0 0.0
    %1307 = vmatpush1.xpose.msra.mxu0 0.0
    %1308 = vmatprep.subr.mxu0 0.0
    %1309 = vmatpush1.xpose.msra.mxu0 0.0
    %1310 = vmatprep.subr.mxu0 0.0
    %1311 = vmatpush1.xpose.msra.mxu0 0.0
    %1312 = vmatprep.subr.mxu0 0.0
    %1313 = vmatpush1.xpose.msra.mxu0 0.0
    %1314 = vmatprep.subr.mxu0 0.0
    %1315 = vmatpush1.xpose.msra.mxu0 0.0
    %1316 = vmatprep.subr.mxu0 0.0
    %1317 = vmatpush1.xpose.msra.mxu0 0.0
    %1318 = vmatprep.subr.mxu0 0.0
    %1319 = vmatpush1.xpose.msra.mxu0 0.0
    %1320 = vmatprep.subr.mxu0 0.0
    %1321 = vmatpush1.xpose.msra.mxu0 0.0
    %1322 = vmatprep.subr.mxu0 0.0
    %1323 = vmatpush1.xpose.msra.mxu0 0.0
    %1324 = vmatprep.subr.mxu0 0.0
    %1325 = vmatpush1.xpose.msra.mxu0 0.0
    %1326 = vmatprep.subr.mxu0 0.0
    %1327 = vmatpush1.xpose.msra.mxu0 0.0
    %1328 = vmatprep.subr.mxu0 0.0
    %1329 = vmatpush1.xpose.msra.mxu0 0.0
    %1330 = vmatprep.subr.mxu0 0.0
    %1331 = vmatpush1.xpose.msra.mxu0 0.0
    %1332 = vmatprep.subr.mxu0 0.0
    %1333 = vmatpush1.xpose.msra.mxu0 0.0
    %1334 = vmatprep.subr.mxu0 0.0
    %1335 = vmatpush1.xpose.msra.mxu0 0.0
    %1336 = vmatprep.subr.mxu0 0.0
    %1337 = vmatpush1.xpose.msra.mxu0 0.0
    %1338 = vmatprep.subr.mxu0 0.0
    %1339 = vmatpush1.xpose.msra.mxu0 0.0
    %1340 = vmatprep.mubr.f32.mxu0 0.0
    %1341 = vmatmul.mubr.f32.gmra.mrb[0].mxu0 %v1272
    %v1342 = vpop.f32.mrb[0].mxu0
    %v1343 = vadd.f32 0.0, %v1342
    %v1344 = vpop.f32.mrb[0].mxu0
    %1345 = vdwg.mxu0
    %v1346 = vsel %vm34, %v311, 0
    %v1348 = vsel %vm34, %v339, 0
    %1350 = vmatprep.subr.mxu0 0.0
    %1351 = vmatpush1.xpose.msra.mxu0 %v1348
    %1352 = vmatprep.subr.mxu0 0.0
    %1353 = vmatpush1.xpose.msra.mxu0 0.0
    %1354 = vmatprep.subr.mxu0 0.0
    %1355 = vmatpush1.xpose.msra.mxu0 0.0
    %1356 = vmatprep.subr.mxu0 0.0
    %1357 = vmatpush1.xpose.msra.mxu0 0.0
    %1358 = vmatprep.subr.mxu0 0.0
    %1359 = vmatpush1.xpose.msra.mxu0 0.0
    %1360 = vmatprep.subr.mxu0 0.0
    %1361 = vmatpush1.xpose.msra.mxu0 0.0
    %1362 = vmatprep.subr.mxu0 0.0
    %1363 = vmatpush1.xpose.msra.mxu0 0.0
    %1364 = vmatprep.subr.mxu0 0.0
    %1365 = vmatpush1.xpose.msra.mxu0 0.0
    %1366 = vmatprep.subr.mxu0 0.0
    %1367 = vmatpush1.xpose.msra.mxu0 0.0
    %1368 = vmatprep.subr.mxu0 0.0
    %1369 = vmatpush1.xpose.msra.mxu0 0.0
    %1370 = vmatprep.subr.mxu0 0.0
    %1371 = vmatpush1.xpose.msra.mxu0 0.0
    %1372 = vmatprep.subr.mxu0 0.0
    %1373 = vmatpush1.xpose.msra.mxu0 0.0
    %1374 = vmatprep.subr.mxu0 0.0
    %1375 = vmatpush1.xpose.msra.mxu0 0.0
    %1376 = vmatprep.subr.mxu0 0.0
    %1377 = vmatpush1.xpose.msra.mxu0 0.0
    %1378 = vmatprep.subr.mxu0 0.0
    %1379 = vmatpush1.xpose.msra.mxu0 0.0
    %1380 = vmatprep.subr.mxu0 0.0
    %1381 = vmatpush1.xpose.msra.mxu0 0.0
    %1382 = vmatprep.subr.mxu0 0.0
    %1383 = vmatpush1.xpose.msra.mxu0 0.0
    %1384 = vmatprep.subr.mxu0 0.0
    %1385 = vmatpush1.xpose.msra.mxu0 0.0
    %1386 = vmatprep.subr.mxu0 0.0
    %1387 = vmatpush1.xpose.msra.mxu0 0.0
    %1388 = vmatprep.subr.mxu0 0.0
    %1389 = vmatpush1.xpose.msra.mxu0 0.0
    %1390 = vmatprep.subr.mxu0 0.0
    %1391 = vmatpush1.xpose.msra.mxu0 0.0
    %1392 = vmatprep.subr.mxu0 0.0
    %1393 = vmatpush1.xpose.msra.mxu0 0.0
    %1394 = vmatprep.subr.mxu0 0.0
    %1395 = vmatpush1.xpose.msra.mxu0 0.0
    %1396 = vmatprep.subr.mxu0 0.0
    %1397 = vmatpush1.xpose.msra.mxu0 0.0
    %1398 = vmatprep.subr.mxu0 0.0
    %1399 = vmatpush1.xpose.msra.mxu0 0.0
    %1400 = vmatprep.subr.mxu0 0.0
    %1401 = vmatpush1.xpose.msra.mxu0 0.0
    %1402 = vmatprep.subr.mxu0 0.0
    %1403 = vmatpush1.xpose.msra.mxu0 0.0
    %1404 = vmatprep.subr.mxu0 0.0
    %1405 = vmatpush1.xpose.msra.mxu0 0.0
    %1406 = vmatprep.subr.mxu0 0.0
    %1407 = vmatpush1.xpose.msra.mxu0 0.0
    %1408 = vmatprep.subr.mxu0 0.0
    %1409 = vmatpush1.xpose.msra.mxu0 0.0
    %1410 = vmatprep.subr.mxu0 0.0
    %1411 = vmatpush1.xpose.msra.mxu0 0.0
    %1412 = vmatprep.subr.mxu0 0.0
    %1413 = vmatpush1.xpose.msra.mxu0 0.0
    %1414 = vmatprep.mubr.f32.mxu0 0.0
    %1415 = vmatmul.mubr.f32.gmra.mrb[0].mxu0 %v1346
    %v1416 = vpop.f32.mrb[0].mxu0
    %v1417 = vadd.f32 0.0, %v1416
    %v1418 = vpop.f32.mrb[0].mxu0
    %1419 = vdwg.mxu0
    %v1420 = vsel %vm34, %v313, 0
    %v1422 = vsel %vm34, %v341, 0
    %1424 = vmatprep.subr.mxu0 0.0
    %1425 = vmatpush1.xpose.msra.mxu0 %v1422
    %1426 = vmatprep.subr.mxu0 0.0
    %1427 = vmatpush1.xpose.msra.mxu0 0.0
    %1428 = vmatprep.subr.mxu0 0.0
    %1429 = vmatpush1.xpose.msra.mxu0 0.0
    %1430 = vmatprep.subr.mxu0 0.0
    %1431 = vmatpush1.xpose.msra.mxu0 0.0
    %1432 = vmatprep.subr.mxu0 0.0
    %1433 = vmatpush1.xpose.msra.mxu0 0.0
    %1434 = vmatprep.subr.mxu0 0.0
    %1435 = vmatpush1.xpose.msra.mxu0 0.0
    %1436 = vmatprep.subr.mxu0 0.0
    %1437 = vmatpush1.xpose.msra.mxu0 0.0
    %1438 = vmatprep.subr.mxu0 0.0
    %1439 = vmatpush1.xpose.msra.mxu0 0.0
    %1440 = vmatprep.subr.mxu0 0.0
    %1441 = vmatpush1.xpose.msra.mxu0 0.0
    %1442 = vmatprep.subr.mxu0 0.0
    %1443 = vmatpush1.xpose.msra.mxu0 0.0
    %1444 = vmatprep.subr.mxu0 0.0
    %1445 = vmatpush1.xpose.msra.mxu0 0.0
    %1446 = vmatprep.subr.mxu0 0.0
    %1447 = vmatpush1.xpose.msra.mxu0 0.0
    %1448 = vmatprep.subr.mxu0 0.0
    %1449 = vmatpush1.xpose.msra.mxu0 0.0
    %1450 = vmatprep.subr.mxu0 0.0
    %1451 = vmatpush1.xpose.msra.mxu0 0.0
    %1452 = vmatprep.subr.mxu0 0.0
    %1453 = vmatpush1.xpose.msra.mxu0 0.0
    %1454 = vmatprep.subr.mxu0 0.0
    %1455 = vmatpush1.xpose.msra.mxu0 0.0
    %1456 = vmatprep.subr.mxu0 0.0
    %1457 = vmatpush1.xpose.msra.mxu0 0.0
    %1458 = vmatprep.subr.mxu0 0.0
    %1459 = vmatpush1.xpose.msra.mxu0 0.0
    %1460 = vmatprep.subr.mxu0 0.0
    %1461 = vmatpush1.xpose.msra.mxu0 0.0
    %1462 = vmatprep.subr.mxu0 0.0
    %1463 = vmatpush1.xpose.msra.mxu0 0.0
    %1464 = vmatprep.subr.mxu0 0.0
    %1465 = vmatpush1.xpose.msra.mxu0 0.0
    %1466 = vmatprep.subr.mxu0 0.0
    %1467 = vmatpush1.xpose.msra.mxu0 0.0
    %1468 = vmatprep.subr.mxu0 0.0
    %1469 = vmatpush1.xpose.msra.mxu0 0.0
    %1470 = vmatprep.subr.mxu0 0.0
    %1471 = vmatpush1.xpose.msra.mxu0 0.0
    %1472 = vmatprep.subr.mxu0 0.0
    %1473 = vmatpush1.xpose.msra.mxu0 0.0
    %1474 = vmatprep.subr.mxu0 0.0
    %1475 = vmatpush1.xpose.msra.mxu0 0.0
    %1476 = vmatprep.subr.mxu0 0.0
    %1477 = vmatpush1.xpose.msra.mxu0 0.0
    %1478 = vmatprep.subr.mxu0 0.0
    %1479 = vmatpush1.xpose.msra.mxu0 0.0
    %1480 = vmatprep.subr.mxu0 0.0
    %1481 = vmatpush1.xpose.msra.mxu0 0.0
    %1482 = vmatprep.subr.mxu0 0.0
    %1483 = vmatpush1.xpose.msra.mxu0 0.0
    %1484 = vmatprep.subr.mxu0 0.0
    %1485 = vmatpush1.xpose.msra.mxu0 0.0
    %1486 = vmatprep.subr.mxu0 0.0
    %1487 = vmatpush1.xpose.msra.mxu0 0.0
    %1488 = vmatprep.mubr.f32.mxu0 0.0
    %1489 = vmatmul.mubr.f32.gmra.mrb[0].mxu0 %v1420
    %v1490 = vpop.f32.mrb[0].mxu0
    %v1491 = vadd.f32 0.0, %v1490
    %v1492 = vpop.f32.mrb[0].mxu0
    %1493 = vdwg.mxu0
    %v1494 = vsel %vm34, %v315, 0
    %v1496 = vsel %vm34, %v343, 0
    %1498 = vmatprep.subr.mxu0 0.0
    %1499 = vmatpush1.xpose.msra.mxu0 %v1496
    %1500 = vmatprep.subr.mxu0 0.0
    %1501 = vmatpush1.xpose.msra.mxu0 0.0
    %1502 = vmatprep.subr.mxu0 0.0
    %1503 = vmatpush1.xpose.msra.mxu0 0.0
    %1504 = vmatprep.subr.mxu0 0.0
    %1505 = vmatpush1.xpose.msra.mxu0 0.0
    %1506 = vmatprep.subr.mxu0 0.0
    %1507 = vmatpush1.xpose.msra.mxu0 0.0
    %1508 = vmatprep.subr.mxu0 0.0
    %1509 = vmatpush1.xpose.msra.mxu0 0.0
    %1510 = vmatprep.subr.mxu0 0.0
    %1511 = vmatpush1.xpose.msra.mxu0 0.0
    %1512 = vmatprep.subr.mxu0 0.0
    %1513 = vmatpush1.xpose.msra.mxu0 0.0
    %1514 = vmatprep.subr.mxu0 0.0
    %1515 = vmatpush1.xpose.msra.mxu0 0.0
    %1516 = vmatprep.subr.mxu0 0.0
    %1517 = vmatpush1.xpose.msra.mxu0 0.0
    %1518 = vmatprep.subr.mxu0 0.0
    %1519 = vmatpush1.xpose.msra.mxu0 0.0
    %1520 = vmatprep.subr.mxu0 0.0
    %1521 = vmatpush1.xpose.msra.mxu0 0.0
    %1522 = vmatprep.subr.mxu0 0.0
    %1523 = vmatpush1.xpose.msra.mxu0 0.0
    %1524 = vmatprep.subr.mxu0 0.0
    %1525 = vmatpush1.xpose.msra.mxu0 0.0
    %1526 = vmatprep.subr.mxu0 0.0
    %1527 = vmatpush1.xpose.msra.mxu0 0.0
    %1528 = vmatprep.subr.mxu0 0.0
    %1529 = vmatpush1.xpose.msra.mxu0 0.0
    %1530 = vmatprep.subr.mxu0 0.0
    %1531 = vmatpush1.xpose.msra.mxu0 0.0
    %1532 = vmatprep.subr.mxu0 0.0
    %1533 = vmatpush1.xpose.msra.mxu0 0.0
    %1534 = vmatprep.subr.mxu0 0.0
    %1535 = vmatpush1.xpose.msra.mxu0 0.0
    %1536 = vmatprep.subr.mxu0 0.0
    %1537 = vmatpush1.xpose.msra.mxu0 0.0
    %1538 = vmatprep.subr.mxu0 0.0
    %1539 = vmatpush1.xpose.msra.mxu0 0.0
    %1540 = vmatprep.subr.mxu0 0.0
    %1541 = vmatpush1.xpose.msra.mxu0 0.0
    %1542 = vmatprep.subr.mxu0 0.0
    %1543 = vmatpush1.xpose.msra.mxu0 0.0
    %1544 = vmatprep.subr.mxu0 0.0
    %1545 = vmatpush1.xpose.msra.mxu0 0.0
    %1546 = vmatprep.subr.mxu0 0.0
    %1547 = vmatpush1.xpose.msra.mxu0 0.0
    %1548 = vmatprep.subr.mxu0 0.0
    %1549 = vmatpush1.xpose.msra.mxu0 0.0
    %1550 = vmatprep.subr.mxu0 0.0
    %1551 = vmatpush1.xpose.msra.mxu0 0.0
    %1552 = vmatprep.subr.mxu0 0.0
    %1553 = vmatpush1.xpose.msra.mxu0 0.0
    %1554 = vmatprep.subr.mxu0 0.0
    %1555 = vmatpush1.xpose.msra.mxu0 0.0
    %1556 = vmatprep.subr.mxu0 0.0
    %1557 = vmatpush1.xpose.msra.mxu0 0.0
    %1558 = vmatprep.subr.mxu0 0.0
    %1559 = vmatpush1.xpose.msra.mxu0 0.0
    %1560 = vmatprep.subr.mxu0 0.0
    %1561 = vmatpush1.xpose.msra.mxu0 0.0
    %1562 = vmatprep.mubr.f32.mxu0 0.0
    %1563 = vmatmul.mubr.f32.gmra.mrb[0].mxu0 %v1494
    %v1564 = vpop.f32.mrb[0].mxu0
    %v1565 = vadd.f32 0.0, %v1564
    %v1566 = vpop.f32.mrb[0].mxu0
    %1567 = vdwg.mxu0
    %vm1568 = vcmask 64512
    %v1569 = vsel %vm1568, %v455, -inf
    %1570 = vmax.xlane.f32.xlu0 %v1569
    %v1571 = vpop.xlane.xlu0 %1570
    %v1572 = vsel %vm1568, %v529, -inf
    %1573 = vmax.xlane.f32.xlu0 %v1572
    %v1574 = vpop.xlane.xlu0 %1573
    %v1575 = vsel %vm1568, %v603, -inf
    %1576 = vmax.xlane.f32.xlu0 %v1575
    %v1577 = vpop.xlane.xlu0 %1576
    %v1578 = vsel %vm1568, %v677, -inf
    %1579 = vmax.xlane.f32.xlu0 %v1578
    %v1580 = vpop.xlane.xlu0 %1579
    %v1581 = vsel %vm1568, %v751, -inf
    %1582 = vmax.xlane.f32.xlu0 %v1581
    %v1583 = vpop.xlane.xlu0 %1582
    %v1584 = vsel %vm1568, %v825, -inf
    %1585 = vmax.xlane.f32.xlu0 %v1584
    %v1586 = vpop.xlane.xlu0 %1585
    %v1587 = vsel %vm1568, %v899, -inf
    %1588 = vmax.xlane.f32.xlu0 %v1587
    %v1589 = vpop.xlane.xlu0 %1588
    %v1590 = vsel %vm1568, %v973, -inf
    %1591 = vmax.xlane.f32.xlu0 %v1590
    %v1592 = vpop.xlane.xlu0 %1591
    %v1593 = vsel %vm1568, %v1047, -inf
    %1594 = vmax.xlane.f32.xlu0 %v1593
    %v1595 = vpop.xlane.xlu0 %1594
    %v1596 = vsel %vm1568, %v1121, -inf
    %1597 = vmax.xlane.f32.xlu0 %v1596
    %v1598 = vpop.xlane.xlu0 %1597
    %v1599 = vsel %vm1568, %v1195, -inf
    %1600 = vmax.xlane.f32.xlu0 %v1599
    %v1601 = vpop.xlane.xlu0 %1600
    %v1602 = vsel %vm1568, %v1269, -inf
    %1603 = vmax.xlane.f32.xlu0 %v1602
    %v1604 = vpop.xlane.xlu0 %1603
    %v1605 = vsel %vm1568, %v1343, -inf
    %1606 = vmax.xlane.f32.xlu0 %v1605
    %v1607 = vpop.xlane.xlu0 %1606
    %v1608 = vsel %vm1568, %v1417, -inf
    %1609 = vmax.xlane.f32.xlu0 %v1608
    %v1610 = vpop.xlane.xlu0 %1609
    %v1611 = vsel %vm1568, %v1491, -inf
    %1612 = vmax.xlane.f32.xlu0 %v1611
    %v1613 = vpop.xlane.xlu0 %1612
    %v1614 = vsel %vm1568, %v1565, -inf
    %1615 = vmax.xlane.f32.xlu0 %v1614
    %v1616 = vpop.xlane.xlu0 %1615
    %v1617 = vsub.f32 %v455, %v1571
    %v1618 = vsub.f32 %v529, %v1574
    %v1619 = vsub.f32 %v603, %v1577
    %v1620 = vsub.f32 %v677, %v1580
    %v1621 = vsub.f32 %v751, %v1583
    %v1622 = vsub.f32 %v825, %v1586
    %v1623 = vsub.f32 %v899, %v1589
    %v1624 = vsub.f32 %v973, %v1592
    %v1625 = vsub.f32 %v1047, %v1595
    %v1626 = vsub.f32 %v1121, %v1598
    %v1627 = vsub.f32 %v1195, %v1601
    %v1628 = vsub.f32 %v1269, %v1604
    %v1629 = vsub.f32 %v1343, %v1607
    %v1630 = vsub.f32 %v1417, %v1610
    %v1631 = vsub.f32 %v1491, %v1613
    %v1632 = vsub.f32 %v1565, %v1616
    %v1633 = vmul.f32 %v1617, 1.442695
    %v1634 = vpow.pop %v1633
    %v1635 = vmul.f32 %v1618, 1.442695
    %v1636 = vpow.pop %v1635
    %v1637 = vmul.f32 %v1619, 1.442695
    %v1638 = vpow.pop %v1637
    %v1639 = vmul.f32 %v1620, 1.442695
    %v1640 = vpow.pop %v1639
    %v1641 = vmul.f32 %v1621, 1.442695
    %v1642 = vpow.pop %v1641
    %v1643 = vmul.f32 %v1622, 1.442695
    %v1644 = vpow.pop %v1643
    %v1645 = vmul.f32 %v1623, 1.442695
    %v1646 = vpow.pop %v1645
    %v1647 = vmul.f32 %v1624, 1.442695
    %v1648 = vpow.pop %v1647
    %v1649 = vmul.f32 %v1625, 1.442695
    %v1650 = vpow.pop %v1649
    %v1651 = vmul.f32 %v1626, 1.442695
    %v1652 = vpow.pop %v1651
    %v1653 = vmul.f32 %v1627, 1.442695
    %v1654 = vpow.pop %v1653
    %v1655 = vmul.f32 %v1628, 1.442695
    %v1656 = vpow.pop %v1655
    %v1657 = vmul.f32 %v1629, 1.442695
    %v1658 = vpow.pop %v1657
    %v1659 = vmul.f32 %v1630, 1.442695
    %v1660 = vpow.pop %v1659
    %v1661 = vmul.f32 %v1631, 1.442695
    %v1662 = vpow.pop %v1661
    %v1663 = vmul.f32 %v1632, 1.442695
    %v1664 = vpow.pop %v1663
    %v1665 = vsel %vm1568, %v1634, 0.0
    %1666 = vadd.xlane.f32.xlu0 %v1665
    %v1667 = vpop.xlane.xlu0 %1666
    %v1668 = vsel %vm1568, %v1636, 0.0
    %1669 = vadd.xlane.f32.xlu0 %v1668
    %v1670 = vpop.xlane.xlu0 %1669
    %v1671 = vsel %vm1568, %v1638, 0.0
    %1672 = vadd.xlane.f32.xlu0 %v1671
    %v1673 = vpop.xlane.xlu0 %1672
    %v1674 = vsel %vm1568, %v1640, 0.0
    %1675 = vadd.xlane.f32.xlu0 %v1674
    %v1676 = vpop.xlane.xlu0 %1675
    %v1677 = vsel %vm1568, %v1642, 0.0
    %1678 = vadd.xlane.f32.xlu0 %v1677
    %v1679 = vpop.xlane.xlu0 %1678
    %v1680 = vsel %vm1568, %v1644, 0.0
    %1681 = vadd.xlane.f32.xlu0 %v1680
    %v1682 = vpop.xlane.xlu0 %1681
    %v1683 = vsel %vm1568, %v1646, 0.0
    %1684 = vadd.xlane.f32.xlu0 %v1683
    %v1685 = vpop.xlane.xlu0 %1684
    %v1686 = vsel %vm1568, %v1648, 0.0
    %1687 = vadd.xlane.f32.xlu0 %v1686
    %v1688 = vpop.xlane.xlu0 %1687
    %v1689 = vsel %vm1568, %v1650, 0.0
    %1690 = vadd.xlane.f32.xlu0 %v1689
    %v1691 = vpop.xlane.xlu0 %1690
    %v1692 = vsel %vm1568, %v1652, 0.0
    %1693 = vadd.xlane.f32.xlu0 %v1692
    %v1694 = vpop.xlane.xlu0 %1693
    %v1695 = vsel %vm1568, %v1654, 0.0
    %1696 = vadd.xlane.f32.xlu0 %v1695
    %v1697 = vpop.xlane.xlu0 %1696
    %v1698 = vsel %vm1568, %v1656, 0.0
    %1699 = vadd.xlane.f32.xlu0 %v1698
    %v1700 = vpop.xlane.xlu0 %1699
    %v1701 = vsel %vm1568, %v1658, 0.0
    %1702 = vadd.xlane.f32.xlu0 %v1701
    %v1703 = vpop.xlane.xlu0 %1702
    %v1704 = vsel %vm1568, %v1660, 0.0
    %1705 = vadd.xlane.f32.xlu0 %v1704
    %v1706 = vpop.xlane.xlu0 %1705
    %v1707 = vsel %vm1568, %v1662, 0.0
    %1708 = vadd.xlane.f32.xlu0 %v1707
    %v1709 = vpop.xlane.xlu0 %1708
    %v1710 = vsel %vm1568, %v1664, 0.0
    %1711 = vadd.xlane.f32.xlu0 %v1710
    %v1712 = vpop.xlane.xlu0 %1711
    %v1713 = vrcp.pop %v1667
    %v1714 = vrcp.pop %v1670
    %v1715 = vrcp.pop %v1673
    %v1716 = vrcp.pop %v1676
    %v1717 = vrcp.pop %v1679
    %v1718 = vrcp.pop %v1682
    %v1719 = vrcp.pop %v1685
    %v1720 = vrcp.pop %v1688
    %v1721 = vrcp.pop %v1691
    %v1722 = vrcp.pop %v1694
    %v1723 = vrcp.pop %v1697
    %v1724 = vrcp.pop %v1700
    %v1725 = vrcp.pop %v1703
    %v1726 = vrcp.pop %v1706
    %v1727 = vrcp.pop %v1709
    %v1728 = vrcp.pop %v1712
    %v1729 = vmul.f32 %v1634, %v1713
    %v1730 = vmul.f32 %v1636, %v1714
    %v1731 = vmul.f32 %v1638, %v1715
    %v1732 = vmul.f32 %v1640, %v1716
    %v1733 = vmul.f32 %v1642, %v1717
    %v1734 = vmul.f32 %v1644, %v1718
    %v1735 = vmul.f32 %v1646, %v1719
    %v1736 = vmul.f32 %v1648, %v1720
    %v1737 = vmul.f32 %v1650, %v1721
    %v1738 = vmul.f32 %v1652, %v1722
    %v1739 = vmul.f32 %v1654, %v1723
    %v1740 = vmul.f32 %v1656, %v1724
    %v1741 = vmul.f32 %v1658, %v1725
    %v1742 = vmul.f32 %v1660, %v1726
    %v1743 = vmul.f32 %v1662, %v1727
    %v1744 = vmul.f32 %v1664, %v1728
    %v1746 = vsel %vm1568, %v1729, 0
    %1748 = vmatprep.subr.mxu0 0.0
    %1749 = vmatpush1.msra.mxu0 %v278
    %1750 = vmatprep.subr.mxu0 0.0
    %1751 = vmatpush1.msra.mxu0 0.0
    %1752 = vmatprep.subr.mxu0 0.0
    %1753 = vmatpush1.msra.mxu0 0.0
    %1754 = vmatprep.subr.mxu0 0.0
    %1755 = vmatpush1.msra.mxu0 0.0
    %1756 = vmatprep.subr.mxu0 0.0
    %1757 = vmatpush1.msra.mxu0 0.0
    %1758 = vmatprep.subr.mxu0 0.0
    %1759 = vmatpush1.msra.mxu0 0.0
    %1760 = vmatprep.subr.mxu0 0.0
    %1761 = vmatpush1.msra.mxu0 0.0
    %1762 = vmatprep.subr.mxu0 0.0
    %1763 = vmatpush1.msra.mxu0 0.0
    %1764 = vmatprep.subr.mxu0 0.0
    %1765 = vmatpush1.msra.mxu0 0.0
    %1766 = vmatprep.subr.mxu0 0.0
    %1767 = vmatpush1.msra.mxu0 0.0
    %1768 = vmatprep.subr.mxu0 0.0
    %1769 = vmatpush1.msra.mxu0 0.0
    %1770 = vmatprep.subr.mxu0 0.0
    %1771 = vmatpush1.msra.mxu0 0.0
    %1772 = vmatprep.subr.mxu0 0.0
    %1773 = vmatpush1.msra.mxu0 0.0
    %1774 = vmatprep.subr.mxu0 0.0
    %1775 = vmatpush1.msra.mxu0 0.0
    %1776 = vmatprep.subr.mxu0 0.0
    %1777 = vmatpush1.msra.mxu0 0.0
    %1778 = vmatprep.subr.mxu0 0.0
    %1779 = vmatpush1.msra.mxu0 0.0
    %1780 = vmatprep.subr.mxu0 0.0
    %1781 = vmatpush1.msra.mxu0 0.0
    %1782 = vmatprep.subr.mxu0 0.0
    %1783 = vmatpush1.msra.mxu0 0.0
    %1784 = vmatprep.subr.mxu0 0.0
    %1785 = vmatpush1.msra.mxu0 0.0
    %1786 = vmatprep.subr.mxu0 0.0
    %1787 = vmatpush1.msra.mxu0 0.0
    %1788 = vmatprep.subr.mxu0 0.0
    %1789 = vmatpush1.msra.mxu0 0.0
    %1790 = vmatprep.subr.mxu0 0.0
    %1791 = vmatpush1.msra.mxu0 0.0
    %1792 = vmatprep.subr.mxu0 0.0
    %1793 = vmatpush1.msra.mxu0 0.0
    %1794 = vmatprep.subr.mxu0 0.0
    %1795 = vmatpush1.msra.mxu0 0.0
    %1796 = vmatprep.subr.mxu0 0.0
    %1797 = vmatpush1.msra.mxu0 0.0
    %1798 = vmatprep.subr.mxu0 0.0
    %1799 = vmatpush1.msra.mxu0 0.0
    %1800 = vmatprep.subr.mxu0 0.0
    %1801 = vmatpush1.msra.mxu0 0.0
    %1802 = vmatprep.subr.mxu0 0.0
    %1803 = vmatpush1.msra.mxu0 0.0
    %1804 = vmatprep.subr.mxu0 0.0
    %1805 = vmatpush1.msra.mxu0 0.0
    %1806 = vmatprep.subr.mxu0 0.0
    %1807 = vmatpush1.msra.mxu0 0.0
    %1808 = vmatprep.subr.mxu0 0.0
    %1809 = vmatpush1.msra.mxu0 0.0
    %1810 = vmatprep.subr.mxu0 0.0
    %1811 = vmatpush1.msra.mxu0 0.0
    %1812 = vmatprep.mubr.f32.mxu0 0.0
    %1813 = vmatmul.mubr.f32.gmra.mrb[0].mxu0 %v1746
    %v1814 = vpop.f32.mrb[0].mxu0
    %v1815 = vadd.f32 0.0, %v1814
    %v1816 = vpop.f32.mrb[0].mxu0
    %1817 = vdwg.mxu0
    %v1819 = vsel %vm1568, %v1730, 0
    %1821 = vmatprep.subr.mxu0 0.0
    %1822 = vmatpush1.msra.mxu0 %v346
    %1823 = vmatprep.subr.mxu0 0.0
    %1824 = vmatpush1.msra.mxu0 0.0
    %1825 = vmatprep.subr.mxu0 0.0
    %1826 = vmatpush1.msra.mxu0 0.0
    %1827 = vmatprep.subr.mxu0 0.0
    %1828 = vmatpush1.msra.mxu0 0.0
    %1829 = vmatprep.subr.mxu0 0.0
    %1830 = vmatpush1.msra.mxu0 0.0
    %1831 = vmatprep.subr.mxu0 0.0
    %1832 = vmatpush1.msra.mxu0 0.0
    %1833 = vmatprep.subr.mxu0 0.0
    %1834 = vmatpush1.msra.mxu0 0.0
    %1835 = vmatprep.subr.mxu0 0.0
    %1836 = vmatpush1.msra.mxu0 0.0
    %1837 = vmatprep.subr.mxu0 0.0
    %1838 = vmatpush1.msra.mxu0 0.0
    %1839 = vmatprep.subr.mxu0 0.0
    %1840 = vmatpush1.msra.mxu0 0.0
    %1841 = vmatprep.subr.mxu0 0.0
    %1842 = vmatpush1.msra.mxu0 0.0
    %1843 = vmatprep.subr.mxu0 0.0
    %1844 = vmatpush1.msra.mxu0 0.0
    %1845 = vmatprep.subr.mxu0 0.0
    %1846 = vmatpush1.msra.mxu0 0.0
    %1847 = vmatprep.subr.mxu0 0.0
    %1848 = vmatpush1.msra.mxu0 0.0
    %1849 = vmatprep.subr.mxu0 0.0
    %1850 = vmatpush1.msra.mxu0 0.0
    %1851 = vmatprep.subr.mxu0 0.0
    %1852 = vmatpush1.msra.mxu0 0.0
    %1853 = vmatprep.subr.mxu0 0.0
    %1854 = vmatpush1.msra.mxu0 0.0
    %1855 = vmatprep.subr.mxu0 0.0
    %1856 = vmatpush1.msra.mxu0 0.0
    %1857 = vmatprep.subr.mxu0 0.0
    %1858 = vmatpush1.msra.mxu0 0.0
    %1859 = vmatprep.subr.mxu0 0.0
    %1860 = vmatpush1.msra.mxu0 0.0
    %1861 = vmatprep.subr.mxu0 0.0
    %1862 = vmatpush1.msra.mxu0 0.0
    %1863 = vmatprep.subr.mxu0 0.0
    %1864 = vmatpush1.msra.mxu0 0.0
    %1865 = vmatprep.subr.mxu0 0.0
    %1866 = vmatpush1.msra.mxu0 0.0
    %1867 = vmatprep.subr.mxu0 0.0
    %1868 = vmatpush1.msra.mxu0 0.0
    %1869 = vmatprep.subr.mxu0 0.0
    %1870 = vmatpush1.msra.mxu0 0.0
    %1871 = vmatprep.subr.mxu0 0.0
    %1872 = vmatpush1.msra.mxu0 0.0
    %1873 = vmatprep.subr.mxu0 0.0
    %1874 = vmatpush1.msra.mxu0 0.0
    %1875 = vmatprep.subr.mxu0 0.0
    %1876 = vmatpush1.msra.mxu0 0.0
    %1877 = vmatprep.subr.mxu0 0.0
    %1878 = vmatpush1.msra.mxu0 0.0
    %1879 = vmatprep.subr.mxu0 0.0
    %1880 = vmatpush1.msra.mxu0 0.0
    %1881 = vmatprep.subr.mxu0 0.0
    %1882 = vmatpush1.msra.mxu0 0.0
    %1883 = vmatprep.subr.mxu0 0.0
    %1884 = vmatpush1.msra.mxu0 0.0
    %1885 = vmatprep.mubr.f32.mxu0 0.0
    %1886 = vmatmul.mubr.f32.gmra.mrb[0].mxu0 %v1819
    %v1887 = vpop.f32.mrb[0].mxu0
    %v1888 = vadd.f32 0.0, %v1887
    %v1889 = vpop.f32.mrb[0].mxu0
    %1890 = vdwg.mxu0
    %v1892 = vsel %vm1568, %v1731, 0
    %1894 = vmatprep.subr.mxu0 0.0
    %1895 = vmatpush1.msra.mxu0 %v349
    %1896 = vmatprep.subr.mxu0 0.0
    %1897 = vmatpush1.msra.mxu0 0.0
    %1898 = vmatprep.subr.mxu0 0.0
    %1899 = vmatpush1.msra.mxu0 0.0
    %1900 = vmatprep.subr.mxu0 0.0
    %1901 = vmatpush1.msra.mxu0 0.0
    %1902 = vmatprep.subr.mxu0 0.0
    %1903 = vmatpush1.msra.mxu0 0.0
    %1904 = vmatprep.subr.mxu0 0.0
    %1905 = vmatpush1.msra.mxu0 0.0
    %1906 = vmatprep.subr.mxu0 0.0
    %1907 = vmatpush1.msra.mxu0 0.0
    %1908 = vmatprep.subr.mxu0 0.0
    %1909 = vmatpush1.msra.mxu0 0.0
    %1910 = vmatprep.subr.mxu0 0.0
    %1911 = vmatpush1.msra.mxu0 0.0
    %1912 = vmatprep.subr.mxu0 0.0
    %1913 = vmatpush1.msra.mxu0 0.0
    %1914 = vmatprep.subr.mxu0 0.0
    %1915 = vmatpush1.msra.mxu0 0.0
    %1916 = vmatprep.subr.mxu0 0.0
    %1917 = vmatpush1.msra.mxu0 0.0
    %1918 = vmatprep.subr.mxu0 0.0
    %1919 = vmatpush1.msra.mxu0 0.0
    %1920 = vmatprep.subr.mxu0 0.0
    %1921 = vmatpush1.msra.mxu0 0.0
    %1922 = vmatprep.subr.mxu0 0.0
    %1923 = vmatpush1.msra.mxu0 0.0
    %1924 = vmatprep.subr.mxu0 0.0
    %1925 = vmatpush1.msra.mxu0 0.0
    %1926 = vmatprep.subr.mxu0 0.0
    %1927 = vmatpush1.msra.mxu0 0.0
    %1928 = vmatprep.subr.mxu0 0.0
    %1929 = vmatpush1.msra.mxu0 0.0
    %1930 = vmatprep.subr.mxu0 0.0
    %1931 = vmatpush1.msra.mxu0 0.0
    %1932 = vmatprep.subr.mxu0 0.0
    %1933 = vmatpush1.msra.mxu0 0.0
    %1934 = vmatprep.subr.mxu0 0.0
    %1935 = vmatpush1.msra.mxu0 0.0
    %1936 = vmatprep.subr.mxu0 0.0
    %1937 = vmatpush1.msra.mxu0 0.0
    %1938 = vmatprep.subr.mxu0 0.0
    %1939 = vmatpush1.msra.mxu0 0.0
    %1940 = vmatprep.subr.mxu0 0.0
    %1941 = vmatpush1.msra.mxu0 0.0
    %1942 = vmatprep.subr.mxu0 0.0
    %1943 = vmatpush1.msra.mxu0 0.0
    %1944 = vmatprep.subr.mxu0 0.0
    %1945 = vmatpush1.msra.mxu0 0.0
    %1946 = vmatprep.subr.mxu0 0.0
    %1947 = vmatpush1.msra.mxu0 0.0
    %1948 = vmatprep.subr.mxu0 0.0
    %1949 = vmatpush1.msra.mxu0 0.0
    %1950 = vmatprep.subr.mxu0 0.0
    %1951 = vmatpush1.msra.mxu0 0.0
    %1952 = vmatprep.subr.mxu0 0.0
    %1953 = vmatpush1.msra.mxu0 0.0
    %1954 = vmatprep.subr.mxu0 0.0
    %1955 = vmatpush1.msra.mxu0 0.0
    %1956 = vmatprep.subr.mxu0 0.0
    %1957 = vmatpush1.msra.mxu0 0.0
    %1958 = vmatprep.mubr.f32.mxu0 0.0
    %1959 = vmatmul.mubr.f32.gmra.mrb[0].mxu0 %v1892
    %v1960 = vpop.f32.mrb[0].mxu0
    %v1961 = vadd.f32 0.0, %v1960
    %v1962 = vpop.f32.mrb[0].mxu0
    %1963 = vdwg.mxu0
    %v1965 = vsel %vm1568, %v1732, 0
    %1967 = vmatprep.subr.mxu0 0.0
    %1968 = vmatpush1.msra.mxu0 %v352
    %1969 = vmatprep.subr.mxu0 0.0
    %1970 = vmatpush1.msra.mxu0 0.0
    %1971 = vmatprep.subr.mxu0 0.0
    %1972 = vmatpush1.msra.mxu0 0.0
    %1973 = vmatprep.subr.mxu0 0.0
    %1974 = vmatpush1.msra.mxu0 0.0
    %1975 = vmatprep.subr.mxu0 0.0
    %1976 = vmatpush1.msra.mxu0 0.0
    %1977 = vmatprep.subr.mxu0 0.0
    %1978 = vmatpush1.msra.mxu0 0.0
    %1979 = vmatprep.subr.mxu0 0.0
    %1980 = vmatpush1.msra.mxu0 0.0
    %1981 = vmatprep.subr.mxu0 0.0
    %1982 = vmatpush1.msra.mxu0 0.0
    %1983 = vmatprep.subr.mxu0 0.0
    %1984 = vmatpush1.msra.mxu0 0.0
    %1985 = vmatprep.subr.mxu0 0.0
    %1986 = vmatpush1.msra.mxu0 0.0
    %1987 = vmatprep.subr.mxu0 0.0
    %1988 = vmatpush1.msra.mxu0 0.0
    %1989 = vmatprep.subr.mxu0 0.0
    %1990 = vmatpush1.msra.mxu0 0.0
    %1991 = vmatprep.subr.mxu0 0.0
    %1992 = vmatpush1.msra.mxu0 0.0
    %1993 = vmatprep.subr.mxu0 0.0
    %1994 = vmatpush1.msra.mxu0 0.0
    %1995 = vmatprep.subr.mxu0 0.0
    %1996 = vmatpush1.msra.mxu0 0.0
    %1997 = vmatprep.subr.mxu0 0.0
    %1998 = vmatpush1.msra.mxu0 0.0
    %1999 = vmatprep.subr.mxu0 0.0
    %2000 = vmatpush1.msra.mxu0 0.0
    %2001 = vmatprep.subr.mxu0 0.0
    %2002 = vmatpush1.msra.mxu0 0.0
    %2003 = vmatprep.subr.mxu0 0.0
    %2004 = vmatpush1.msra.mxu0 0.0
    %2005 = vmatprep.subr.mxu0 0.0
    %2006 = vmatpush1.msra.mxu0 0.0
    %2007 = vmatprep.subr.mxu0 0.0
    %2008 = vmatpush1.msra.mxu0 0.0
    %2009 = vmatprep.subr.mxu0 0.0
    %2010 = vmatpush1.msra.mxu0 0.0
    %2011 = vmatprep.subr.mxu0 0.0
    %2012 = vmatpush1.msra.mxu0 0.0
    %2013 = vmatprep.subr.mxu0 0.0
    %2014 = vmatpush1.msra.mxu0 0.0
    %2015 = vmatprep.subr.mxu0 0.0
    %2016 = vmatpush1.msra.mxu0 0.0
    %2017 = vmatprep.subr.mxu0 0.0
    %2018 = vmatpush1.msra.mxu0 0.0
    %2019 = vmatprep.subr.mxu0 0.0
    %2020 = vmatpush1.msra.mxu0 0.0
    %2021 = vmatprep.subr.mxu0 0.0
    %2022 = vmatpush1.msra.mxu0 0.0
    %2023 = vmatprep.subr.mxu0 0.0
    %2024 = vmatpush1.msra.mxu0 0.0
    %2025 = vmatprep.subr.mxu0 0.0
    %2026 = vmatpush1.msra.mxu0 0.0
    %2027 = vmatprep.subr.mxu0 0.0
    %2028 = vmatpush1.msra.mxu0 0.0
    %2029 = vmatprep.subr.mxu0 0.0
    %2030 = vmatpush1.msra.mxu0 0.0
    %2031 = vmatprep.mubr.f32.mxu0 0.0
    %2032 = vmatmul.mubr.f32.gmra.mrb[0].mxu0 %v1965
    %v2033 = vpop.f32.mrb[0].mxu0
    %v2034 = vadd.f32 0.0, %v2033
    %v2035 = vpop.f32.mrb[0].mxu0
    %2036 = vdwg.mxu0
    %v2038 = vsel %vm1568, %v1733, 0
    %2040 = vmatprep.subr.mxu0 0.0
    %2041 = vmatpush1.msra.mxu0 %v280
    %2042 = vmatprep.subr.mxu0 0.0
    %2043 = vmatpush1.msra.mxu0 0.0
    %2044 = vmatprep.subr.mxu0 0.0
    %2045 = vmatpush1.msra.mxu0 0.0
    %2046 = vmatprep.subr.mxu0 0.0
    %2047 = vmatpush1.msra.mxu0 0.0
    %2048 = vmatprep.subr.mxu0 0.0
    %2049 = vmatpush1.msra.mxu0 0.0
    %2050 = vmatprep.subr.mxu0 0.0
    %2051 = vmatpush1.msra.mxu0 0.0
    %2052 = vmatprep.subr.mxu0 0.0
    %2053 = vmatpush1.msra.mxu0 0.0
    %2054 = vmatprep.subr.mxu0 0.0
    %2055 = vmatpush1.msra.mxu0 0.0
    %2056 = vmatprep.subr.mxu0 0.0
    %2057 = vmatpush1.msra.mxu0 0.0
    %2058 = vmatprep.subr.mxu0 0.0
    %2059 = vmatpush1.msra.mxu0 0.0
    %2060 = vmatprep.subr.mxu0 0.0
    %2061 = vmatpush1.msra.mxu0 0.0
    %2062 = vmatprep.subr.mxu0 0.0
    %2063 = vmatpush1.msra.mxu0 0.0
    %2064 = vmatprep.subr.mxu0 0.0
    %2065 = vmatpush1.msra.mxu0 0.0
    %2066 = vmatprep.subr.mxu0 0.0
    %2067 = vmatpush1.msra.mxu0 0.0
    %2068 = vmatprep.subr.mxu0 0.0
    %2069 = vmatpush1.msra.mxu0 0.0
    %2070 = vmatprep.subr.mxu0 0.0
    %2071 = vmatpush1.msra.mxu0 0.0
    %2072 = vmatprep.subr.mxu0 0.0
    %2073 = vmatpush1.msra.mxu0 0.0
    %2074 = vmatprep.subr.mxu0 0.0
    %2075 = vmatpush1.msra.mxu0 0.0
    %2076 = vmatprep.subr.mxu0 0.0
    %2077 = vmatpush1.msra.mxu0 0.0
    %2078 = vmatprep.subr.mxu0 0.0
    %2079 = vmatpush1.msra.mxu0 0.0
    %2080 = vmatprep.subr.mxu0 0.0
    %2081 = vmatpush1.msra.mxu0 0.0
    %2082 = vmatprep.subr.mxu0 0.0
    %2083 = vmatpush1.msra.mxu0 0.0
    %2084 = vmatprep.subr.mxu0 0.0
    %2085 = vmatpush1.msra.mxu0 0.0
    %2086 = vmatprep.subr.mxu0 0.0
    %2087 = vmatpush1.msra.mxu0 0.0
    %2088 = vmatprep.subr.mxu0 0.0
    %2089 = vmatpush1.msra.mxu0 0.0
    %2090 = vmatprep.subr.mxu0 0.0
    %2091 = vmatpush1.msra.mxu0 0.0
    %2092 = vmatprep.subr.mxu0 0.0
    %2093 = vmatpush1.msra.mxu0 0.0
    %2094 = vmatprep.subr.mxu0 0.0
    %2095 = vmatpush1.msra.mxu0 0.0
    %2096 = vmatprep.subr.mxu0 0.0
    %2097 = vmatpush1.msra.mxu0 0.0
    %2098 = vmatprep.subr.mxu0 0.0
    %2099 = vmatpush1.msra.mxu0 0.0
    %2100 = vmatprep.subr.mxu0 0.0
    %2101 = vmatpush1.msra.mxu0 0.0
    %2102 = vmatprep.subr.mxu0 0.0
    %2103 = vmatpush1.msra.mxu0 0.0
    %2104 = vmatprep.mubr.f32.mxu0 0.0
    %2105 = vmatmul.mubr.f32.gmra.mrb[0].mxu0 %v2038
    %v2106 = vpop.f32.mrb[0].mxu0
    %v2107 = vadd.f32 0.0, %v2106
    %v2108 = vpop.f32.mrb[0].mxu0
    %2109 = vdwg.mxu0
    %v2111 = vsel %vm1568, %v1734, 0
    %2113 = vmatprep.subr.mxu0 0.0
    %2114 = vmatpush1.msra.mxu0 %v356
    %2115 = vmatprep.subr.mxu0 0.0
    %2116 = vmatpush1.msra.mxu0 0.0
    %2117 = vmatprep.subr.mxu0 0.0
    %2118 = vmatpush1.msra.mxu0 0.0
    %2119 = vmatprep.subr.mxu0 0.0
    %2120 = vmatpush1.msra.mxu0 0.0
    %2121 = vmatprep.subr.mxu0 0.0
    %2122 = vmatpush1.msra.mxu0 0.0
    %2123 = vmatprep.subr.mxu0 0.0
    %2124 = vmatpush1.msra.mxu0 0.0
    %2125 = vmatprep.subr.mxu0 0.0
    %2126 = vmatpush1.msra.mxu0 0.0
    %2127 = vmatprep.subr.mxu0 0.0
    %2128 = vmatpush1.msra.mxu0 0.0
    %2129 = vmatprep.subr.mxu0 0.0
    %2130 = vmatpush1.msra.mxu0 0.0
    %2131 = vmatprep.subr.mxu0 0.0
    %2132 = vmatpush1.msra.mxu0 0.0
    %2133 = vmatprep.subr.mxu0 0.0
    %2134 = vmatpush1.msra.mxu0 0.0
    %2135 = vmatprep.subr.mxu0 0.0
    %2136 = vmatpush1.msra.mxu0 0.0
    %2137 = vmatprep.subr.mxu0 0.0
    %2138 = vmatpush1.msra.mxu0 0.0
    %2139 = vmatprep.subr.mxu0 0.0
    %2140 = vmatpush1.msra.mxu0 0.0
    %2141 = vmatprep.subr.mxu0 0.0
    %2142 = vmatpush1.msra.mxu0 0.0
    %2143 = vmatprep.subr.mxu0 0.0
    %2144 = vmatpush1.msra.mxu0 0.0
    %2145 = vmatprep.subr.mxu0 0.0
    %2146 = vmatpush1.msra.mxu0 0.0
    %2147 = vmatprep.subr.mxu0 0.0
    %2148 = vmatpush1.msra.mxu0 0.0
    %2149 = vmatprep.subr.mxu0 0.0
    %2150 = vmatpush1.msra.mxu0 0.0
    %2151 = vmatprep.subr.mxu0 0.0
    %2152 = vmatpush1.msra.mxu0 0.0
    %2153 = vmatprep.subr.mxu0 0.0
    %2154 = vmatpush1.msra.mxu0 0.0
    %2155 = vmatprep.subr.mxu0 0.0
    %2156 = vmatpush1.msra.mxu0 0.0
    %2157 = vmatprep.subr.mxu0 0.0
    %2158 = vmatpush1.msra.mxu0 0.0
    %2159 = vmatprep.subr.mxu0 0.0
    %2160 = vmatpush1.msra.mxu0 0.0
    %2161 = vmatprep.subr.mxu0 0.0
    %2162 = vmatpush1.msra.mxu0 0.0
    %2163 = vmatprep.subr.mxu0 0.0
    %2164 = vmatpush1.msra.mxu0 0.0
    %2165 = vmatprep.subr.mxu0 0.0
    %2166 = vmatpush1.msra.mxu0 0.0
    %2167 = vmatprep.subr.mxu0 0.0
    %2168 = vmatpush1.msra.mxu0 0.0
    %2169 = vmatprep.subr.mxu0 0.0
    %2170 = vmatpush1.msra.mxu0 0.0
    %2171 = vmatprep.subr.mxu0 0.0
    %2172 = vmatpush1.msra.mxu0 0.0
    %2173 = vmatprep.subr.mxu0 0.0
    %2174 = vmatpush1.msra.mxu0 0.0
    %2175 = vmatprep.subr.mxu0 0.0
    %2176 = vmatpush1.msra.mxu0 0.0
    %2177 = vmatprep.mubr.f32.mxu0 0.0
    %2178 = vmatmul.mubr.f32.gmra.mrb[0].mxu0 %v2111
    %v2179 = vpop.f32.mrb[0].mxu0
    %v2180 = vadd.f32 0.0, %v2179
    %v2181 = vpop.f32.mrb[0].mxu0
    %2182 = vdwg.mxu0
    %v2184 = vsel %vm1568, %v1735, 0
    %2186 = vmatprep.subr.mxu0 0.0
    %2187 = vmatpush1.msra.mxu0 %v359
    %2188 = vmatprep.subr.mxu0 0.0
    %2189 = vmatpush1.msra.mxu0 0.0
    %2190 = vmatprep.subr.mxu0 0.0
    %2191 = vmatpush1.msra.mxu0 0.0
    %2192 = vmatprep.subr.mxu0 0.0
    %2193 = vmatpush1.msra.mxu0 0.0
    %2194 = vmatprep.subr.mxu0 0.0
    %2195 = vmatpush1.msra.mxu0 0.0
    %2196 = vmatprep.subr.mxu0 0.0
    %2197 = vmatpush1.msra.mxu0 0.0
    %2198 = vmatprep.subr.mxu0 0.0
    %2199 = vmatpush1.msra.mxu0 0.0
    %2200 = vmatprep.subr.mxu0 0.0
    %2201 = vmatpush1.msra.mxu0 0.0
    %2202 = vmatprep.subr.mxu0 0.0
    %2203 = vmatpush1.msra.mxu0 0.0
    %2204 = vmatprep.subr.mxu0 0.0
    %2205 = vmatpush1.msra.mxu0 0.0
    %2206 = vmatprep.subr.mxu0 0.0
    %2207 = vmatpush1.msra.mxu0 0.0
    %2208 = vmatprep.subr.mxu0 0.0
    %2209 = vmatpush1.msra.mxu0 0.0
    %2210 = vmatprep.subr.mxu0 0.0
    %2211 = vmatpush1.msra.mxu0 0.0
    %2212 = vmatprep.subr.mxu0 0.0
    %2213 = vmatpush1.msra.mxu0 0.0
    %2214 = vmatprep.subr.mxu0 0.0
    %2215 = vmatpush1.msra.mxu0 0.0
    %2216 = vmatprep.subr.mxu0 0.0
    %2217 = vmatpush1.msra.mxu0 0.0
    %2218 = vmatprep.subr.mxu0 0.0
    %2219 = vmatpush1.msra.mxu0 0.0
    %2220 = vmatprep.subr.mxu0 0.0
    %2221 = vmatpush1.msra.mxu0 0.0
    %2222 = vmatprep.subr.mxu0 0.0
    %2223 = vmatpush1.msra.mxu0 0.0
    %2224 = vmatprep.subr.mxu0 0.0
    %2225 = vmatpush1.msra.mxu0 0.0
    %2226 = vmatprep.subr.mxu0 0.0
    %2227 = vmatpush1.msra.mxu0 0.0
    %2228 = vmatprep.subr.mxu0 0.0
    %2229 = vmatpush1.msra.mxu0 0.0
    %2230 = vmatprep.subr.mxu0 0.0
    %2231 = vmatpush1.msra.mxu0 0.0
    %2232 = vmatprep.subr.mxu0 0.0
    %2233 = vmatpush1.msra.mxu0 0.0
    %2234 = vmatprep.subr.mxu0 0.0
    %2235 = vmatpush1.msra.mxu0 0.0
    %2236 = vmatprep.subr.mxu0 0.0
    %2237 = vmatpush1.msra.mxu0 0.0
    %2238 = vmatprep.subr.mxu0 0.0
    %2239 = vmatpush1.msra.mxu0 0.0
    %2240 = vmatprep.subr.mxu0 0.0
    %2241 = vmatpush1.msra.mxu0 0.0
    %2242 = vmatprep.subr.mxu0 0.0
    %2243 = vmatpush1.msra.mxu0 0.0
    %2244 = vmatprep.subr.mxu0 0.0
    %2245 = vmatpush1.msra.mxu0 0.0
    %2246 = vmatprep.subr.mxu0 0.0
    %2247 = vmatpush1.msra.mxu0 0.0
    %2248 = vmatprep.subr.mxu0 0.0
    %2249 = vmatpush1.msra.mxu0 0.0
    %2250 = vmatprep.mubr.f32.mxu0 0.0
    %2251 = vmatmul.mubr.f32.gmra.mrb[0].mxu0 %v2184
    %v2252 = vpop.f32.mrb[0].mxu0
    %v2253 = vadd.f32 0.0, %v2252
    %v2254 = vpop.f32.mrb[0].mxu0
    %2255 = vdwg.mxu0
    %v2257 = vsel %vm1568, %v1736, 0
    %2259 = vmatprep.subr.mxu0 0.0
    %2260 = vmatpush1.msra.mxu0 %v362
    %2261 = vmatprep.subr.mxu0 0.0
    %2262 = vmatpush1.msra.mxu0 0.0
    %2263 = vmatprep.subr.mxu0 0.0
    %2264 = vmatpush1.msra.mxu0 0.0
    %2265 = vmatprep.subr.mxu0 0.0
    %2266 = vmatpush1.msra.mxu0 0.0
    %2267 = vmatprep.subr.mxu0 0.0
    %2268 = vmatpush1.msra.mxu0 0.0
    %2269 = vmatprep.subr.mxu0 0.0
    %2270 = vmatpush1.msra.mxu0 0.0
    %2271 = vmatprep.subr.mxu0 0.0
    %2272 = vmatpush1.msra.mxu0 0.0
    %2273 = vmatprep.subr.mxu0 0.0
    %2274 = vmatpush1.msra.mxu0 0.0
    %2275 = vmatprep.subr.mxu0 0.0
    %2276 = vmatpush1.msra.mxu0 0.0
    %2277 = vmatprep.subr.mxu0 0.0
    %2278 = vmatpush1.msra.mxu0 0.0
    %2279 = vmatprep.subr.mxu0 0.0
    %2280 = vmatpush1.msra.mxu0 0.0
    %2281 = vmatprep.subr.mxu0 0.0
    %2282 = vmatpush1.msra.mxu0 0.0
    %2283 = vmatprep.subr.mxu0 0.0
    %2284 = vmatpush1.msra.mxu0 0.0
    %2285 = vmatprep.subr.mxu0 0.0
    %2286 = vmatpush1.msra.mxu0 0.0
    %2287 = vmatprep.subr.mxu0 0.0
    %2288 = vmatpush1.msra.mxu0 0.0
    %2289 = vmatprep.subr.mxu0 0.0
    %2290 = vmatpush1.msra.mxu0 0.0
    %2291 = vmatprep.subr.mxu0 0.0
    %2292 = vmatpush1.msra.mxu0 0.0
    %2293 = vmatprep.subr.mxu0 0.0
    %2294 = vmatpush1.msra.mxu0 0.0
    %2295 = vmatprep.subr.mxu0 0.0
    %2296 = vmatpush1.msra.mxu0 0.0
    %2297 = vmatprep.subr.mxu0 0.0
    %2298 = vmatpush1.msra.mxu0 0.0
    %2299 = vmatprep.subr.mxu0 0.0
    %2300 = vmatpush1.msra.mxu0 0.0
    %2301 = vmatprep.subr.mxu0 0.0
    %2302 = vmatpush1.msra.mxu0 0.0
    %2303 = vmatprep.subr.mxu0 0.0
    %2304 = vmatpush1.msra.mxu0 0.0
    %2305 = vmatprep.subr.mxu0 0.0
    %2306 = vmatpush1.msra.mxu0 0.0
    %2307 = vmatprep.subr.mxu0 0.0
    %2308 = vmatpush1.msra.mxu0 0.0
    %2309 = vmatprep.subr.mxu0 0.0
    %2310 = vmatpush1.msra.mxu0 0.0
    %2311 = vmatprep.subr.mxu0 0.0
    %2312 = vmatpush1.msra.mxu0 0.0
    %2313 = vmatprep.subr.mxu0 0.0
    %2314 = vmatpush1.msra.mxu0 0.0
    %2315 = vmatprep.subr.mxu0 0.0
    %2316 = vmatpush1.msra.mxu0 0.0
    %2317 = vmatprep.subr.mxu0 0.0
    %2318 = vmatpush1.msra.mxu0 0.0
    %2319 = vmatprep.subr.mxu0 0.0
    %2320 = vmatpush1.msra.mxu0 0.0
    %2321 = vmatprep.subr.mxu0 0.0
    %2322 = vmatpush1.msra.mxu0 0.0
    %2323 = vmatprep.mubr.f32.mxu0 0.0
    %2324 = vmatmul.mubr.f32.gmra.mrb[0].mxu0 %v2257
    %v2325 = vpop.f32.mrb[0].mxu0
    %v2326 = vadd.f32 0.0, %v2325
    %v2327 = vpop.f32.mrb[0].mxu0
    %2328 = vdwg.mxu0
    %v2330 = vsel %vm1568, %v1737, 0
    %2332 = vmatprep.subr.mxu0 0.0
    %2333 = vmatpush1.msra.mxu0 %v284
    %2334 = vmatprep.subr.mxu0 0.0
    %2335 = vmatpush1.msra.mxu0 0.0
    %2336 = vmatprep.subr.mxu0 0.0
    %2337 = vmatpush1.msra.mxu0 0.0
    %2338 = vmatprep.subr.mxu0 0.0
    %2339 = vmatpush1.msra.mxu0 0.0
    %2340 = vmatprep.subr.mxu0 0.0
    %2341 = vmatpush1.msra.mxu0 0.0
    %2342 = vmatprep.subr.mxu0 0.0
    %2343 = vmatpush1.msra.mxu0 0.0
    %2344 = vmatprep.subr.mxu0 0.0
    %2345 = vmatpush1.msra.mxu0 0.0
    %2346 = vmatprep.subr.mxu0 0.0
    %2347 = vmatpush1.msra.mxu0 0.0
    %2348 = vmatprep.subr.mxu0 0.0
    %2349 = vmatpush1.msra.mxu0 0.0
    %2350 = vmatprep.subr.mxu0 0.0
    %2351 = vmatpush1.msra.mxu0 0.0
    %2352 = vmatprep.subr.mxu0 0.0
    %2353 = vmatpush1.msra.mxu0 0.0
    %2354 = vmatprep.subr.mxu0 0.0
    %2355 = vmatpush1.msra.mxu0 0.0
    %2356 = vmatprep.subr.mxu0 0.0
    %2357 = vmatpush1.msra.mxu0 0.0
    %2358 = vmatprep.subr.mxu0 0.0
    %2359 = vmatpush1.msra.mxu0 0.0
    %2360 = vmatprep.subr.mxu0 0.0
    %2361 = vmatpush1.msra.mxu0 0.0
    %2362 = vmatprep.subr.mxu0 0.0
    %2363 = vmatpush1.msra.mxu0 0.0
    %2364 = vmatprep.subr.mxu0 0.0
    %2365 = vmatpush1.msra.mxu0 0.0
    %2366 = vmatprep.subr.mxu0 0.0
    %2367 = vmatpush1.msra.mxu0 0.0
    %2368 = vmatprep.subr.mxu0 0.0
    %2369 = vmatpush1.msra.mxu0 0.0
    %2370 = vmatprep.subr.mxu0 0.0
    %2371 = vmatpush1.msra.mxu0 0.0
    %2372 = vmatprep.subr.mxu0 0.0
    %2373 = vmatpush1.msra.mxu0 0.0
    %2374 = vmatprep.subr.mxu0 0.0
    %2375 = vmatpush1.msra.mxu0 0.0
    %2376 = vmatprep.subr.mxu0 0.0
    %2377 = vmatpush1.msra.mxu0 0.0
    %2378 = vmatprep.subr.mxu0 0.0
    %2379 = vmatpush1.msra.mxu0 0.0
    %2380 = vmatprep.subr.mxu0 0.0
    %2381 = vmatpush1.msra.mxu0 0.0
    %2382 = vmatprep.subr.mxu0 0.0
    %2383 = vmatpush1.msra.mxu0 0.0
    %2384 = vmatprep.subr.mxu0 0.0
    %2385 = vmatpush1.msra.mxu0 0.0
    %2386 = vmatprep.subr.mxu0 0.0
    %2387 = vmatpush1.msra.mxu0 0.0
    %2388 = vmatprep.subr.mxu0 0.0
    %2389 = vmatpush1.msra.mxu0 0.0
    %2390 = vmatprep.subr.mxu0 0.0
    %2391 = vmatpush1.msra.mxu0 0.0
    %2392 = vmatprep.subr.mxu0 0.0
    %2393 = vmatpush1.msra.mxu0 0.0
    %2394 = vmatprep.subr.mxu0 0.0
    %2395 = vmatpush1.msra.mxu0 0.0
    %2396 = vmatprep.mubr.f32.mxu0 0.0
    %2397 = vmatmul.mubr.f32.gmra.mrb[0].mxu0 %v2330
    %v2398 = vpop.f32.mrb[0].mxu0
    %v2399 = vadd.f32 0.0, %v2398
    %v2400 = vpop.f32.mrb[0].mxu0
    %2401 = vdwg.mxu0
    %v2403 = vsel %vm1568, %v1738, 0
    %2405 = vmatprep.subr.mxu0 0.0
    %2406 = vmatpush1.msra.mxu0 %v366
    %2407 = vmatprep.subr.mxu0 0.0
    %2408 = vmatpush1.msra.mxu0 0.0
    %2409 = vmatprep.subr.mxu0 0.0
    %2410 = vmatpush1.msra.mxu0 0.0
    %2411 = vmatprep.subr.mxu0 0.0
    %2412 = vmatpush1.msra.mxu0 0.0
    %2413 = vmatprep.subr.mxu0 0.0
    %2414 = vmatpush1.msra.mxu0 0.0
    %2415 = vmatprep.subr.mxu0 0.0
    %2416 = vmatpush1.msra.mxu0 0.0
    %2417 = vmatprep.subr.mxu0 0.0
    %2418 = vmatpush1.msra.mxu0 0.0
    %2419 = vmatprep.subr.mxu0 0.0
    %2420 = vmatpush1.msra.mxu0 0.0
    %2421 = vmatprep.subr.mxu0 0.0
    %2422 = vmatpush1.msra.mxu0 0.0
    %2423 = vmatprep.subr.mxu0 0.0
    %2424 = vmatpush1.msra.mxu0 0.0
    %2425 = vmatprep.subr.mxu0 0.0
    %2426 = vmatpush1.msra.mxu0 0.0
    %2427 = vmatprep.subr.mxu0 0.0
    %2428 = vmatpush1.msra.mxu0 0.0
    %2429 = vmatprep.subr.mxu0 0.0
    %2430 = vmatpush1.msra.mxu0 0.0
    %2431 = vmatprep.subr.mxu0 0.0
    %2432 = vmatpush1.msra.mxu0 0.0
    %2433 = vmatprep.subr.mxu0 0.0
    %2434 = vmatpush1.msra.mxu0 0.0
    %2435 = vmatprep.subr.mxu0 0.0
    %2436 = vmatpush1.msra.mxu0 0.0
    %2437 = vmatprep.subr.mxu0 0.0
    %2438 = vmatpush1.msra.mxu0 0.0
    %2439 = vmatprep.subr.mxu0 0.0
    %2440 = vmatpush1.msra.mxu0 0.0
    %2441 = vmatprep.subr.mxu0 0.0
    %2442 = vmatpush1.msra.mxu0 0.0
    %2443 = vmatprep.subr.mxu0 0.0
    %2444 = vmatpush1.msra.mxu0 0.0
    %2445 = vmatprep.subr.mxu0 0.0
    %2446 = vmatpush1.msra.mxu0 0.0
    %2447 = vmatprep.subr.mxu0 0.0
    %2448 = vmatpush1.msra.mxu0 0.0
    %2449 = vmatprep.subr.mxu0 0.0
    %2450 = vmatpush1.msra.mxu0 0.0
    %2451 = vmatprep.subr.mxu0 0.0
    %2452 = vmatpush1.msra.mxu0 0.0
    %2453 = vmatprep.subr.mxu0 0.0
    %2454 = vmatpush1.msra.mxu0 0.0
    %2455 = vmatprep.subr.mxu0 0.0
    %2456 = vmatpush1.msra.mxu0 0.0
    %2457 = vmatprep.subr.mxu0 0.0
    %2458 = vmatpush1.msra.mxu0 0.0
    %2459 = vmatprep.subr.mxu0 0.0
    %2460 = vmatpush1.msra.mxu0 0.0
    %2461 = vmatprep.subr.mxu0 0.0
    %2462 = vmatpush1.msra.mxu0 0.0
    %2463 = vmatprep.subr.mxu0 0.0
    %2464 = vmatpush1.msra.mxu0 0.0
    %2465 = vmatprep.subr.mxu0 0.0
    %2466 = vmatpush1.msra.mxu0 0.0
    %2467 = vmatprep.subr.mxu0 0.0
    %2468 = vmatpush1.msra.mxu0 0.0
    %2469 = vmatprep.mubr.f32.mxu0 0.0
    %2470 = vmatmul.mubr.f32.gmra.mrb[0].mxu0 %v2403
    %v2471 = vpop.f32.mrb[0].mxu0
    %v2472 = vadd.f32 0.0, %v2471
    %v2473 = vpop.f32.mrb[0].mxu0
    %2474 = vdwg.mxu0
    %v2476 = vsel %vm1568, %v1739, 0
    %2478 = vmatprep.subr.mxu0 0.0
    %2479 = vmatpush1.msra.mxu0 %v369
    %2480 = vmatprep.subr.mxu0 0.0
    %2481 = vmatpush1.msra.mxu0 0.0
    %2482 = vmatprep.subr.mxu0 0.0
    %2483 = vmatpush1.msra.mxu0 0.0
    %2484 = vmatprep.subr.mxu0 0.0
    %2485 = vmatpush1.msra.mxu0 0.0
    %2486 = vmatprep.subr.mxu0 0.0
    %2487 = vmatpush1.msra.mxu0 0.0
    %2488 = vmatprep.subr.mxu0 0.0
    %2489 = vmatpush1.msra.mxu0 0.0
    %2490 = vmatprep.subr.mxu0 0.0
    %2491 = vmatpush1.msra.mxu0 0.0
    %2492 = vmatprep.subr.mxu0 0.0
    %2493 = vmatpush1.msra.mxu0 0.0
    %2494 = vmatprep.subr.mxu0 0.0
    %2495 = vmatpush1.msra.mxu0 0.0
    %2496 = vmatprep.subr.mxu0 0.0
    %2497 = vmatpush1.msra.mxu0 0.0
    %2498 = vmatprep.subr.mxu0 0.0
    %2499 = vmatpush1.msra.mxu0 0.0
    %2500 = vmatprep.subr.mxu0 0.0
    %2501 = vmatpush1.msra.mxu0 0.0
    %2502 = vmatprep.subr.mxu0 0.0
    %2503 = vmatpush1.msra.mxu0 0.0
    %2504 = vmatprep.subr.mxu0 0.0
    %2505 = vmatpush1.msra.mxu0 0.0
    %2506 = vmatprep.subr.mxu0 0.0
    %2507 = vmatpush1.msra.mxu0 0.0
    %2508 = vmatprep.subr.mxu0 0.0
    %2509 = vmatpush1.msra.mxu0 0.0
    %2510 = vmatprep.subr.mxu0 0.0
    %2511 = vmatpush1.msra.mxu0 0.0
    %2512 = vmatprep.subr.mxu0 0.0
    %2513 = vmatpush1.msra.mxu0 0.0
    %2514 = vmatprep.subr.mxu0 0.0
    %2515 = vmatpush1.msra.mxu0 0.0
    %2516 = vmatprep.subr.mxu0 0.0
    %2517 = vmatpush1.msra.mxu0 0.0
    %2518 = vmatprep.subr.mxu0 0.0
    %2519 = vmatpush1.msra.mxu0 0.0
    %2520 = vmatprep.subr.mxu0 0.0
    %2521 = vmatpush1.msra.mxu0 0.0
    %2522 = vmatprep.subr.mxu0 0.0
    %2523 = vmatpush1.msra.mxu0 0.0
    %2524 = vmatprep.subr.mxu0 0.0
    %2525 = vmatpush1.msra.mxu0 0.0
    %2526 = vmatprep.subr.mxu0 0.0
    %2527 = vmatpush1.msra.mxu0 0.0
    %2528 = vmatprep.subr.mxu0 0.0
    %2529 = vmatpush1.msra.mxu0 0.0
    %2530 = vmatprep.subr.mxu0 0.0
    %2531 = vmatpush1.msra.mxu0 0.0
    %2532 = vmatprep.subr.mxu0 0.0
    %2533 = vmatpush1.msra.mxu0 0.0
    %2534 = vmatprep.subr.mxu0 0.0
    %2535 = vmatpush1.msra.mxu0 0.0
    %2536 = vmatprep.subr.mxu0 0.0
    %2537 = vmatpush1.msra.mxu0 0.0
    %2538 = vmatprep.subr.mxu0 0.0
    %2539 = vmatpush1.msra.mxu0 0.0
    %2540 = vmatprep.subr.mxu0 0.0
    %2541 = vmatpush1.msra.mxu0 0.0
    %2542 = vmatprep.mubr.f32.mxu0 0.0
    %2543 = vmatmul.mubr.f32.gmra.mrb[0].mxu0 %v2476
    %v2544 = vpop.f32.mrb[0].mxu0
    %v2545 = vadd.f32 0.0, %v2544
    %v2546 = vpop.f32.mrb[0].mxu0
    %2547 = vdwg.mxu0
    %v2549 = vsel %vm1568, %v1740, 0
    %2551 = vmatprep.subr.mxu0 0.0
    %2552 = vmatpush1.msra.mxu0 %v372
    %2553 = vmatprep.subr.mxu0 0.0
    %2554 = vmatpush1.msra.mxu0 0.0
    %2555 = vmatprep.subr.mxu0 0.0
    %2556 = vmatpush1.msra.mxu0 0.0
    %2557 = vmatprep.subr.mxu0 0.0
    %2558 = vmatpush1.msra.mxu0 0.0
    %2559 = vmatprep.subr.mxu0 0.0
    %2560 = vmatpush1.msra.mxu0 0.0
    %2561 = vmatprep.subr.mxu0 0.0
    %2562 = vmatpush1.msra.mxu0 0.0
    %2563 = vmatprep.subr.mxu0 0.0
    %2564 = vmatpush1.msra.mxu0 0.0
    %2565 = vmatprep.subr.mxu0 0.0
    %2566 = vmatpush1.msra.mxu0 0.0
    %2567 = vmatprep.subr.mxu0 0.0
    %2568 = vmatpush1.msra.mxu0 0.0
    %2569 = vmatprep.subr.mxu0 0.0
    %2570 = vmatpush1.msra.mxu0 0.0
    %2571 = vmatprep.subr.mxu0 0.0
    %2572 = vmatpush1.msra.mxu0 0.0
    %2573 = vmatprep.subr.mxu0 0.0
    %2574 = vmatpush1.msra.mxu0 0.0
    %2575 = vmatprep.subr.mxu0 0.0
    %2576 = vmatpush1.msra.mxu0 0.0
    %2577 = vmatprep.subr.mxu0 0.0
    %2578 = vmatpush1.msra.mxu0 0.0
    %2579 = vmatprep.subr.mxu0 0.0
    %2580 = vmatpush1.msra.mxu0 0.0
    %2581 = vmatprep.subr.mxu0 0.0
    %2582 = vmatpush1.msra.mxu0 0.0
    %2583 = vmatprep.subr.mxu0 0.0
    %2584 = vmatpush1.msra.mxu0 0.0
    %2585 = vmatprep.subr.mxu0 0.0
    %2586 = vmatpush1.msra.mxu0 0.0
    %2587 = vmatprep.subr.mxu0 0.0
    %2588 = vmatpush1.msra.mxu0 0.0
    %2589 = vmatprep.subr.mxu0 0.0
    %2590 = vmatpush1.msra.mxu0 0.0
    %2591 = vmatprep.subr.mxu0 0.0
    %2592 = vmatpush1.msra.mxu0 0.0
    %2593 = vmatprep.subr.mxu0 0.0
    %2594 = vmatpush1.msra.mxu0 0.0
    %2595 = vmatprep.subr.mxu0 0.0
    %2596 = vmatpush1.msra.mxu0 0.0
    %2597 = vmatprep.subr.mxu0 0.0
    %2598 = vmatpush1.msra.mxu0 0.0
    %2599 = vmatprep.subr.mxu0 0.0
    %2600 = vmatpush1.msra.mxu0 0.0
    %2601 = vmatprep.subr.mxu0 0.0
    %2602 = vmatpush1.msra.mxu0 0.0
    %2603 = vmatprep.subr.mxu0 0.0
    %2604 = vmatpush1.msra.mxu0 0.0
    %2605 = vmatprep.subr.mxu0 0.0
    %2606 = vmatpush1.msra.mxu0 0.0
    %2607 = vmatprep.subr.mxu0 0.0
    %2608 = vmatpush1.msra.mxu0 0.0
    %2609 = vmatprep.subr.mxu0 0.0
    %2610 = vmatpush1.msra.mxu0 0.0
    %2611 = vmatprep.subr.mxu0 0.0
    %2612 = vmatpush1.msra.mxu0 0.0
    %2613 = vmatprep.subr.mxu0 0.0
    %2614 = vmatpush1.msra.mxu0 0.0
    %2615 = vmatprep.mubr.f32.mxu0 0.0
    %2616 = vmatmul.mubr.f32.gmra.mrb[0].mxu0 %v2549
    %v2617 = vpop.f32.mrb[0].mxu0
    %v2618 = vadd.f32 0.0, %v2617
    %v2619 = vpop.f32.mrb[0].mxu0
    %2620 = vdwg.mxu0
    %v2622 = vsel %vm1568, %v1741, 0
    %2624 = vmatprep.subr.mxu0 0.0
    %2625 = vmatpush1.msra.mxu0 %v286
    %2626 = vmatprep.subr.mxu0 0.0
    %2627 = vmatpush1.msra.mxu0 0.0
    %2628 = vmatprep.subr.mxu0 0.0
    %2629 = vmatpush1.msra.mxu0 0.0
    %2630 = vmatprep.subr.mxu0 0.0
    %2631 = vmatpush1.msra.mxu0 0.0
    %2632 = vmatprep.subr.mxu0 0.0
    %2633 = vmatpush1.msra.mxu0 0.0
    %2634 = vmatprep.subr.mxu0 0.0
    %2635 = vmatpush1.msra.mxu0 0.0
    %2636 = vmatprep.subr.mxu0 0.0
    %2637 = vmatpush1.msra.mxu0 0.0
    %2638 = vmatprep.subr.mxu0 0.0
    %2639 = vmatpush1.msra.mxu0 0.0
    %2640 = vmatprep.subr.mxu0 0.0
    %2641 = vmatpush1.msra.mxu0 0.0
    %2642 = vmatprep.subr.mxu0 0.0
    %2643 = vmatpush1.msra.mxu0 0.0
    %2644 = vmatprep.subr.mxu0 0.0
    %2645 = vmatpush1.msra.mxu0 0.0
    %2646 = vmatprep.subr.mxu0 0.0
    %2647 = vmatpush1.msra.mxu0 0.0
    %2648 = vmatprep.subr.mxu0 0.0
    %2649 = vmatpush1.msra.mxu0 0.0
    %2650 = vmatprep.subr.mxu0 0.0
    %2651 = vmatpush1.msra.mxu0 0.0
    %2652 = vmatprep.subr.mxu0 0.0
    %2653 = vmatpush1.msra.mxu0 0.0
    %2654 = vmatprep.subr.mxu0 0.0
    %2655 = vmatpush1.msra.mxu0 0.0
    %2656 = vmatprep.subr.mxu0 0.0
    %2657 = vmatpush1.msra.mxu0 0.0
    %2658 = vmatprep.subr.mxu0 0.0
    %2659 = vmatpush1.msra.mxu0 0.0
    %2660 = vmatprep.subr.mxu0 0.0
    %2661 = vmatpush1.msra.mxu0 0.0
    %2662 = vmatprep.subr.mxu0 0.0
    %2663 = vmatpush1.msra.mxu0 0.0
    %2664 = vmatprep.subr.mxu0 0.0
    %2665 = vmatpush1.msra.mxu0 0.0
    %2666 = vmatprep.subr.mxu0 0.0
    %2667 = vmatpush1.msra.mxu0 0.0
    %2668 = vmatprep.subr.mxu0 0.0
    %2669 = vmatpush1.msra.mxu0 0.0
    %2670 = vmatprep.subr.mxu0 0.0
    %2671 = vmatpush1.msra.mxu0 0.0
    %2672 = vmatprep.subr.mxu0 0.0
    %2673 = vmatpush1.msra.mxu0 0.0
    %2674 = vmatprep.subr.mxu0 0.0
    %2675 = vmatpush1.msra.mxu0 0.0
    %2676 = vmatprep.subr.mxu0 0.0
    %2677 = vmatpush1.msra.mxu0 0.0
    %2678 = vmatprep.subr.mxu0 0.0
    %2679 = vmatpush1.msra.mxu0 0.0
    %2680 = vmatprep.subr.mxu0 0.0
    %2681 = vmatpush1.msra.mxu0 0.0
    %2682 = vmatprep.subr.mxu0 0.0
    %2683 = vmatpush1.msra.mxu0 0.0
    %2684 = vmatprep.subr.mxu0 0.0
    %2685 = vmatpush1.msra.mxu0 0.0
    %2686 = vmatprep.subr.mxu0 0.0
    %2687 = vmatpush1.msra.mxu0 0.0
    %2688 = vmatprep.mubr.f32.mxu0 0.0
    %2689 = vmatmul.mubr.f32.gmra.mrb[0].mxu0 %v2622
    %v2690 = vpop.f32.mrb[0].mxu0
    %v2691 = vadd.f32 0.0, %v2690
    %v2692 = vpop.f32.mrb[0].mxu0
    %2693 = vdwg.mxu0
    %v2695 = vsel %vm1568, %v1742, 0
    %2697 = vmatprep.subr.mxu0 0.0
    %2698 = vmatpush1.msra.mxu0 %v376
    %2699 = vmatprep.subr.mxu0 0.0
    %2700 = vmatpush1.msra.mxu0 0.0
    %2701 = vmatprep.subr.mxu0 0.0
    %2702 = vmatpush1.msra.mxu0 0.0
    %2703 = vmatprep.subr.mxu0 0.0
    %2704 = vmatpush1.msra.mxu0 0.0
    %2705 = vmatprep.subr.mxu0 0.0
    %2706 = vmatpush1.msra.mxu0 0.0
    %2707 = vmatprep.subr.mxu0 0.0
    %2708 = vmatpush1.msra.mxu0 0.0
    %2709 = vmatprep.subr.mxu0 0.0
    %2710 = vmatpush1.msra.mxu0 0.0
    %2711 = vmatprep.subr.mxu0 0.0
    %2712 = vmatpush1.msra.mxu0 0.0
    %2713 = vmatprep.subr.mxu0 0.0
    %2714 = vmatpush1.msra.mxu0 0.0
    %2715 = vmatprep.subr.mxu0 0.0
    %2716 = vmatpush1.msra.mxu0 0.0
    %2717 = vmatprep.subr.mxu0 0.0
    %2718 = vmatpush1.msra.mxu0 0.0
    %2719 = vmatprep.subr.mxu0 0.0
    %2720 = vmatpush1.msra.mxu0 0.0
    %2721 = vmatprep.subr.mxu0 0.0
    %2722 = vmatpush1.msra.mxu0 0.0
    %2723 = vmatprep.subr.mxu0 0.0
    %2724 = vmatpush1.msra.mxu0 0.0
    %2725 = vmatprep.subr.mxu0 0.0
    %2726 = vmatpush1.msra.mxu0 0.0
    %2727 = vmatprep.subr.mxu0 0.0
    %2728 = vmatpush1.msra.mxu0 0.0
    %2729 = vmatprep.subr.mxu0 0.0
    %2730 = vmatpush1.msra.mxu0 0.0
    %2731 = vmatprep.subr.mxu0 0.0
    %2732 = vmatpush1.msra.mxu0 0.0
    %2733 = vmatprep.subr.mxu0 0.0
    %2734 = vmatpush1.msra.mxu0 0.0
    %2735 = vmatprep.subr.mxu0 0.0
    %2736 = vmatpush1.msra.mxu0 0.0
    %2737 = vmatprep.subr.mxu0 0.0
    %2738 = vmatpush1.msra.mxu0 0.0
    %2739 = vmatprep.subr.mxu0 0.0
    %2740 = vmatpush1.msra.mxu0 0.0
    %2741 = vmatprep.subr.mxu0 0.0
    %2742 = vmatpush1.msra.mxu0 0.0
    %2743 = vmatprep.subr.mxu0 0.0
    %2744 = vmatpush1.msra.mxu0 0.0
    %2745 = vmatprep.subr.mxu0 0.0
    %2746 = vmatpush1.msra.mxu0 0.0
    %2747 = vmatprep.subr.mxu0 0.0
    %2748 = vmatpush1.msra.mxu0 0.0
    %2749 = vmatprep.subr.mxu0 0.0
    %2750 = vmatpush1.msra.mxu0 0.0
    %2751 = vmatprep.subr.mxu0 0.0
    %2752 = vmatpush1.msra.mxu0 0.0
    %2753 = vmatprep.subr.mxu0 0.0
    %2754 = vmatpush1.msra.mxu0 0.0
    %2755 = vmatprep.subr.mxu0 0.0
    %2756 = vmatpush1.msra.mxu0 0.0
    %2757 = vmatprep.subr.mxu0 0.0
    %2758 = vmatpush1.msra.mxu0 0.0
    %2759 = vmatprep.subr.mxu0 0.0
    %2760 = vmatpush1.msra.mxu0 0.0
    %2761 = vmatprep.mubr.f32.mxu0 0.0
    %2762 = vmatmul.mubr.f32.gmra.mrb[0].mxu0 %v2695
    %v2763 = vpop.f32.mrb[0].mxu0
    %v2764 = vadd.f32 0.0, %v2763
    %v2765 = vpop.f32.mrb[0].mxu0
    %2766 = vdwg.mxu0
    %v2768 = vsel %vm1568, %v1743, 0
    %2770 = vmatprep.subr.mxu0 0.0
    %2771 = vmatpush1.msra.mxu0 %v379
    %2772 = vmatprep.subr.mxu0 0.0
    %2773 = vmatpush1.msra.mxu0 0.0
    %2774 = vmatprep.subr.mxu0 0.0
    %2775 = vmatpush1.msra.mxu0 0.0
    %2776 = vmatprep.subr.mxu0 0.0
    %2777 = vmatpush1.msra.mxu0 0.0
    %2778 = vmatprep.subr.mxu0 0.0
    %2779 = vmatpush1.msra.mxu0 0.0
    %2780 = vmatprep.subr.mxu0 0.0
    %2781 = vmatpush1.msra.mxu0 0.0
    %2782 = vmatprep.subr.mxu0 0.0
    %2783 = vmatpush1.msra.mxu0 0.0
    %2784 = vmatprep.subr.mxu0 0.0
    %2785 = vmatpush1.msra.mxu0 0.0
    %2786 = vmatprep.subr.mxu0 0.0
    %2787 = vmatpush1.msra.mxu0 0.0
    %2788 = vmatprep.subr.mxu0 0.0
    %2789 = vmatpush1.msra.mxu0 0.0
    %2790 = vmatprep.subr.mxu0 0.0
    %2791 = vmatpush1.msra.mxu0 0.0
    %2792 = vmatprep.subr.mxu0 0.0
    %2793 = vmatpush1.msra.mxu0 0.0
    %2794 = vmatprep.subr.mxu0 0.0
    %2795 = vmatpush1.msra.mxu0 0.0
    %2796 = vmatprep.subr.mxu0 0.0
    %2797 = vmatpush1.msra.mxu0 0.0
    %2798 = vmatprep.subr.mxu0 0.0
    %2799 = vmatpush1.msra.mxu0 0.0
    %2800 = vmatprep.subr.mxu0 0.0
    %2801 = vmatpush1.msra.mxu0 0.0
    %2802 = vmatprep.subr.mxu0 0.0
    %2803 = vmatpush1.msra.mxu0 0.0
    %2804 = vmatprep.subr.mxu0 0.0
    %2805 = vmatpush1.msra.mxu0 0.0
    %2806 = vmatprep.subr.mxu0 0.0
    %2807 = vmatpush1.msra.mxu0 0.0
    %2808 = vmatprep.subr.mxu0 0.0
    %2809 = vmatpush1.msra.mxu0 0.0
    %2810 = vmatprep.subr.mxu0 0.0
    %2811 = vmatpush1.msra.mxu0 0.0
    %2812 = vmatprep.subr.mxu0 0.0
    %2813 = vmatpush1.msra.mxu0 0.0
    %2814 = vmatprep.subr.mxu0 0.0
    %2815 = vmatpush1.msra.mxu0 0.0
    %2816 = vmatprep.subr.mxu0 0.0
    %2817 = vmatpush1.msra.mxu0 0.0
    %2818 = vmatprep.subr.mxu0 0.0
    %2819 = vmatpush1.msra.mxu0 0.0
    %2820 = vmatprep.subr.mxu0 0.0
    %2821 = vmatpush1.msra.mxu0 0.0
    %2822 = vmatprep.subr.mxu0 0.0
    %2823 = vmatpush1.msra.mxu0 0.0
    %2824 = vmatprep.subr.mxu0 0.0
    %2825 = vmatpush1.msra.mxu0 0.0
    %2826 = vmatprep.subr.mxu0 0.0
    %2827 = vmatpush1.msra.mxu0 0.0
    %2828 = vmatprep.subr.mxu0 0.0
    %2829 = vmatpush1.msra.mxu0 0.0
    %2830 = vmatprep.subr.mxu0 0.0
    %2831 = vmatpush1.msra.mxu0 0.0
    %2832 = vmatprep.subr.mxu0 0.0
    %2833 = vmatpush1.msra.mxu0 0.0
    %2834 = vmatprep.mubr.f32.mxu0 0.0
    %2835 = vmatmul.mubr.f32.gmra.mrb[0].mxu0 %v2768
    %v2836 = vpop.f32.mrb[0].mxu0
    %v2837 = vadd.f32 0.0, %v2836
    %v2838 = vpop.f32.mrb[0].mxu0
    %2839 = vdwg.mxu0
    %v2841 = vsel %vm1568, %v1744, 0
    %2843 = vmatprep.subr.mxu0 0.0
    %2844 = vmatpush1.msra.mxu0 %v382
    %2845 = vmatprep.subr.mxu0 0.0
    %2846 = vmatpush1.msra.mxu0 0.0
    %2847 = vmatprep.subr.mxu0 0.0
    %2848 = vmatpush1.msra.mxu0 0.0
    %2849 = vmatprep.subr.mxu0 0.0
    %2850 = vmatpush1.msra.mxu0 0.0
    %2851 = vmatprep.subr.mxu0 0.0
    %2852 = vmatpush1.msra.mxu0 0.0
    %2853 = vmatprep.subr.mxu0 0.0
    %2854 = vmatpush1.msra.mxu0 0.0
    %2855 = vmatprep.subr.mxu0 0.0
    %2856 = vmatpush1.msra.mxu0 0.0
    %2857 = vmatprep.subr.mxu0 0.0
    %2858 = vmatpush1.msra.mxu0 0.0
    %2859 = vmatprep.subr.mxu0 0.0
    %2860 = vmatpush1.msra.mxu0 0.0
    %2861 = vmatprep.subr.mxu0 0.0
    %2862 = vmatpush1.msra.mxu0 0.0
    %2863 = vmatprep.subr.mxu0 0.0
    %2864 = vmatpush1.msra.mxu0 0.0
    %2865 = vmatprep.subr.mxu0 0.0
    %2866 = vmatpush1.msra.mxu0 0.0
    %2867 = vmatprep.subr.mxu0 0.0
    %2868 = vmatpush1.msra.mxu0 0.0
    %2869 = vmatprep.subr.mxu0 0.0
    %2870 = vmatpush1.msra.mxu0 0.0
    %2871 = vmatprep.subr.mxu0 0.0
    %2872 = vmatpush1.msra.mxu0 0.0
    %2873 = vmatprep.subr.mxu0 0.0
    %2874 = vmatpush1.msra.mxu0 0.0
    %2875 = vmatprep.subr.mxu0 0.0
    %2876 = vmatpush1.msra.mxu0 0.0
    %2877 = vmatprep.subr.mxu0 0.0
    %2878 = vmatpush1.msra.mxu0 0.0
    %2879 = vmatprep.subr.mxu0 0.0
    %2880 = vmatpush1.msra.mxu0 0.0
    %2881 = vmatprep.subr.mxu0 0.0
    %2882 = vmatpush1.msra.mxu0 0.0
    %2883 = vmatprep.subr.mxu0 0.0
    %2884 = vmatpush1.msra.mxu0 0.0
    %2885 = vmatprep.subr.mxu0 0.0
    %2886 = vmatpush1.msra.mxu0 0.0
    %2887 = vmatprep.subr.mxu0 0.0
    %2888 = vmatpush1.msra.mxu0 0.0
    %2889 = vmatprep.subr.mxu0 0.0
    %2890 = vmatpush1.msra.mxu0 0.0
    %2891 = vmatprep.subr.mxu0 0.0
    %2892 = vmatpush1.msra.mxu0 0.0
    %2893 = vmatprep.subr.mxu0 0.0
    %2894 = vmatpush1.msra.mxu0 0.0
    %2895 = vmatprep.subr.mxu0 0.0
    %2896 = vmatpush1.msra.mxu0 0.0
    %2897 = vmatprep.subr.mxu0 0.0
    %2898 = vmatpush1.msra.mxu0 0.0
    %2899 = vmatprep.subr.mxu0 0.0
    %2900 = vmatpush1.msra.mxu0 0.0
    %2901 = vmatprep.subr.mxu0 0.0
    %2902 = vmatpush1.msra.mxu0 0.0
    %2903 = vmatprep.subr.mxu0 0.0
    %2904 = vmatpush1.msra.mxu0 0.0
    %2905 = vmatprep.subr.mxu0 0.0
    %2906 = vmatpush1.msra.mxu0 0.0
    %2907 = vmatprep.mubr.f32.mxu0 0.0
    %2908 = vmatmul.mubr.f32.gmra.mrb[0].mxu0 %v2841
    %v2909 = vpop.f32.mrb[0].mxu0
    %v2910 = vadd.f32 0.0, %v2909
    %v2911 = vpop.f32.mrb[0].mxu0
    %2912 = vdwg.mxu0
    %2914 = vrot.lane.b32.xlu0 %v1888, 32
    %v2915 = vpop.permute.xlu0 %2914
    %2918 = vrot.lane.b32.xlu0 %v1961, 64
    %v2919 = vpop.permute.xlu0 %2918
    %2922 = vrot.lane.b32.xlu0 %v2034, 96
    %v2923 = vpop.permute.xlu0 %2922
    %2926 = vrot.lane.b32.xlu0 %v2180, 32
    %v2927 = vpop.permute.xlu0 %2926
    %2930 = vrot.lane.b32.xlu0 %v2253, 64
    %v2931 = vpop.permute.xlu0 %2930
    %2934 = vrot.lane.b32.xlu0 %v2326, 96
    %v2935 = vpop.permute.xlu0 %2934
    %v2937 = vsel %vm34, %v1815, %v2915
    %vm2938 = vcmask 523264
    %v2939 = vsel %vm2938, %v2937, %v2919
    %vm2940 = vcmask 785408
    %v2941 = vsel %vm2940, %v2939, %v2923
    %v2942 = vsel %vm34, %v2107, %v2927
    %v2943 = vsel %vm2938, %v2942, %v2931
    %v2944 = vsel %vm2940, %v2943, %v2935
    %2946 = vrot.lane.b32.xlu0 %v2472, 32
    %v2947 = vpop.permute.xlu0 %2946
    %2950 = vrot.lane.b32.xlu0 %v2545, 64
    %v2951 = vpop.permute.xlu0 %2950
    %2954 = vrot.lane.b32.xlu0 %v2618, 96
    %v2955 = vpop.permute.xlu0 %2954
    %2958 = vrot.lane.b32.xlu0 %v2764, 32
    %v2959 = vpop.permute.xlu0 %2958
    %2962 = vrot.lane.b32.xlu0 %v2837, 64
    %v2963 = vpop.permute.xlu0 %2962
    %2966 = vrot.lane.b32.xlu0 %v2910, 96
    %v2967 = vpop.permute.xlu0 %2966
    %v2969 = vsel %vm34, %v2399, %v2947
    %v2970 = vsel %vm2938, %v2969, %v2951
    %v2971 = vsel %vm2940, %v2970, %v2955
    %v2972 = vsel %vm34, %v2691, %v2959
    %v2973 = vsel %vm2938, %v2972, %v2963
    %v2974 = vsel %vm2940, %v2973, %v2967
    %v2975 = vld [vmem:[%s4] sm:$0xff]
    %v2976 = vld [vmem:[%s4 + $0x8] sm:$0xff]
    %v2977 = vld [vmem:[%s4 + $0x10] sm:$0xff]
    %v2978 = vld [vmem:[%s4 + $0x18] sm:$0xff]
    %v2979 = vld [vmem:[%s4 + $0x20] sm:$0xff]
    %v2980 = vld [vmem:[%s4 + $0x28] sm:$0xff]
    %v2981 = vld [vmem:[%s4 + $0x30] sm:$0xff]
    %v2982 = vld [vmem:[%s4 + $0x38] sm:$0xff]
    %v2983 = vld [vmem:[%s4 + $0x40] sm:$0xff]
    %v2984 = vld [vmem:[%s4 + $0x48] sm:$0xff]
    %v2985 = vld [vmem:[%s4 + $0x50] sm:$0xff]
    %v2986 = vld [vmem:[%s4 + $0x58] sm:$0xff]
    %v2987 = vld [vmem:[%s4 + $0x60] sm:$0xff]
    %v2988 = vld [vmem:[%s4 + $0x68] sm:$0xff]
    %v2989 = vld [vmem:[%s4 + $0x70] sm:$0xff]
    %v2990 = vld [vmem:[%s4 + $0x78] sm:$0xff]
    %v2991 = vld [vmem:[%s4 + $0x80] sm:$0xff]
    %v2992 = vld [vmem:[%s4 + $0x88] sm:$0xff]
    %v2993 = vld [vmem:[%s4 + $0x90] sm:$0xff]
    %v2994 = vld [vmem:[%s4 + $0x98] sm:$0xff]
    %v2995 = vld [vmem:[%s4 + $0xa0] sm:$0xff]
    %v2996 = vld [vmem:[%s4 + $0xa8] sm:$0xff]
    %v2997 = vld [vmem:[%s4 + $0xb0] sm:$0xff]
    %v2998 = vld [vmem:[%s4 + $0xb8] sm:$0xff]
    %v2999 = vld [vmem:[%s4 + $0xc0] sm:$0xff]
    %v3000 = vld [vmem:[%s4 + $0xc8] sm:$0xff]
    %v3001 = vld [vmem:[%s4 + $0xd0] sm:$0xff]
    %v3002 = vld [vmem:[%s4 + $0xd8] sm:$0xff]
    %v3003 = vld [vmem:[%s4 + $0xe0] sm:$0xff]
    %v3004 = vld [vmem:[%s4 + $0xe8] sm:$0xff]
    %v3005 = vld [vmem:[%s4 + $0xf0] sm:$0xff]
    %v3006 = vld [vmem:[%s4 + $0xf8] sm:$0xff]
    %v3007 = vld [vmem:[%s5] sm:$0x1]
    %v3009 = vlaneseq
    %v3010 = vshrl.u32 %v3009, 7
    %v3011 = vsub.s32 0, %v3010
    %v3012 = vrot.slane %v3007, %v3011
    %3014 = vmatprep.subr.mxu0 0.0
    %3015 = vmatpush1.msra.mxu0 %v2975
    %3016 = vmatprep.subr.mxu0 0.0
    %3017 = vmatpush1.msra.mxu0 %v2976
    %3018 = vmatprep.subr.mxu0 0.0
    %3019 = vmatpush1.msra.mxu0 %v2977
    %3020 = vmatprep.subr.mxu0 0.0
    %3021 = vmatpush1.msra.mxu0 %v2978
    %3022 = vmatprep.subr.mxu0 0.0
    %3023 = vmatpush1.msra.mxu0 %v2979
    %3024 = vmatprep.subr.mxu0 0.0
    %3025 = vmatpush1.msra.mxu0 %v2980
    %3026 = vmatprep.subr.mxu0 0.0
    %3027 = vmatpush1.msra.mxu0 %v2981
    %3028 = vmatprep.subr.mxu0 0.0
    %3029 = vmatpush1.msra.mxu0 %v2982
    %3030 = vmatprep.subr.mxu0 0.0
    %3031 = vmatpush1.msra.mxu0 %v2983
    %3032 = vmatprep.subr.mxu0 0.0
    %3033 = vmatpush1.msra.mxu0 %v2984
    %3034 = vmatprep.subr.mxu0 0.0
    %3035 = vmatpush1.msra.mxu0 %v2985
    %3036 = vmatprep.subr.mxu0 0.0
    %3037 = vmatpush1.msra.mxu0 %v2986
    %3038 = vmatprep.subr.mxu0 0.0
    %3039 = vmatpush1.msra.mxu0 %v2987
    %3040 = vmatprep.subr.mxu0 0.0
    %3041 = vmatpush1.msra.mxu0 %v2988
    %3042 = vmatprep.subr.mxu0 0.0
    %3043 = vmatpush1.msra.mxu0 %v2989
    %3044 = vmatprep.subr.mxu0 0.0
    %3045 = vmatpush1.msra.mxu0 %v2990
    %3046 = vmatprep.subr.mxu0 0.0
    %3047 = vmatpush1.msra.mxu0 %v2991
    %3048 = vmatprep.subr.mxu0 0.0
    %3049 = vmatpush1.msra.mxu0 %v2992
    %3050 = vmatprep.subr.mxu0 0.0
    %3051 = vmatpush1.msra.mxu0 %v2993
    %3052 = vmatprep.subr.mxu0 0.0
    %3053 = vmatpush1.msra.mxu0 %v2994
    %3054 = vmatprep.subr.mxu0 0.0
    %3055 = vmatpush1.msra.mxu0 %v2995
    %3056 = vmatprep.subr.mxu0 0.0
    %3057 = vmatpush1.msra.mxu0 %v2996
    %3058 = vmatprep.subr.mxu0 0.0
    %3059 = vmatpush1.msra.mxu0 %v2997
    %3060 = vmatprep.subr.mxu0 0.0
    %3061 = vmatpush1.msra.mxu0 %v2998
    %3062 = vmatprep.subr.mxu0 0.0
    %3063 = vmatpush1.msra.mxu0 %v2999
    %3064 = vmatprep.subr.mxu0 0.0
    %3065 = vmatpush1.msra.mxu0 %v3000
    %3066 = vmatprep.subr.mxu0 0.0
    %3067 = vmatpush1.msra.mxu0 %v3001
    %3068 = vmatprep.subr.mxu0 0.0
    %3069 = vmatpush1.msra.mxu0 %v3002
    %3070 = vmatprep.subr.mxu0 0.0
    %3071 = vmatpush1.msra.mxu0 %v3003
    %3072 = vmatprep.subr.mxu0 0.0
    %3073 = vmatpush1.msra.mxu0 %v3004
    %3074 = vmatprep.subr.mxu0 0.0
    %3075 = vmatpush1.msra.mxu0 %v3005
    %3076 = vmatprep.subr.mxu0 0.0
    %3077 = vmatpush1.msra.mxu0 %v3006
    %3078 = vmatprep.mubr.f32.mxu0 %v2944
    %3079 = vmatmul.mubr.f32.gmra.mrb[0].mxu0 %v2941
    %v3080 = vpop.f32.mrb[0].mxu0
    %v3081 = vadd.f32 %v3012, %v3080
    %v3082 = vpop.f32.mrb[0].mxu0
    %3083 = vmatprep.mubr.f32.mxu0 %v2974
    %3084 = vmatmul.mubr.f32.gmra.mrb[0].mxu0 %v2971
    %v3085 = vpop.f32.mrb[0].mxu0
    %v3086 = vadd.f32 %v3012, %v3085
    %v3087 = vpop.f32.mrb[0].mxu0
    %3088 = vdwg.mxu0
    %3089 = vst.msk [vmem:[#allocation2] sm:$0xff] %vm34, %v3081
    %3090 = vst.msk [vmem:[#allocation2 + $0x8] sm:$0xff] %vm34, %v3086
    // Predicated region
    $region26: #{tpu_custom_call.1} parent=1 // pred_check
      _
    $region27: #{tpu_custom_call.1} parent=1 // pred_check_branch
      %3092 = sbr.rel (0) target = $region29
    $region28: #{tpu_custom_call.1} parent=1 // pred_region
      %s3094 = ssub.s32 256, 256
      %3095 = vsyncadd [#allocation3], %s3094
      %s3096 = sshll.u32 [#allocation2], 4
      %s3097 = int_to_ptr.vmem [resolvable:$true] %s3096
      %3102 = dma.vmem_to_hbm [thread:$0]  %s3097, 256, %s6, [#allocation3], 128, 128, 8
    $region29: #{tpu_custom_call.1} parent=1 // pred_fallthru
      _
    // Predicated region
    $region30: #{tpu_custom_call.1} parent=1 // pred_check
      _
    $region31: #{tpu_custom_call.1} parent=1 // pred_check_branch
      %3104 = sbr.rel (0) target = $region33
    $region32: #{tpu_custom_call.1} parent=1 // pred_region
      %3105 = dma.done [#allocation3], 256
    $region33: #{tpu_custom_call.1} parent=1 // pred_fallthru
      _
    %3106 = vsyncpa [#allocation3], 1

</llo_original>
